<compile_context>
chip_gen: v7x
topology: tpu7x:2x2x1
jax: 0.10.0
libtpu: 0.0.40
codegen_flags: <defaults>
</compile_context>

<pallas_src>
import functools
import math

import jax
import jax.numpy as jnp
from jax import lax
from jax.experimental import pallas as pl
from jax.experimental.pallas import tpu as pltpu


# ---------------------------------------------------------------------------
# Fused kernel: qkv -> per-head attention -> mh_filter -> conv1 -> BN -> ReLU
#               -> conv2 -> residual, all in one grid step (batch folded into M)
# ---------------------------------------------------------------------------
def _bottom_gat_kernel(x_ref, wqkv_ref, bqkv_ref, mask_ref, wm_ref, bm_ref,
                       w1a_ref, w1b_ref, b1_ref, gamma_ref, beta_ref,
                       w2_ref, b2_ref,
                       o_ref,
                       *, head, B, N, C):
    BN = B * N
    HN = head * N

    # channel-last input, batch folded into the row (M) dimension
    x = x_ref[...].reshape(BN, C)                                     # (B*N, C)

    # ---- fused q/k/v projection: one (B*N, C) x (C, 3C) matmul ----------------
    # (1/sqrt(head_dim) is already folded into the q columns of wqkv / bqkv)
    qkv = (jnp.dot(x, wqkv_ref[...], preferred_element_type=jnp.float32)
           + bqkv_ref[...])                                           # (B*N, 3C)
    q = qkv[:, 0 * C:1 * C]
    k = qkv[:, 1 * C:2 * C]
    v = qkv[:, 2 * C:3 * C]

    # block-diagonal head mask, precomputed in the wrapper (loop-invariant)
    mask = mask_ref[...]                                              # (head*N, C)

    # ---- attention, per batch (scores / softmax / PV are batch-local) ---------
    attn_rows = []
    for b in range(B):                                                # static loop
        qb = q[b * N:(b + 1) * N, :]                                  # (N, C)
        kb = k[b * N:(b + 1) * N, :]
        vb = v[b * N:(b + 1) * N, :]

        # block-diagonal packing: row block h carries head h's keys/values only
        # in its own channel block (kept for N=64; see TODO for larger N)
        kbd = jnp.concatenate([kb] * head, axis=0) * mask             # (HN, C)
        vbd = jnp.concatenate([vb] * head, axis=0) * mask             # (HN, C)

        # scores for all heads in one lane-dense matmul: s[n, h*N+m] = <q_h[n], k_h[m]>
        s = lax.dot_general(qb, kbd, (((1,), (1,)), ((), ())),
                            preferred_element_type=jnp.float32)       # (N, HN)

        # per-head softmax on static lane slices (no masks, no iota, f32)
        p_blocks = []
        for h in range(head):                                         # static loop
            sh = s[:, h * N:(h + 1) * N]                              # (N, N)
            m_h = jnp.max(sh, axis=-1, keepdims=True)
            e_h = jnp.exp(sh - m_h)
            d_h = jnp.sum(e_h, axis=-1, keepdims=True)
            # approx=False keeps the 1e-4 parity; approx=True(+Newton) is the EUP path
            p_blocks.append(e_h * pl.reciprocal(d_h, approx=False))
        p = jnp.concatenate(p_blocks, axis=1)                         # (N, HN)

        # head-concatenated attention output in one K=head*N matmul
        attn_rows.append(jnp.dot(p, vbd,
                                 preferred_element_type=jnp.float32))  # (N, C)
    attn = jnp.concatenate(attn_rows, axis=0)                         # (B*N, C)

    # ---- mh_filter (1x1 conv) -------------------------------------------------
    mh = (jnp.dot(attn, wm_ref[...], preferred_element_type=jnp.float32)
          + bm_ref[...])                                              # (B*N, C)

    # ---- cat_filter conv1, concat-free: cat([x, mh]) @ w1.T = x@w1a + mh@w1b --
    y1 = (jnp.dot(x, w1a_ref[...], preferred_element_type=jnp.float32)
          + jnp.dot(mh, w1b_ref[...], preferred_element_type=jnp.float32)
          + b1_ref[...])                                              # (B*N, 2C)

    # ---- BatchNorm (training-mode batch stats, biased var, two-pass) ----------
    mean = jnp.mean(y1, axis=0, keepdims=True)                        # (1, 2C)
    var = jnp.mean((y1 - mean) * (y1 - mean), axis=0, keepdims=True)  # >= 0
    bn_scale = gamma_ref[...] * lax.rsqrt(var + 1e-5)
    bn_shift = beta_ref[...] - mean * bn_scale
    r = jnp.maximum(y1 * bn_scale + bn_shift, 0.0)                    # (B*N, 2C)

    # ---- conv2 + residual, channel-last output --------------------------------
    out = (x
           + jnp.dot(r, w2_ref[...], preferred_element_type=jnp.float32)
           + b2_ref[...])                                             # (B*N, C)
    o_ref[...] = out.reshape(B, N, C)


# ---------------------------------------------------------------------------
# Wrapper
# ---------------------------------------------------------------------------
def bottom_gat_forward(d_bcn, params, head):
    """d_bcn: (B, C, N) float32, same NCW layout as the PyTorch module."""
    B, C, N = d_bcn.shape
    head_dim = C // head
    C2, C3 = 2 * C, 3 * C
    HN = head * N
    f32 = jnp.float32

    d_bcn = d_bcn.astype(f32)
    x_bnc = jnp.transpose(d_bcn, (0, 2, 1))                           # channel-last

    def row(v, n):
        return jnp.asarray(v, f32).reshape(1, n)

    # attention scale folded into the q projection (weight-side, one-time)
    scale = 1.0 / math.sqrt(head_dim)
    wq = params["wq"].astype(f32) * scale
    bq = params["bq"].astype(f32) * scale

    # weights pre-transposed (tiny, one-time) so the kernel does plain a @ W
    wqkv_t = jnp.concatenate(
        [wq, params["wk"].astype(f32), params["wv"].astype(f32)], axis=0).T  # (C, 3C)
    bqkv = jnp.concatenate(
        [bq, params["bk"].astype(f32), params["bv"].astype(f32)]).reshape(1, C3)
    wm_t = params["wm"].astype(f32).T                                 # (C, C)
    bm = row(params["bm"], C)
    w1 = params["w1"].astype(f32)                                     # (2C, 2C), input order [x ; mh]
    w1a_t = w1[:, :C].T                                               # (C, 2C)
    w1b_t = w1[:, C:].T                                               # (C, 2C)
    b1 = row(params["b1"], C2)
    gamma = row(params["gamma"], C2)
    beta = row(params["beta"], C2)
    w2_t = params["w2"].astype(f32).T                                 # (2C, C)
    b2 = row(params["b2"], C)

    # loop-invariant block-diagonal head mask, computed once here
    ri = jnp.arange(HN)[:, None] // N                                 # head id of row
    ci = jnp.arange(C)[None, :] // head_dim                           # head id of column
    mask = (ri == ci).astype(f32)                                     # (HN, C)

    full = lambda shape: pl.BlockSpec(shape, lambda i: (0,) * len(shape))

    kernel = functools.partial(_bottom_gat_kernel, head=head, B=B, N=N, C=C)

    out_bnc = pl.pallas_call(
        kernel,
        out_shape=jax.ShapeDtypeStruct((B, N, C), f32),
        grid=(1,),
        in_specs=[
            full((B, N, C)),                                          # x (channel-last)
            full((C, C3)), full((1, C3)),                             # wqkv_t, bqkv
            full((HN, C)),                                            # block-diag mask
            full((C, C)), full((1, C)),                               # wm_t, bm
            full((C, C2)), full((C, C2)), full((1, C2)),              # w1a_t, w1b_t, b1
            full((1, C2)), full((1, C2)),                             # gamma, beta
            full((C2, C)), full((1, C)),                              # w2_t, b2
        ],
        out_specs=full((B, N, C)),
        compiler_params=pltpu.CompilerParams(
            dimension_semantics=("arbitrary",)),
    )(x_bnc, wqkv_t, bqkv, mask, wm_t, bm, w1a_t, w1b_t, b1, gamma, beta,
      w2_t, b2)

    return jnp.transpose(out_bnc, (0, 2, 1))                          # back to NCW


# ---------------------------------------------------------------------------
# Pure-JAX reference (mirrors the PyTorch forward, training-mode BN)
# ---------------------------------------------------------------------------
def bottom_gat_reference(d, params, head):
    B, C, N = d.shape
    hd = C // head

    def conv1d(x, w, b):                                              # 1x1 conv
        return jnp.einsum("oc,bcn->bon", w, x) + b[None, :, None]

    q = conv1d(d, params["wq"], params["bq"]).reshape(B, head, hd, N)
    k = conv1d(d, params["wk"], params["bk"]).reshape(B, head, hd, N)
    v = conv1d(d, params["wv"], params["bv"]).reshape(B, head, hd, N)
    score = jax.nn.softmax(
        jnp.einsum("bhdn,bhdm->bhnm", q, k) / math.sqrt(hd), axis=-1)
    add = jnp.einsum("bhnm,bhdm->bhdn", score, v).reshape(B, C, N)
    add = conv1d(add, params["wm"], params["bm"])
    cat = jnp.concatenate([d, add], axis=1)
    y = conv1d(cat, params["w1"], params["b1"])
    mean = jnp.mean(y, axis=(0, 2))
    var = jnp.mean((y - mean[None, :, None]) ** 2, axis=(0, 2))
    yn = ((y - mean[None, :, None]) * jax.lax.rsqrt(var[None, :, None] + 1e-5)
          * params["gamma"][None, :, None] + params["beta"][None, :, None])
    r = jnp.maximum(yn, 0.0)
    return d + conv1d(r, params["w2"], params["b2"])


# ---------------------------------------------------------------------------
if __name__ == "__main__":
    B, C, N, HEAD = 2, 32, 64, 4
    C2 = 2 * C

    key = jax.random.PRNGKey(0)
    keys = jax.random.split(key, 16)

    d = jax.random.normal(keys[0], (B, C, N), dtype=jnp.float32)

    def w(k, shape, scale=0.1):
        return scale * jax.random.normal(k, shape, dtype=jnp.float32)

    params = {
        "wq": w(keys[1], (C, C)),   "bq": w(keys[2], (C,)),
        "wk": w(keys[3], (C, C)),   "bk": w(keys[4], (C,)),
        "wv": w(keys[5], (C, C)),   "bv": w(keys[6], (C,)),
        "wm": w(keys[7], (C, C)),   "bm": w(keys[8], (C,)),
        "w1": w(keys[9], (C2, C2)), "b1": w(keys[10], (C2,)),
        "gamma": 1.0 + w(keys[11], (C2,)), "beta": w(keys[12], (C2,)),
        "w2": w(keys[13], (C, C2)), "b2": w(keys[14], (C,)),
    }

    out = bottom_gat_forward(d, params, HEAD)
    out = jax.block_until_ready(out)

    ref = bottom_gat_reference(d, params, HEAD)
    assert out.shape == (B, C, N)
    assert jnp.allclose(out, ref, rtol=1e-4, atol=1e-4), (
        float(jnp.max(jnp.abs(out - ref))))

    print("KERNEL_OK")
</pallas_src>

<mosaic_0001>
module attributes {stable_mosaic.version = 11 : i64} {
  func.func @_bottom_gat_kernel(%arg0: i32, %arg1: memref<2x64x32xf32, #tpu.memory_space<vmem>>, %arg2: memref<32x96xf32, #tpu.memory_space<vmem>>, %arg3: memref<1x96xf32, #tpu.memory_space<vmem>>, %arg4: memref<256x32xf32, #tpu.memory_space<vmem>>, %arg5: memref<32x32xf32, #tpu.memory_space<vmem>>, %arg6: memref<1x32xf32, #tpu.memory_space<vmem>>, %arg7: memref<32x64xf32, #tpu.memory_space<vmem>>, %arg8: memref<32x64xf32, #tpu.memory_space<vmem>>, %arg9: memref<1x64xf32, #tpu.memory_space<vmem>>, %arg10: memref<1x64xf32, #tpu.memory_space<vmem>>, %arg11: memref<1x64xf32, #tpu.memory_space<vmem>>, %arg12: memref<64x32xf32, #tpu.memory_space<vmem>>, %arg13: memref<1x32xf32, #tpu.memory_space<vmem>>, %arg14: memref<2x64x32xf32, #tpu.memory_space<vmem>>) attributes {dimension_semantics = [#tpu.dimension_semantics<arbitrary>], iteration_bounds = array<i64: 1>, scalar_prefetch = 0 : i64, scratch_operands = 0 : i64, tpu.core_type = #tpu.core_type<tc>, window_params = [{pipeline_mode = #tpu.pipeline_mode<synchronous>, transform_indices = @transform_0, window_bounds = array<i64: 2, 64, 32>}, {pipeline_mode = #tpu.pipeline_mode<synchronous>, transform_indices = @transform_1, window_bounds = array<i64: 32, 96>}, {pipeline_mode = #tpu.pipeline_mode<synchronous>, transform_indices = @transform_2, window_bounds = array<i64: 1, 96>}, {pipeline_mode = #tpu.pipeline_mode<synchronous>, transform_indices = @transform_3, window_bounds = array<i64: 256, 32>}, {pipeline_mode = #tpu.pipeline_mode<synchronous>, transform_indices = @transform_4, window_bounds = array<i64: 32, 32>}, {pipeline_mode = #tpu.pipeline_mode<synchronous>, transform_indices = @transform_5, window_bounds = array<i64: 1, 32>}, {pipeline_mode = #tpu.pipeline_mode<synchronous>, transform_indices = @transform_6, window_bounds = array<i64: 32, 64>}, {pipeline_mode = #tpu.pipeline_mode<synchronous>, transform_indices = @transform_7, window_bounds = array<i64: 32, 64>}, {pipeline_mode = #tpu.pipeline_mode<synchronous>, transform_indices = @transform_8, window_bounds = array<i64: 1, 64>}, {pipeline_mode = #tpu.pipeline_mode<synchronous>, transform_indices = @transform_9, window_bounds = array<i64: 1, 64>}, {pipeline_mode = #tpu.pipeline_mode<synchronous>, transform_indices = @transform_10, window_bounds = array<i64: 1, 64>}, {pipeline_mode = #tpu.pipeline_mode<synchronous>, transform_indices = @transform_11, window_bounds = array<i64: 64, 32>}, {pipeline_mode = #tpu.pipeline_mode<synchronous>, transform_indices = @transform_12, window_bounds = array<i64: 1, 32>}, {pipeline_mode = #tpu.pipeline_mode<synchronous>, transform_indices = @transform_13, window_bounds = array<i64: 2, 64, 32>}]} {
    %c0 = arith.constant 0 : index
    %c0_0 = arith.constant 0 : index
    %c0_1 = arith.constant 0 : index
    %0 = vector.load %arg1[%c0, %c0_0, %c0_1] : memref<2x64x32xf32, #tpu.memory_space<vmem>>, vector<2x64x32xf32>
    %1 = vector.shape_cast %0 : vector<2x64x32xf32> to vector<128x32xf32>
    %c0_2 = arith.constant 0 : index
    %c0_3 = arith.constant 0 : index
    %2 = vector.load %arg2[%c0_2, %c0_3] : memref<32x96xf32, #tpu.memory_space<vmem>>, vector<32x96xf32>
    %cst = arith.constant dense<0.000000e+00> : vector<128x96xf32>
    %3 = tpu.matmul %1, %2, %cst {dimension_numbers = #tpu.dot_dimension_numbers<[1], [0], [0], [1], [0, 0, 1, 1], [], []>} : vector<128x32xf32>, vector<32x96xf32>, vector<128x96xf32> -> vector<128x96xf32>
    %c0_4 = arith.constant 0 : index
    %c0_5 = arith.constant 0 : index
    %4 = vector.load %arg3[%c0_4, %c0_5] : memref<1x96xf32, #tpu.memory_space<vmem>>, vector<1x96xf32>
    %5 = vector.broadcast %4 : vector<1x96xf32> to vector<128x96xf32>
    %6 = arith.addf %3, %5 : vector<128x96xf32>
    %7 = vector.extract_strided_slice %6 {offsets = [0, 0], sizes = [128, 32], strides = [1, 1]} : vector<128x96xf32> to vector<128x32xf32>
    %8 = vector.extract_strided_slice %6 {offsets = [0, 32], sizes = [128, 32], strides = [1, 1]} : vector<128x96xf32> to vector<128x32xf32>
    %9 = vector.extract_strided_slice %6 {offsets = [0, 64], sizes = [128, 32], strides = [1, 1]} : vector<128x96xf32> to vector<128x32xf32>
    %c0_6 = arith.constant 0 : index
    %c0_7 = arith.constant 0 : index
    %10 = vector.load %arg4[%c0_6, %c0_7] : memref<256x32xf32, #tpu.memory_space<vmem>>, vector<256x32xf32>
    %11 = vector.extract_strided_slice %7 {offsets = [0, 0], sizes = [64, 32], strides = [1, 1]} : vector<128x32xf32> to vector<64x32xf32>
    %12 = vector.extract_strided_slice %8 {offsets = [0, 0], sizes = [64, 32], strides = [1, 1]} : vector<128x32xf32> to vector<64x32xf32>
    %13 = vector.extract_strided_slice %9 {offsets = [0, 0], sizes = [64, 32], strides = [1, 1]} : vector<128x32xf32> to vector<64x32xf32>
    %14 = tpu.concatenate %12, %12, %12, %12 in 0 : vector<64x32xf32>, vector<64x32xf32>, vector<64x32xf32>, vector<64x32xf32> -> vector<256x32xf32>
    %15 = arith.mulf %14, %10 : vector<256x32xf32>
    %16 = tpu.concatenate %13, %13, %13, %13 in 0 : vector<64x32xf32>, vector<64x32xf32>, vector<64x32xf32>, vector<64x32xf32> -> vector<256x32xf32>
    %17 = arith.mulf %16, %10 : vector<256x32xf32>
    %cst_8 = arith.constant dense<0.000000e+00> : vector<64x256xf32>
    %18 = tpu.matmul %11, %15, %cst_8 {dimension_numbers = #tpu.dot_dimension_numbers<[1], [1], [0], [0], [0, 0, 1, 0], [], []>} : vector<64x32xf32>, vector<256x32xf32>, vector<64x256xf32> -> vector<64x256xf32>
    %19 = vector.extract_strided_slice %18 {offsets = [0, 0], sizes = [64, 64], strides = [1, 1]} : vector<64x256xf32> to vector<64x64xf32>
    %cst_9 = arith.constant dense<0xFF800000> : vector<64xf32>
    %20 = vector.multi_reduction <maximumf>, %19, %cst_9 [1] : vector<64x64xf32> to vector<64xf32>
    %21 = vector.shape_cast %20 : vector<64xf32> to vector<64x1xf32>
    %22 = vector.broadcast %21 : vector<64x1xf32> to vector<64x64xf32>
    %23 = arith.subf %19, %22 : vector<64x64xf32>
    %24 = math.exp %23 : vector<64x64xf32>
    %cst_10 = arith.constant dense<0.000000e+00> : vector<64xf32>
    %25 = vector.multi_reduction <add>, %24, %cst_10 [1] : vector<64x64xf32> to vector<64xf32>
    %26 = vector.shape_cast %25 : vector<64xf32> to vector<64x1xf32>
    %27 = tpu.reciprocal %26 : vector<64x1xf32> -> vector<64x1xf32>
    %28 = vector.broadcast %27 : vector<64x1xf32> to vector<64x64xf32>
    %29 = arith.mulf %24, %28 : vector<64x64xf32>
    %30 = vector.extract_strided_slice %18 {offsets = [0, 64], sizes = [64, 64], strides = [1, 1]} : vector<64x256xf32> to vector<64x64xf32>
    %cst_11 = arith.constant dense<0xFF800000> : vector<64xf32>
    %31 = vector.multi_reduction <maximumf>, %30, %cst_11 [1] : vector<64x64xf32> to vector<64xf32>
    %32 = vector.shape_cast %31 : vector<64xf32> to vector<64x1xf32>
    %33 = vector.broadcast %32 : vector<64x1xf32> to vector<64x64xf32>
    %34 = arith.subf %30, %33 : vector<64x64xf32>
    %35 = math.exp %34 : vector<64x64xf32>
    %cst_12 = arith.constant dense<0.000000e+00> : vector<64xf32>
    %36 = vector.multi_reduction <add>, %35, %cst_12 [1] : vector<64x64xf32> to vector<64xf32>
    %37 = vector.shape_cast %36 : vector<64xf32> to vector<64x1xf32>
    %38 = tpu.reciprocal %37 : vector<64x1xf32> -> vector<64x1xf32>
    %39 = vector.broadcast %38 : vector<64x1xf32> to vector<64x64xf32>
    %40 = arith.mulf %35, %39 : vector<64x64xf32>
    %41 = vector.extract_strided_slice %18 {offsets = [0, 128], sizes = [64, 64], strides = [1, 1]} : vector<64x256xf32> to vector<64x64xf32>
    %cst_13 = arith.constant dense<0xFF800000> : vector<64xf32>
    %42 = vector.multi_reduction <maximumf>, %41, %cst_13 [1] : vector<64x64xf32> to vector<64xf32>
    %43 = vector.shape_cast %42 : vector<64xf32> to vector<64x1xf32>
    %44 = vector.broadcast %43 : vector<64x1xf32> to vector<64x64xf32>
    %45 = arith.subf %41, %44 : vector<64x64xf32>
    %46 = math.exp %45 : vector<64x64xf32>
    %cst_14 = arith.constant dense<0.000000e+00> : vector<64xf32>
    %47 = vector.multi_reduction <add>, %46, %cst_14 [1] : vector<64x64xf32> to vector<64xf32>
    %48 = vector.shape_cast %47 : vector<64xf32> to vector<64x1xf32>
    %49 = tpu.reciprocal %48 : vector<64x1xf32> -> vector<64x1xf32>
    %50 = vector.broadcast %49 : vector<64x1xf32> to vector<64x64xf32>
    %51 = arith.mulf %46, %50 : vector<64x64xf32>
    %52 = vector.extract_strided_slice %18 {offsets = [0, 192], sizes = [64, 64], strides = [1, 1]} : vector<64x256xf32> to vector<64x64xf32>
    %cst_15 = arith.constant dense<0xFF800000> : vector<64xf32>
    %53 = vector.multi_reduction <maximumf>, %52, %cst_15 [1] : vector<64x64xf32> to vector<64xf32>
    %54 = vector.shape_cast %53 : vector<64xf32> to vector<64x1xf32>
    %55 = vector.broadcast %54 : vector<64x1xf32> to vector<64x64xf32>
    %56 = arith.subf %52, %55 : vector<64x64xf32>
    %57 = math.exp %56 : vector<64x64xf32>
    %cst_16 = arith.constant dense<0.000000e+00> : vector<64xf32>
    %58 = vector.multi_reduction <add>, %57, %cst_16 [1] : vector<64x64xf32> to vector<64xf32>
    %59 = vector.shape_cast %58 : vector<64xf32> to vector<64x1xf32>
    %60 = tpu.reciprocal %59 : vector<64x1xf32> -> vector<64x1xf32>
    %61 = vector.broadcast %60 : vector<64x1xf32> to vector<64x64xf32>
    %62 = arith.mulf %57, %61 : vector<64x64xf32>
    %63 = tpu.concatenate %29, %40, %51, %62 in 1 : vector<64x64xf32>, vector<64x64xf32>, vector<64x64xf32>, vector<64x64xf32> -> vector<64x256xf32>
    %cst_17 = arith.constant dense<0.000000e+00> : vector<64x32xf32>
    %64 = tpu.matmul %63, %17, %cst_17 {dimension_numbers = #tpu.dot_dimension_numbers<[1], [0], [0], [1], [0, 0, 1, 1], [], []>} : vector<64x256xf32>, vector<256x32xf32>, vector<64x32xf32> -> vector<64x32xf32>
    %65 = vector.extract_strided_slice %7 {offsets = [64, 0], sizes = [64, 32], strides = [1, 1]} : vector<128x32xf32> to vector<64x32xf32>
    %66 = vector.extract_strided_slice %8 {offsets = [64, 0], sizes = [64, 32], strides = [1, 1]} : vector<128x32xf32> to vector<64x32xf32>
    %67 = vector.extract_strided_slice %9 {offsets = [64, 0], sizes = [64, 32], strides = [1, 1]} : vector<128x32xf32> to vector<64x32xf32>
    %68 = tpu.concatenate %66, %66, %66, %66 in 0 : vector<64x32xf32>, vector<64x32xf32>, vector<64x32xf32>, vector<64x32xf32> -> vector<256x32xf32>
    %69 = arith.mulf %68, %10 : vector<256x32xf32>
    %70 = tpu.concatenate %67, %67, %67, %67 in 0 : vector<64x32xf32>, vector<64x32xf32>, vector<64x32xf32>, vector<64x32xf32> -> vector<256x32xf32>
    %71 = arith.mulf %70, %10 : vector<256x32xf32>
    %cst_18 = arith.constant dense<0.000000e+00> : vector<64x256xf32>
    %72 = tpu.matmul %65, %69, %cst_18 {dimension_numbers = #tpu.dot_dimension_numbers<[1], [1], [0], [0], [0, 0, 1, 0], [], []>} : vector<64x32xf32>, vector<256x32xf32>, vector<64x256xf32> -> vector<64x256xf32>
    %73 = vector.extract_strided_slice %72 {offsets = [0, 0], sizes = [64, 64], strides = [1, 1]} : vector<64x256xf32> to vector<64x64xf32>
    %cst_19 = arith.constant dense<0xFF800000> : vector<64xf32>
    %74 = vector.multi_reduction <maximumf>, %73, %cst_19 [1] : vector<64x64xf32> to vector<64xf32>
    %75 = vector.shape_cast %74 : vector<64xf32> to vector<64x1xf32>
    %76 = vector.broadcast %75 : vector<64x1xf32> to vector<64x64xf32>
    %77 = arith.subf %73, %76 : vector<64x64xf32>
    %78 = math.exp %77 : vector<64x64xf32>
    %cst_20 = arith.constant dense<0.000000e+00> : vector<64xf32>
    %79 = vector.multi_reduction <add>, %78, %cst_20 [1] : vector<64x64xf32> to vector<64xf32>
    %80 = vector.shape_cast %79 : vector<64xf32> to vector<64x1xf32>
    %81 = tpu.reciprocal %80 : vector<64x1xf32> -> vector<64x1xf32>
    %82 = vector.broadcast %81 : vector<64x1xf32> to vector<64x64xf32>
    %83 = arith.mulf %78, %82 : vector<64x64xf32>
    %84 = vector.extract_strided_slice %72 {offsets = [0, 64], sizes = [64, 64], strides = [1, 1]} : vector<64x256xf32> to vector<64x64xf32>
    %cst_21 = arith.constant dense<0xFF800000> : vector<64xf32>
    %85 = vector.multi_reduction <maximumf>, %84, %cst_21 [1] : vector<64x64xf32> to vector<64xf32>
    %86 = vector.shape_cast %85 : vector<64xf32> to vector<64x1xf32>
    %87 = vector.broadcast %86 : vector<64x1xf32> to vector<64x64xf32>
    %88 = arith.subf %84, %87 : vector<64x64xf32>
    %89 = math.exp %88 : vector<64x64xf32>
    %cst_22 = arith.constant dense<0.000000e+00> : vector<64xf32>
    %90 = vector.multi_reduction <add>, %89, %cst_22 [1] : vector<64x64xf32> to vector<64xf32>
    %91 = vector.shape_cast %90 : vector<64xf32> to vector<64x1xf32>
    %92 = tpu.reciprocal %91 : vector<64x1xf32> -> vector<64x1xf32>
    %93 = vector.broadcast %92 : vector<64x1xf32> to vector<64x64xf32>
    %94 = arith.mulf %89, %93 : vector<64x64xf32>
    %95 = vector.extract_strided_slice %72 {offsets = [0, 128], sizes = [64, 64], strides = [1, 1]} : vector<64x256xf32> to vector<64x64xf32>
    %cst_23 = arith.constant dense<0xFF800000> : vector<64xf32>
    %96 = vector.multi_reduction <maximumf>, %95, %cst_23 [1] : vector<64x64xf32> to vector<64xf32>
    %97 = vector.shape_cast %96 : vector<64xf32> to vector<64x1xf32>
    %98 = vector.broadcast %97 : vector<64x1xf32> to vector<64x64xf32>
    %99 = arith.subf %95, %98 : vector<64x64xf32>
    %100 = math.exp %99 : vector<64x64xf32>
    %cst_24 = arith.constant dense<0.000000e+00> : vector<64xf32>
    %101 = vector.multi_reduction <add>, %100, %cst_24 [1] : vector<64x64xf32> to vector<64xf32>
    %102 = vector.shape_cast %101 : vector<64xf32> to vector<64x1xf32>
    %103 = tpu.reciprocal %102 : vector<64x1xf32> -> vector<64x1xf32>
    %104 = vector.broadcast %103 : vector<64x1xf32> to vector<64x64xf32>
    %105 = arith.mulf %100, %104 : vector<64x64xf32>
    %106 = vector.extract_strided_slice %72 {offsets = [0, 192], sizes = [64, 64], strides = [1, 1]} : vector<64x256xf32> to vector<64x64xf32>
    %cst_25 = arith.constant dense<0xFF800000> : vector<64xf32>
    %107 = vector.multi_reduction <maximumf>, %106, %cst_25 [1] : vector<64x64xf32> to vector<64xf32>
    %108 = vector.shape_cast %107 : vector<64xf32> to vector<64x1xf32>
    %109 = vector.broadcast %108 : vector<64x1xf32> to vector<64x64xf32>
    %110 = arith.subf %106, %109 : vector<64x64xf32>
    %111 = math.exp %110 : vector<64x64xf32>
    %cst_26 = arith.constant dense<0.000000e+00> : vector<64xf32>
    %112 = vector.multi_reduction <add>, %111, %cst_26 [1] : vector<64x64xf32> to vector<64xf32>
    %113 = vector.shape_cast %112 : vector<64xf32> to vector<64x1xf32>
    %114 = tpu.reciprocal %113 : vector<64x1xf32> -> vector<64x1xf32>
    %115 = vector.broadcast %114 : vector<64x1xf32> to vector<64x64xf32>
    %116 = arith.mulf %111, %115 : vector<64x64xf32>
    %117 = tpu.concatenate %83, %94, %105, %116 in 1 : vector<64x64xf32>, vector<64x64xf32>, vector<64x64xf32>, vector<64x64xf32> -> vector<64x256xf32>
    %cst_27 = arith.constant dense<0.000000e+00> : vector<64x32xf32>
    %118 = tpu.matmul %117, %71, %cst_27 {dimension_numbers = #tpu.dot_dimension_numbers<[1], [0], [0], [1], [0, 0, 1, 1], [], []>} : vector<64x256xf32>, vector<256x32xf32>, vector<64x32xf32> -> vector<64x32xf32>
    %119 = tpu.concatenate %64, %118 in 0 : vector<64x32xf32>, vector<64x32xf32> -> vector<128x32xf32>
    %c0_28 = arith.constant 0 : index
    %c0_29 = arith.constant 0 : index
    %120 = vector.load %arg5[%c0_28, %c0_29] : memref<32x32xf32, #tpu.memory_space<vmem>>, vector<32x32xf32>
    %cst_30 = arith.constant dense<0.000000e+00> : vector<128x32xf32>
    %121 = tpu.matmul %119, %120, %cst_30 {dimension_numbers = #tpu.dot_dimension_numbers<[1], [0], [0], [1], [0, 0, 1, 1], [], []>} : vector<128x32xf32>, vector<32x32xf32>, vector<128x32xf32> -> vector<128x32xf32>
    %c0_31 = arith.constant 0 : index
    %c0_32 = arith.constant 0 : index
    %122 = vector.load %arg6[%c0_31, %c0_32] : memref<1x32xf32, #tpu.memory_space<vmem>>, vector<1x32xf32>
    %123 = vector.broadcast %122 : vector<1x32xf32> to vector<128x32xf32>
    %124 = arith.addf %121, %123 : vector<128x32xf32>
    %c0_33 = arith.constant 0 : index
    %c0_34 = arith.constant 0 : index
    %125 = vector.load %arg7[%c0_33, %c0_34] : memref<32x64xf32, #tpu.memory_space<vmem>>, vector<32x64xf32>
    %cst_35 = arith.constant dense<0.000000e+00> : vector<128x64xf32>
    %126 = tpu.matmul %1, %125, %cst_35 {dimension_numbers = #tpu.dot_dimension_numbers<[1], [0], [0], [1], [0, 0, 1, 1], [], []>} : vector<128x32xf32>, vector<32x64xf32>, vector<128x64xf32> -> vector<128x64xf32>
    %c0_36 = arith.constant 0 : index
    %c0_37 = arith.constant 0 : index
    %127 = vector.load %arg8[%c0_36, %c0_37] : memref<32x64xf32, #tpu.memory_space<vmem>>, vector<32x64xf32>
    %cst_38 = arith.constant dense<0.000000e+00> : vector<128x64xf32>
    %128 = tpu.matmul %124, %127, %cst_38 {dimension_numbers = #tpu.dot_dimension_numbers<[1], [0], [0], [1], [0, 0, 1, 1], [], []>} : vector<128x32xf32>, vector<32x64xf32>, vector<128x64xf32> -> vector<128x64xf32>
    %129 = arith.addf %126, %128 : vector<128x64xf32>
    %c0_39 = arith.constant 0 : index
    %c0_40 = arith.constant 0 : index
    %130 = vector.load %arg9[%c0_39, %c0_40] : memref<1x64xf32, #tpu.memory_space<vmem>>, vector<1x64xf32>
    %131 = vector.broadcast %130 : vector<1x64xf32> to vector<128x64xf32>
    %132 = arith.addf %129, %131 : vector<128x64xf32>
    %cst_41 = arith.constant dense<0.000000e+00> : vector<64xf32>
    %133 = vector.multi_reduction <add>, %132, %cst_41 [0] : vector<128x64xf32> to vector<64xf32>
    %134 = vector.shape_cast %133 : vector<64xf32> to vector<1x64xf32>
    %cst_42 = arith.constant 1.280000e+02 : f32
    %135 = vector.broadcast %cst_42 : f32 to vector<1x64xf32>
    %136 = arith.divf %134, %135 : vector<1x64xf32>
    %137 = vector.broadcast %136 : vector<1x64xf32> to vector<128x64xf32>
    %138 = arith.subf %132, %137 : vector<128x64xf32>
    %139 = vector.broadcast %136 : vector<1x64xf32> to vector<128x64xf32>
    %140 = arith.subf %132, %139 : vector<128x64xf32>
    %141 = arith.mulf %138, %140 : vector<128x64xf32>
    %cst_43 = arith.constant dense<0.000000e+00> : vector<64xf32>
    %142 = vector.multi_reduction <add>, %141, %cst_43 [0] : vector<128x64xf32> to vector<64xf32>
    %143 = vector.shape_cast %142 : vector<64xf32> to vector<1x64xf32>
    %cst_44 = arith.constant 1.280000e+02 : f32
    %144 = vector.broadcast %cst_44 : f32 to vector<1x64xf32>
    %145 = arith.divf %143, %144 : vector<1x64xf32>
    %c0_45 = arith.constant 0 : index
    %c0_46 = arith.constant 0 : index
    %146 = vector.load %arg10[%c0_45, %c0_46] : memref<1x64xf32, #tpu.memory_space<vmem>>, vector<1x64xf32>
    %cst_47 = arith.constant 9.99999974E-6 : f32
    %147 = vector.broadcast %cst_47 : f32 to vector<1x64xf32>
    %148 = arith.addf %145, %147 : vector<1x64xf32>
    %149 = math.rsqrt %148 : vector<1x64xf32>
    %150 = arith.mulf %146, %149 : vector<1x64xf32>
    %c0_48 = arith.constant 0 : index
    %c0_49 = arith.constant 0 : index
    %151 = vector.load %arg11[%c0_48, %c0_49] : memref<1x64xf32, #tpu.memory_space<vmem>>, vector<1x64xf32>
    %152 = arith.mulf %136, %150 : vector<1x64xf32>
    %153 = arith.subf %151, %152 : vector<1x64xf32>
    %154 = vector.broadcast %150 : vector<1x64xf32> to vector<128x64xf32>
    %155 = arith.mulf %132, %154 : vector<128x64xf32>
    %156 = vector.broadcast %153 : vector<1x64xf32> to vector<128x64xf32>
    %157 = arith.addf %155, %156 : vector<128x64xf32>
    %cst_50 = arith.constant 0.000000e+00 : f32
    %158 = vector.broadcast %cst_50 : f32 to vector<128x64xf32>
    %159 = arith.maximumf %157, %158 : vector<128x64xf32>
    %c0_51 = arith.constant 0 : index
    %c0_52 = arith.constant 0 : index
    %160 = vector.load %arg12[%c0_51, %c0_52] : memref<64x32xf32, #tpu.memory_space<vmem>>, vector<64x32xf32>
    %cst_53 = arith.constant dense<0.000000e+00> : vector<128x32xf32>
    %161 = tpu.matmul %159, %160, %cst_53 {dimension_numbers = #tpu.dot_dimension_numbers<[1], [0], [0], [1], [0, 0, 1, 1], [], []>} : vector<128x64xf32>, vector<64x32xf32>, vector<128x32xf32> -> vector<128x32xf32>
    %162 = arith.addf %1, %161 : vector<128x32xf32>
    %c0_54 = arith.constant 0 : index
    %c0_55 = arith.constant 0 : index
    %163 = vector.load %arg13[%c0_54, %c0_55] : memref<1x32xf32, #tpu.memory_space<vmem>>, vector<1x32xf32>
    %164 = vector.broadcast %163 : vector<1x32xf32> to vector<128x32xf32>
    %165 = arith.addf %162, %164 : vector<128x32xf32>
    %166 = vector.shape_cast %165 : vector<128x32xf32> to vector<2x64x32xf32>
    %c0_56 = arith.constant 0 : index
    %c0_57 = arith.constant 0 : index
    %c0_58 = arith.constant 0 : index
    %167 = vector.load %arg14[%c0_56, %c0_57, %c0_58] : memref<2x64x32xf32, #tpu.memory_space<vmem>>, vector<2x64x32xf32>
    tpu.vector_store %arg14[%c0_56, %c0_57, %c0_58], %166 {strides = array<i32>} : memref<2x64x32xf32, #tpu.memory_space<vmem>>, vector<2x64x32xf32>,
    return
  }
  func.func @transform_0(%arg0: i32) -> (i32, i32, i32) {
    %c0_i32 = arith.constant 0 : i32
    %c0_i32_0 = arith.constant 0 : i32
    %c0_i32_1 = arith.constant 0 : i32
    %c0_i32_2 = arith.constant 0 : i32
    return %c0_i32, %c0_i32_0, %c0_i32_1 : i32, i32, i32
  }
  func.func @transform_1(%arg0: i32) -> (i32, i32) {
    %c0_i32 = arith.constant 0 : i32
    %c0_i32_0 = arith.constant 0 : i32
    %c0_i32_1 = arith.constant 0 : i32
    return %c0_i32, %c0_i32_0 : i32, i32
  }
  func.func @transform_2(%arg0: i32) -> (i32, i32) {
    %c0_i32 = arith.constant 0 : i32
    %c0_i32_0 = arith.constant 0 : i32
    %c0_i32_1 = arith.constant 0 : i32
    return %c0_i32, %c0_i32_0 : i32, i32
  }
  func.func @transform_3(%arg0: i32) -> (i32, i32) {
    %c0_i32 = arith.constant 0 : i32
    %c0_i32_0 = arith.constant 0 : i32
    %c0_i32_1 = arith.constant 0 : i32
    return %c0_i32, %c0_i32_0 : i32, i32
  }
  func.func @transform_4(%arg0: i32) -> (i32, i32) {
    %c0_i32 = arith.constant 0 : i32
    %c0_i32_0 = arith.constant 0 : i32
    %c0_i32_1 = arith.constant 0 : i32
    return %c0_i32, %c0_i32_0 : i32, i32
  }
  func.func @transform_5(%arg0: i32) -> (i32, i32) {
    %c0_i32 = arith.constant 0 : i32
    %c0_i32_0 = arith.constant 0 : i32
    %c0_i32_1 = arith.constant 0 : i32
    return %c0_i32, %c0_i32_0 : i32, i32
  }
  func.func @transform_6(%arg0: i32) -> (i32, i32) {
    %c0_i32 = arith.constant 0 : i32
    %c0_i32_0 = arith.constant 0 : i32
    %c0_i32_1 = arith.constant 0 : i32
    return %c0_i32, %c0_i32_0 : i32, i32
  }
  func.func @transform_7(%arg0: i32) -> (i32, i32) {
    %c0_i32 = arith.constant 0 : i32
    %c0_i32_0 = arith.constant 0 : i32
    %c0_i32_1 = arith.constant 0 : i32
    return %c0_i32, %c0_i32_0 : i32, i32
  }
  func.func @transform_8(%arg0: i32) -> (i32, i32) {
    %c0_i32 = arith.constant 0 : i32
    %c0_i32_0 = arith.constant 0 : i32
    %c0_i32_1 = arith.constant 0 : i32
    return %c0_i32, %c0_i32_0 : i32, i32
  }
  func.func @transform_9(%arg0: i32) -> (i32, i32) {
    %c0_i32 = arith.constant 0 : i32
    %c0_i32_0 = arith.constant 0 : i32
    %c0_i32_1 = arith.constant 0 : i32
    return %c0_i32, %c0_i32_0 : i32, i32
  }
  func.func @transform_10(%arg0: i32) -> (i32, i32) {
    %c0_i32 = arith.constant 0 : i32
    %c0_i32_0 = arith.constant 0 : i32
    %c0_i32_1 = arith.constant 0 : i32
    return %c0_i32, %c0_i32_0 : i32, i32
  }
  func.func @transform_11(%arg0: i32) -> (i32, i32) {
    %c0_i32 = arith.constant 0 : i32
    %c0_i32_0 = arith.constant 0 : i32
    %c0_i32_1 = arith.constant 0 : i32
    return %c0_i32, %c0_i32_0 : i32, i32
  }
  func.func @transform_12(%arg0: i32) -> (i32, i32) {
    %c0_i32 = arith.constant 0 : i32
    %c0_i32_0 = arith.constant 0 : i32
    %c0_i32_1 = arith.constant 0 : i32
    return %c0_i32, %c0_i32_0 : i32, i32
  }
  func.func @transform_13(%arg0: i32) -> (i32, i32, i32) {
    %c0_i32 = arith.constant 0 : i32
    %c0_i32_0 = arith.constant 0 : i32
    %c0_i32_1 = arith.constant 0 : i32
    %c0_i32_2 = arith.constant 0 : i32
    return %c0_i32, %c0_i32_0, %c0_i32_1 : i32, i32, i32
  }
}

</mosaic_0001>

<llo_original>
// kernel: tpu_custom_call.1
$region0: #{tpu_custom_call.1}
  #allocation0 [shape = 'u32[]', space=smem, size = 0x4, offset = 0x4, fixed_abs, tag = 'smem constant byte address 0x4 - core index']
  #allocation1 [shape = 'u32[144,128]{1,0:T(1,128)}', space=vmem, size = 0x12000, scoped, tag = 'internal scratch']
  %s0 = inlined_call_operand.vmem [shape: f32[2,64,32], index: 0, kind: input, shape index: {}]
  %s1 = inlined_call_operand.vmem [shape: f32[32,96], index: 1, kind: input, shape index: {}]
  %s2 = inlined_call_operand.vmem [shape: f32[1,96], index: 2, kind: input, shape index: {}]
  %s3 = inlined_call_operand.vmem [shape: f32[256,32], index: 3, kind: input, shape index: {}]
  %s4 = inlined_call_operand.vmem [shape: f32[32,32], index: 4, kind: input, shape index: {}]
  %s5 = inlined_call_operand.vmem [shape: f32[1,32], index: 5, kind: input, shape index: {}]
  %s6 = inlined_call_operand.vmem [shape: f32[32,64], index: 6, kind: input, shape index: {}]
  %s7 = inlined_call_operand.vmem [shape: f32[32,64], index: 7, kind: input, shape index: {}]
  %s8 = inlined_call_operand.vmem [shape: f32[1,64], index: 8, kind: input, shape index: {}]
  %s9 = inlined_call_operand.vmem [shape: f32[1,64], index: 9, kind: input, shape index: {}]
  %s10 = inlined_call_operand.vmem [shape: f32[1,64], index: 10, kind: input, shape index: {}]
  %s11 = inlined_call_operand.vmem [shape: f32[64,32], index: 11, kind: input, shape index: {}]
  %s12 = inlined_call_operand.vmem [shape: f32[1,32], index: 12, kind: input, shape index: {}]
  %s13 = inlined_call_operand.vmem [shape: f32[2,64,32], index: 13, kind: output, shape index: {}]
  %s14 = sld [smem:[#allocation0]]
  $region62: #{tpu_custom_call.1} parent=0
    _
  %s16 = ssub.s32 1, %s14
  %s17 = scalar_select 0, %s16, %s14
  // Predicated region
  $region2: #{tpu_custom_call.1} parent=0 // pred_check
    _
  $region3: #{tpu_custom_call.1} parent=0 // pred_check_branch
    %19 = sbr.rel (0) target = $region5
  $region4: #{tpu_custom_call.1} parent=0 // pred_region
    _
  $region5: #{tpu_custom_call.1} parent=0 // pred_fallthru
    _
  // Predicated region
  $region6: #{tpu_custom_call.1} parent=0 // pred_check
    _
  $region7: #{tpu_custom_call.1} parent=0 // pred_check_branch
    %21 = sbr.rel (0) target = $region9
  $region8: #{tpu_custom_call.1} parent=0 // pred_region
    _
  $region9: #{tpu_custom_call.1} parent=0 // pred_fallthru
    _
  // Predicated region
  $region10: #{tpu_custom_call.1} parent=0 // pred_check
    _
  $region11: #{tpu_custom_call.1} parent=0 // pred_check_branch
    %23 = sbr.rel (0) target = $region13
  $region12: #{tpu_custom_call.1} parent=0 // pred_region
    _
  $region13: #{tpu_custom_call.1} parent=0 // pred_fallthru
    _
  // Predicated region
  $region14: #{tpu_custom_call.1} parent=0 // pred_check
    _
  $region15: #{tpu_custom_call.1} parent=0 // pred_check_branch
    %25 = sbr.rel (0) target = $region17
  $region16: #{tpu_custom_call.1} parent=0 // pred_region
    _
  $region17: #{tpu_custom_call.1} parent=0 // pred_fallthru
    _
  // Predicated region
  $region18: #{tpu_custom_call.1} parent=0 // pred_check
    _
  $region19: #{tpu_custom_call.1} parent=0 // pred_check_branch
    %27 = sbr.rel (0) target = $region21
  $region20: #{tpu_custom_call.1} parent=0 // pred_region
    _
  $region21: #{tpu_custom_call.1} parent=0 // pred_fallthru
    _
  // Predicated region
  $region22: #{tpu_custom_call.1} parent=0 // pred_check
    _
  $region23: #{tpu_custom_call.1} parent=0 // pred_check_branch
    %29 = sbr.rel (0) target = $region25
  $region24: #{tpu_custom_call.1} parent=0 // pred_region
    _
  $region25: #{tpu_custom_call.1} parent=0 // pred_fallthru
    _
  // Predicated region
  $region26: #{tpu_custom_call.1} parent=0 // pred_check
    _
  $region27: #{tpu_custom_call.1} parent=0 // pred_check_branch
    %31 = sbr.rel (0) target = $region29
  $region28: #{tpu_custom_call.1} parent=0 // pred_region
    _
  $region29: #{tpu_custom_call.1} parent=0 // pred_fallthru
    _
  // Predicated region
  $region30: #{tpu_custom_call.1} parent=0 // pred_check
    _
  $region31: #{tpu_custom_call.1} parent=0 // pred_check_branch
    %33 = sbr.rel (0) target = $region33
  $region32: #{tpu_custom_call.1} parent=0 // pred_region
    _
  $region33: #{tpu_custom_call.1} parent=0 // pred_fallthru
    _
  // Predicated region
  $region34: #{tpu_custom_call.1} parent=0 // pred_check
    _
  $region35: #{tpu_custom_call.1} parent=0 // pred_check_branch
    %35 = sbr.rel (0) target = $region37
  $region36: #{tpu_custom_call.1} parent=0 // pred_region
    _
  $region37: #{tpu_custom_call.1} parent=0 // pred_fallthru
    _
  // Predicated region
  $region38: #{tpu_custom_call.1} parent=0 // pred_check
    _
  $region39: #{tpu_custom_call.1} parent=0 // pred_check_branch
    %37 = sbr.rel (0) target = $region41
  $region40: #{tpu_custom_call.1} parent=0 // pred_region
    _
  $region41: #{tpu_custom_call.1} parent=0 // pred_fallthru
    _
  // Predicated region
  $region42: #{tpu_custom_call.1} parent=0 // pred_check
    _
  $region43: #{tpu_custom_call.1} parent=0 // pred_check_branch
    %39 = sbr.rel (0) target = $region45
  $region44: #{tpu_custom_call.1} parent=0 // pred_region
    _
  $region45: #{tpu_custom_call.1} parent=0 // pred_fallthru
    _
  // Predicated region
  $region46: #{tpu_custom_call.1} parent=0 // pred_check
    _
  $region47: #{tpu_custom_call.1} parent=0 // pred_check_branch
    %41 = sbr.rel (0) target = $region49
  $region48: #{tpu_custom_call.1} parent=0 // pred_region
    _
  $region49: #{tpu_custom_call.1} parent=0 // pred_fallthru
    _
  // Predicated region
  $region50: #{tpu_custom_call.1} parent=0 // pred_check
    _
  $region51: #{tpu_custom_call.1} parent=0 // pred_check_branch
    %43 = sbr.rel (0) target = $region53
  $region52: #{tpu_custom_call.1} parent=0 // pred_region
    _
  $region53: #{tpu_custom_call.1} parent=0 // pred_fallthru
    _
  %v44 = vld [vmem:[%s0] sm:$0xff]
  %v45 = vld [vmem:[%s0 + $0x8] sm:$0xff]
  %v46 = vld [vmem:[%s0 + $0x10] sm:$0xff]
  %v47 = vld [vmem:[%s0 + $0x18] sm:$0xff]
  %v48 = vld [vmem:[%s0 + $0x20] sm:$0xff]
  %v49 = vld [vmem:[%s0 + $0x28] sm:$0xff]
  %v50 = vld [vmem:[%s0 + $0x30] sm:$0xff]
  %v51 = vld [vmem:[%s0 + $0x38] sm:$0xff]
  %v52 = vld [vmem:[%s0 + $0x40] sm:$0xff]
  %v53 = vld [vmem:[%s0 + $0x48] sm:$0xff]
  %v54 = vld [vmem:[%s0 + $0x50] sm:$0xff]
  %v55 = vld [vmem:[%s0 + $0x58] sm:$0xff]
  %v56 = vld [vmem:[%s0 + $0x60] sm:$0xff]
  %v57 = vld [vmem:[%s0 + $0x68] sm:$0xff]
  %v58 = vld [vmem:[%s0 + $0x70] sm:$0xff]
  %v59 = vld [vmem:[%s0 + $0x78] sm:$0xff]
  %v60 = vld [vmem:[%s1] sm:$0xff]
  %v61 = vld [vmem:[%s1 + $0x8] sm:$0xff]
  %v62 = vld [vmem:[%s1 + $0x10] sm:$0xff]
  %v63 = vld [vmem:[%s1 + $0x18] sm:$0xff]
  %v64 = vld [vmem:[%s2] sm:$0x1]
  %v66 = vlaneseq
  %v67 = vshrl.u32 %v66, 7
  %v68 = vsub.s32 0, %v67
  %v69 = vrot.slane %v64, %v68
  %vm71 = vcmask 261120
  %v73 = vsel %vm71, %v44, 0
  %v76 = vsel %vm71, %v45, 0
  %v79 = vsel %vm71, %v46, 0
  %v82 = vsel %vm71, %v47, 0
  %v85 = vsel %vm71, %v48, 0
  %v88 = vsel %vm71, %v49, 0
  %v91 = vsel %vm71, %v50, 0
  %v94 = vsel %vm71, %v51, 0
  %v97 = vsel %vm71, %v52, 0
  %v100 = vsel %vm71, %v53, 0
  %v103 = vsel %vm71, %v54, 0
  %v106 = vsel %vm71, %v55, 0
  %v109 = vsel %vm71, %v56, 0
  %v112 = vsel %vm71, %v57, 0
  %v115 = vsel %vm71, %v58, 0
  %v118 = vsel %vm71, %v59, 0
  %120 = vmatprep.subr.mxu0 0.0
  %121 = vmatpush1.msra.mxu0 %v60
  %122 = vmatprep.subr.mxu0 0.0
  %123 = vmatpush1.msra.mxu0 %v61
  %124 = vmatprep.subr.mxu0 0.0
  %125 = vmatpush1.msra.mxu0 %v62
  %126 = vmatprep.subr.mxu0 0.0
  %127 = vmatpush1.msra.mxu0 %v63
  %128 = vmatprep.subr.mxu0 0.0
  %129 = vmatpush1.msra.mxu0 0.0
  %130 = vmatprep.subr.mxu0 0.0
  %131 = vmatpush1.msra.mxu0 0.0
  %132 = vmatprep.subr.mxu0 0.0
  %133 = vmatpush1.msra.mxu0 0.0
  %134 = vmatprep.subr.mxu0 0.0
  %135 = vmatpush1.msra.mxu0 0.0
  %136 = vmatprep.subr.mxu0 0.0
  %137 = vmatpush1.msra.mxu0 0.0
  %138 = vmatprep.subr.mxu0 0.0
  %139 = vmatpush1.msra.mxu0 0.0
  %140 = vmatprep.subr.mxu0 0.0
  %141 = vmatpush1.msra.mxu0 0.0
  %142 = vmatprep.subr.mxu0 0.0
  %143 = vmatpush1.msra.mxu0 0.0
  %144 = vmatprep.subr.mxu0 0.0
  %145 = vmatpush1.msra.mxu0 0.0
  %146 = vmatprep.subr.mxu0 0.0
  %147 = vmatpush1.msra.mxu0 0.0
  %148 = vmatprep.subr.mxu0 0.0
  %149 = vmatpush1.msra.mxu0 0.0
  %150 = vmatprep.subr.mxu0 0.0
  %151 = vmatpush1.msra.mxu0 0.0
  %152 = vmatprep.subr.mxu0 0.0
  %153 = vmatpush1.msra.mxu0 0.0
  %154 = vmatprep.subr.mxu0 0.0
  %155 = vmatpush1.msra.mxu0 0.0
  %156 = vmatprep.subr.mxu0 0.0
  %157 = vmatpush1.msra.mxu0 0.0
  %158 = vmatprep.subr.mxu0 0.0
  %159 = vmatpush1.msra.mxu0 0.0
  %160 = vmatprep.subr.mxu0 0.0
  %161 = vmatpush1.msra.mxu0 0.0
  %162 = vmatprep.subr.mxu0 0.0
  %163 = vmatpush1.msra.mxu0 0.0
  %164 = vmatprep.subr.mxu0 0.0
  %165 = vmatpush1.msra.mxu0 0.0
  %166 = vmatprep.subr.mxu0 0.0
  %167 = vmatpush1.msra.mxu0 0.0
  %168 = vmatprep.subr.mxu0 0.0
  %169 = vmatpush1.msra.mxu0 0.0
  %170 = vmatprep.subr.mxu0 0.0
  %171 = vmatpush1.msra.mxu0 0.0
  %172 = vmatprep.subr.mxu0 0.0
  %173 = vmatpush1.msra.mxu0 0.0
  %174 = vmatprep.subr.mxu0 0.0
  %175 = vmatpush1.msra.mxu0 0.0
  %176 = vmatprep.subr.mxu0 0.0
  %177 = vmatpush1.msra.mxu0 0.0
  %178 = vmatprep.subr.mxu0 0.0
  %179 = vmatpush1.msra.mxu0 0.0
  %180 = vmatprep.subr.mxu0 0.0
  %181 = vmatpush1.msra.mxu0 0.0
  %182 = vmatprep.subr.mxu0 0.0
  %183 = vmatpush1.msra.mxu0 0.0
  %184 = vmatprep.mubr.f32.mxu0 0.0
  %185 = vmatmul.mubr.f32.gmra.mrb[0].mxu0 %v73
  %v186 = vpop.f32.mrb[0].mxu0
  %v187 = vadd.f32 %v69, %v186
  %v188 = vpop.f32.mrb[0].mxu0
  %189 = vmatprep.mubr.f32.mxu0 0.0
  %190 = vmatmul.mubr.f32.gmra.mrb[0].mxu0 %v76
  %v191 = vpop.f32.mrb[0].mxu0
  %v192 = vadd.f32 %v69, %v191
  %v193 = vpop.f32.mrb[0].mxu0
  %194 = vmatprep.mubr.f32.mxu0 0.0
  %195 = vmatmul.mubr.f32.gmra.mrb[0].mxu0 %v79
  %v196 = vpop.f32.mrb[0].mxu0
  %v197 = vadd.f32 %v69, %v196
  %v198 = vpop.f32.mrb[0].mxu0
  %199 = vmatprep.mubr.f32.mxu0 0.0
  %200 = vmatmul.mubr.f32.gmra.mrb[0].mxu0 %v82
  %v201 = vpop.f32.mrb[0].mxu0
  %v202 = vadd.f32 %v69, %v201
  %v203 = vpop.f32.mrb[0].mxu0
  %204 = vmatprep.mubr.f32.mxu0 0.0
  %205 = vmatmul.mubr.f32.gmra.mrb[0].mxu0 %v85
  %v206 = vpop.f32.mrb[0].mxu0
  %v207 = vadd.f32 %v69, %v206
  %v208 = vpop.f32.mrb[0].mxu0
  %209 = vmatprep.mubr.f32.mxu0 0.0
  %210 = vmatmul.mubr.f32.gmra.mrb[0].mxu0 %v88
  %v211 = vpop.f32.mrb[0].mxu0
  %v212 = vadd.f32 %v69, %v211
  %v213 = vpop.f32.mrb[0].mxu0
  %214 = vmatprep.mubr.f32.mxu0 0.0
  %215 = vmatmul.mubr.f32.gmra.mrb[0].mxu0 %v91
  %v216 = vpop.f32.mrb[0].mxu0
  %v217 = vadd.f32 %v69, %v216
  %v218 = vpop.f32.mrb[0].mxu0
  %219 = vmatprep.mubr.f32.mxu0 0.0
  %220 = vmatmul.mubr.f32.gmra.mrb[0].mxu0 %v94
  %v221 = vpop.f32.mrb[0].mxu0
  %v222 = vadd.f32 %v69, %v221
  %v223 = vpop.f32.mrb[0].mxu0
  %224 = vmatprep.mubr.f32.mxu0 0.0
  %225 = vmatmul.mubr.f32.gmra.mrb[0].mxu0 %v97
  %v226 = vpop.f32.mrb[0].mxu0
  %v227 = vadd.f32 %v69, %v226
  %v228 = vpop.f32.mrb[0].mxu0
  %229 = vmatprep.mubr.f32.mxu0 0.0
  %230 = vmatmul.mubr.f32.gmra.mrb[0].mxu0 %v100
  %v231 = vpop.f32.mrb[0].mxu0
  %v232 = vadd.f32 %v69, %v231
  %v233 = vpop.f32.mrb[0].mxu0
  %234 = vmatprep.mubr.f32.mxu0 0.0
  %235 = vmatmul.mubr.f32.gmra.mrb[0].mxu0 %v103
  %v236 = vpop.f32.mrb[0].mxu0
  %v237 = vadd.f32 %v69, %v236
  %v238 = vpop.f32.mrb[0].mxu0
  %239 = vmatprep.mubr.f32.mxu0 0.0
  %240 = vmatmul.mubr.f32.gmra.mrb[0].mxu0 %v106
  %v241 = vpop.f32.mrb[0].mxu0
  %v242 = vadd.f32 %v69, %v241
  %v243 = vpop.f32.mrb[0].mxu0
  %244 = vmatprep.mubr.f32.mxu0 0.0
  %245 = vmatmul.mubr.f32.gmra.mrb[0].mxu0 %v109
  %v246 = vpop.f32.mrb[0].mxu0
  %v247 = vadd.f32 %v69, %v246
  %v248 = vpop.f32.mrb[0].mxu0
  %249 = vmatprep.mubr.f32.mxu0 0.0
  %250 = vmatmul.mubr.f32.gmra.mrb[0].mxu0 %v112
  %v251 = vpop.f32.mrb[0].mxu0
  %v252 = vadd.f32 %v69, %v251
  %v253 = vpop.f32.mrb[0].mxu0
  %254 = vmatprep.mubr.f32.mxu0 0.0
  %255 = vmatmul.mubr.f32.gmra.mrb[0].mxu0 %v115
  %v256 = vpop.f32.mrb[0].mxu0
  %v257 = vadd.f32 %v69, %v256
  %v258 = vpop.f32.mrb[0].mxu0
  %259 = vmatprep.mubr.f32.mxu0 0.0
  %260 = vmatmul.mubr.f32.gmra.mrb[0].mxu0 %v118
  %v261 = vpop.f32.mrb[0].mxu0
  %v262 = vadd.f32 %v69, %v261
  %v263 = vpop.f32.mrb[0].mxu0
  %264 = vdwg.mxu0
  %v265 = vld [vmem:[%s3] sm:$0xff]
  %v266 = vld [vmem:[%s3 + $0x8] sm:$0xff]
  %v267 = vld [vmem:[%s3 + $0x10] sm:$0xff]
  %v268 = vld [vmem:[%s3 + $0x18] sm:$0xff]
  %v269 = vld [vmem:[%s3 + $0x20] sm:$0xff]
  %v270 = vld [vmem:[%s3 + $0x28] sm:$0xff]
  %v271 = vld [vmem:[%s3 + $0x30] sm:$0xff]
  %v272 = vld [vmem:[%s3 + $0x38] sm:$0xff]
  %v273 = vld [vmem:[%s3 + $0x40] sm:$0xff]
  %v274 = vld [vmem:[%s3 + $0x48] sm:$0xff]
  %v275 = vld [vmem:[%s3 + $0x50] sm:$0xff]
  %v276 = vld [vmem:[%s3 + $0x58] sm:$0xff]
  %v277 = vld [vmem:[%s3 + $0x60] sm:$0xff]
  %v278 = vld [vmem:[%s3 + $0x68] sm:$0xff]
  %v279 = vld [vmem:[%s3 + $0x70] sm:$0xff]
  %v280 = vld [vmem:[%s3 + $0x78] sm:$0xff]
  %v281 = vld [vmem:[%s3 + $0x80] sm:$0xff]
  %v282 = vld [vmem:[%s3 + $0x88] sm:$0xff]
  %v283 = vld [vmem:[%s3 + $0x90] sm:$0xff]
  %v284 = vld [vmem:[%s3 + $0x98] sm:$0xff]
  %v285 = vld [vmem:[%s3 + $0xa0] sm:$0xff]
  %v286 = vld [vmem:[%s3 + $0xa8] sm:$0xff]
  %v287 = vld [vmem:[%s3 + $0xb0] sm:$0xff]
  %v288 = vld [vmem:[%s3 + $0xb8] sm:$0xff]
  %v289 = vld [vmem:[%s3 + $0xc0] sm:$0xff]
  %v290 = vld [vmem:[%s3 + $0xc8] sm:$0xff]
  %v291 = vld [vmem:[%s3 + $0xd0] sm:$0xff]
  %v292 = vld [vmem:[%s3 + $0xd8] sm:$0xff]
  %v293 = vld [vmem:[%s3 + $0xe0] sm:$0xff]
  %v294 = vld [vmem:[%s3 + $0xe8] sm:$0xff]
  %v295 = vld [vmem:[%s3 + $0xf0] sm:$0xff]
  %v296 = vld [vmem:[%s3 + $0xf8] sm:$0xff]
  %329 = vrot.lane.b32.xlu0 %v265, 32
  %v330 = vpop.permute.xlu0 %329
  %331 = vrot.lane.b32.xlu0 %v266, 32
  %v332 = vpop.permute.xlu0 %331
  %333 = vrot.lane.b32.xlu0 %v267, 32
  %v334 = vpop.permute.xlu0 %333
  %335 = vrot.lane.b32.xlu0 %v268, 32
  %v336 = vpop.permute.xlu0 %335
  %337 = vrot.lane.b32.xlu0 %v269, 32
  %v338 = vpop.permute.xlu0 %337
  %339 = vrot.lane.b32.xlu0 %v270, 32
  %v340 = vpop.permute.xlu0 %339
  %341 = vrot.lane.b32.xlu0 %v271, 32
  %v342 = vpop.permute.xlu0 %341
  %343 = vrot.lane.b32.xlu0 %v272, 32
  %v344 = vpop.permute.xlu0 %343
  %345 = vrot.lane.b32.xlu0 %v273, 32
  %v346 = vpop.permute.xlu0 %345
  %347 = vrot.lane.b32.xlu0 %v274, 32
  %v348 = vpop.permute.xlu0 %347
  %349 = vrot.lane.b32.xlu0 %v275, 32
  %v350 = vpop.permute.xlu0 %349
  %351 = vrot.lane.b32.xlu0 %v276, 32
  %v352 = vpop.permute.xlu0 %351
  %353 = vrot.lane.b32.xlu0 %v277, 32
  %v354 = vpop.permute.xlu0 %353
  %355 = vrot.lane.b32.xlu0 %v278, 32
  %v356 = vpop.permute.xlu0 %355
  %357 = vrot.lane.b32.xlu0 %v279, 32
  %v358 = vpop.permute.xlu0 %357
  %359 = vrot.lane.b32.xlu0 %v280, 32
  %v360 = vpop.permute.xlu0 %359
  %361 = vrot.lane.b32.xlu0 %v281, 32
  %v362 = vpop.permute.xlu0 %361
  %363 = vrot.lane.b32.xlu0 %v282, 32
  %v364 = vpop.permute.xlu0 %363
  %365 = vrot.lane.b32.xlu0 %v283, 32
  %v366 = vpop.permute.xlu0 %365
  %367 = vrot.lane.b32.xlu0 %v284, 32
  %v368 = vpop.permute.xlu0 %367
  %369 = vrot.lane.b32.xlu0 %v285, 32
  %v370 = vpop.permute.xlu0 %369
  %371 = vrot.lane.b32.xlu0 %v286, 32
  %v372 = vpop.permute.xlu0 %371
  %373 = vrot.lane.b32.xlu0 %v287, 32
  %v374 = vpop.permute.xlu0 %373
  %375 = vrot.lane.b32.xlu0 %v288, 32
  %v376 = vpop.permute.xlu0 %375
  %377 = vrot.lane.b32.xlu0 %v289, 32
  %v378 = vpop.permute.xlu0 %377
  %379 = vrot.lane.b32.xlu0 %v290, 32
  %v380 = vpop.permute.xlu0 %379
  %381 = vrot.lane.b32.xlu0 %v291, 32
  %v382 = vpop.permute.xlu0 %381
  %383 = vrot.lane.b32.xlu0 %v292, 32
  %v384 = vpop.permute.xlu0 %383
  %385 = vrot.lane.b32.xlu0 %v293, 32
  %v386 = vpop.permute.xlu0 %385
  %387 = vrot.lane.b32.xlu0 %v294, 32
  %v388 = vpop.permute.xlu0 %387
  %389 = vrot.lane.b32.xlu0 %v295, 32
  %v390 = vpop.permute.xlu0 %389
  %391 = vrot.lane.b32.xlu0 %v296, 32
  %v392 = vpop.permute.xlu0 %391
  %v425 = vmul.f32 %v187, %v330
  %v426 = vmul.f32 %v192, %v332
  %v427 = vmul.f32 %v197, %v334
  %v428 = vmul.f32 %v202, %v336
  %v429 = vmul.f32 %v207, %v338
  %v430 = vmul.f32 %v212, %v340
  %v431 = vmul.f32 %v217, %v342
  %v432 = vmul.f32 %v222, %v344
  %v433 = vmul.f32 %v187, %v346
  %v434 = vmul.f32 %v192, %v348
  %v435 = vmul.f32 %v197, %v350
  %v436 = vmul.f32 %v202, %v352
  %v437 = vmul.f32 %v207, %v354
  %v438 = vmul.f32 %v212, %v356
  %v439 = vmul.f32 %v217, %v358
  %v440 = vmul.f32 %v222, %v360
  %v441 = vmul.f32 %v187, %v362
  %v442 = vmul.f32 %v192, %v364
  %v443 = vmul.f32 %v197, %v366
  %v444 = vmul.f32 %v202, %v368
  %v445 = vmul.f32 %v207, %v370
  %v446 = vmul.f32 %v212, %v372
  %v447 = vmul.f32 %v217, %v374
  %v448 = vmul.f32 %v222, %v376
  %v449 = vmul.f32 %v187, %v378
  %v450 = vmul.f32 %v192, %v380
  %v451 = vmul.f32 %v197, %v382
  %v452 = vmul.f32 %v202, %v384
  %v453 = vmul.f32 %v207, %v386
  %v454 = vmul.f32 %v212, %v388
  %v455 = vmul.f32 %v217, %v390
  %v456 = vmul.f32 %v222, %v392
  %457 = vrot.lane.b32.xlu0 %v265, 64
  %v458 = vpop.permute.xlu0 %457
  %459 = vrot.lane.b32.xlu0 %v266, 64
  %v460 = vpop.permute.xlu0 %459
  %461 = vrot.lane.b32.xlu0 %v267, 64
  %v462 = vpop.permute.xlu0 %461
  %463 = vrot.lane.b32.xlu0 %v268, 64
  %v464 = vpop.permute.xlu0 %463
  %465 = vrot.lane.b32.xlu0 %v269, 64
  %v466 = vpop.permute.xlu0 %465
  %467 = vrot.lane.b32.xlu0 %v270, 64
  %v468 = vpop.permute.xlu0 %467
  %469 = vrot.lane.b32.xlu0 %v271, 64
  %v470 = vpop.permute.xlu0 %469
  %471 = vrot.lane.b32.xlu0 %v272, 64
  %v472 = vpop.permute.xlu0 %471
  %473 = vrot.lane.b32.xlu0 %v273, 64
  %v474 = vpop.permute.xlu0 %473
  %475 = vrot.lane.b32.xlu0 %v274, 64
  %v476 = vpop.permute.xlu0 %475
  %477 = vrot.lane.b32.xlu0 %v275, 64
  %v478 = vpop.permute.xlu0 %477
  %479 = vrot.lane.b32.xlu0 %v276, 64
  %v480 = vpop.permute.xlu0 %479
  %481 = vrot.lane.b32.xlu0 %v277, 64
  %v482 = vpop.permute.xlu0 %481
  %483 = vrot.lane.b32.xlu0 %v278, 64
  %v484 = vpop.permute.xlu0 %483
  %485 = vrot.lane.b32.xlu0 %v279, 64
  %v486 = vpop.permute.xlu0 %485
  %487 = vrot.lane.b32.xlu0 %v280, 64
  %v488 = vpop.permute.xlu0 %487
  %489 = vrot.lane.b32.xlu0 %v281, 64
  %v490 = vpop.permute.xlu0 %489
  %491 = vrot.lane.b32.xlu0 %v282, 64
  %v492 = vpop.permute.xlu0 %491
  %493 = vrot.lane.b32.xlu0 %v283, 64
  %v494 = vpop.permute.xlu0 %493
  %495 = vrot.lane.b32.xlu0 %v284, 64
  %v496 = vpop.permute.xlu0 %495
  %497 = vrot.lane.b32.xlu0 %v285, 64
  %v498 = vpop.permute.xlu0 %497
  %499 = vrot.lane.b32.xlu0 %v286, 64
  %v500 = vpop.permute.xlu0 %499
  %501 = vrot.lane.b32.xlu0 %v287, 64
  %v502 = vpop.permute.xlu0 %501
  %503 = vrot.lane.b32.xlu0 %v288, 64
  %v504 = vpop.permute.xlu0 %503
  %505 = vrot.lane.b32.xlu0 %v289, 64
  %v506 = vpop.permute.xlu0 %505
  %507 = vrot.lane.b32.xlu0 %v290, 64
  %v508 = vpop.permute.xlu0 %507
  %509 = vrot.lane.b32.xlu0 %v291, 64
  %v510 = vpop.permute.xlu0 %509
  %511 = vrot.lane.b32.xlu0 %v292, 64
  %v512 = vpop.permute.xlu0 %511
  %513 = vrot.lane.b32.xlu0 %v293, 64
  %v514 = vpop.permute.xlu0 %513
  %515 = vrot.lane.b32.xlu0 %v294, 64
  %v516 = vpop.permute.xlu0 %515
  %517 = vrot.lane.b32.xlu0 %v295, 64
  %v518 = vpop.permute.xlu0 %517
  %519 = vrot.lane.b32.xlu0 %v296, 64
  %v520 = vpop.permute.xlu0 %519
  %v553 = vmul.f32 %v187, %v458
  %v554 = vmul.f32 %v192, %v460
  %v555 = vmul.f32 %v197, %v462
  %v556 = vmul.f32 %v202, %v464
  %v557 = vmul.f32 %v207, %v466
  %v558 = vmul.f32 %v212, %v468
  %v559 = vmul.f32 %v217, %v470
  %v560 = vmul.f32 %v222, %v472
  %v561 = vmul.f32 %v187, %v474
  %v562 = vmul.f32 %v192, %v476
  %v563 = vmul.f32 %v197, %v478
  %v564 = vmul.f32 %v202, %v480
  %v565 = vmul.f32 %v207, %v482
  %v566 = vmul.f32 %v212, %v484
  %v567 = vmul.f32 %v217, %v486
  %v568 = vmul.f32 %v222, %v488
  %v569 = vmul.f32 %v187, %v490
  %v570 = vmul.f32 %v192, %v492
  %v571 = vmul.f32 %v197, %v494
  %v572 = vmul.f32 %v202, %v496
  %v573 = vmul.f32 %v207, %v498
  %v574 = vmul.f32 %v212, %v500
  %v575 = vmul.f32 %v217, %v502
  %v576 = vmul.f32 %v222, %v504
  %v577 = vmul.f32 %v187, %v506
  %v578 = vmul.f32 %v192, %v508
  %v579 = vmul.f32 %v197, %v510
  %v580 = vmul.f32 %v202, %v512
  %v581 = vmul.f32 %v207, %v514
  %v582 = vmul.f32 %v212, %v516
  %v583 = vmul.f32 %v217, %v518
  %v584 = vmul.f32 %v222, %v520
  %617 = vrot.lane.b32.xlu0 %v425, 96
  %v618 = vpop.permute.xlu0 %617
  %619 = vrot.lane.b32.xlu0 %v426, 96
  %v620 = vpop.permute.xlu0 %619
  %621 = vrot.lane.b32.xlu0 %v427, 96
  %v622 = vpop.permute.xlu0 %621
  %623 = vrot.lane.b32.xlu0 %v428, 96
  %v624 = vpop.permute.xlu0 %623
  %625 = vrot.lane.b32.xlu0 %v429, 96
  %v626 = vpop.permute.xlu0 %625
  %627 = vrot.lane.b32.xlu0 %v430, 96
  %v628 = vpop.permute.xlu0 %627
  %629 = vrot.lane.b32.xlu0 %v431, 96
  %v630 = vpop.permute.xlu0 %629
  %631 = vrot.lane.b32.xlu0 %v432, 96
  %v632 = vpop.permute.xlu0 %631
  %633 = vrot.lane.b32.xlu0 %v433, 96
  %v634 = vpop.permute.xlu0 %633
  %635 = vrot.lane.b32.xlu0 %v434, 96
  %v636 = vpop.permute.xlu0 %635
  %637 = vrot.lane.b32.xlu0 %v435, 96
  %v638 = vpop.permute.xlu0 %637
  %639 = vrot.lane.b32.xlu0 %v436, 96
  %v640 = vpop.permute.xlu0 %639
  %641 = vrot.lane.b32.xlu0 %v437, 96
  %v642 = vpop.permute.xlu0 %641
  %643 = vrot.lane.b32.xlu0 %v438, 96
  %v644 = vpop.permute.xlu0 %643
  %645 = vrot.lane.b32.xlu0 %v439, 96
  %v646 = vpop.permute.xlu0 %645
  %647 = vrot.lane.b32.xlu0 %v440, 96
  %v648 = vpop.permute.xlu0 %647
  %649 = vrot.lane.b32.xlu0 %v441, 96
  %v650 = vpop.permute.xlu0 %649
  %651 = vrot.lane.b32.xlu0 %v442, 96
  %v652 = vpop.permute.xlu0 %651
  %653 = vrot.lane.b32.xlu0 %v443, 96
  %v654 = vpop.permute.xlu0 %653
  %655 = vrot.lane.b32.xlu0 %v444, 96
  %v656 = vpop.permute.xlu0 %655
  %657 = vrot.lane.b32.xlu0 %v445, 96
  %v658 = vpop.permute.xlu0 %657
  %659 = vrot.lane.b32.xlu0 %v446, 96
  %v660 = vpop.permute.xlu0 %659
  %661 = vrot.lane.b32.xlu0 %v447, 96
  %v662 = vpop.permute.xlu0 %661
  %663 = vrot.lane.b32.xlu0 %v448, 96
  %v664 = vpop.permute.xlu0 %663
  %665 = vrot.lane.b32.xlu0 %v449, 96
  %v666 = vpop.permute.xlu0 %665
  %667 = vrot.lane.b32.xlu0 %v450, 96
  %v668 = vpop.permute.xlu0 %667
  %669 = vrot.lane.b32.xlu0 %v451, 96
  %v670 = vpop.permute.xlu0 %669
  %671 = vrot.lane.b32.xlu0 %v452, 96
  %v672 = vpop.permute.xlu0 %671
  %673 = vrot.lane.b32.xlu0 %v453, 96
  %v674 = vpop.permute.xlu0 %673
  %675 = vrot.lane.b32.xlu0 %v454, 96
  %v676 = vpop.permute.xlu0 %675
  %677 = vrot.lane.b32.xlu0 %v455, 96
  %v678 = vpop.permute.xlu0 %677
  %679 = vrot.lane.b32.xlu0 %v456, 96
  %v680 = vpop.permute.xlu0 %679
  %v682 = vsel %vm71, %v187, 0
  %v685 = vsel %vm71, %v192, 0
  %v688 = vsel %vm71, %v197, 0
  %v691 = vsel %vm71, %v202, 0
  %v694 = vsel %vm71, %v207, 0
  %v697 = vsel %vm71, %v212, 0
  %v700 = vsel %vm71, %v217, 0
  %v703 = vsel %vm71, %v222, 0
  %v705 = vsel %vm71, %v618, 0
  %v707 = vsel %vm71, %v620, 0
  %v709 = vsel %vm71, %v622, 0
  %v711 = vsel %vm71, %v624, 0
  %v713 = vsel %vm71, %v626, 0
  %v715 = vsel %vm71, %v628, 0
  %v717 = vsel %vm71, %v630, 0
  %v719 = vsel %vm71, %v632, 0
  %v721 = vsel %vm71, %v634, 0
  %v723 = vsel %vm71, %v636, 0
  %v725 = vsel %vm71, %v638, 0
  %v727 = vsel %vm71, %v640, 0
  %v729 = vsel %vm71, %v642, 0
  %v731 = vsel %vm71, %v644, 0
  %v733 = vsel %vm71, %v646, 0
  %v735 = vsel %vm71, %v648, 0
  %v737 = vsel %vm71, %v650, 0
  %v739 = vsel %vm71, %v652, 0
  %v741 = vsel %vm71, %v654, 0
  %v743 = vsel %vm71, %v656, 0
  %v745 = vsel %vm71, %v658, 0
  %v747 = vsel %vm71, %v660, 0
  %v749 = vsel %vm71, %v662, 0
  %v751 = vsel %vm71, %v664, 0
  %v753 = vsel %vm71, %v666, 0
  %v755 = vsel %vm71, %v668, 0
  %v757 = vsel %vm71, %v670, 0
  %v759 = vsel %vm71, %v672, 0
  %v761 = vsel %vm71, %v674, 0
  %v763 = vsel %vm71, %v676, 0
  %v765 = vsel %vm71, %v678, 0
  %v767 = vsel %vm71, %v680, 0
  %769 = vmatprep.subr.mxu0 0.0
  %770 = vmatpush1.xpose.msra.mxu0 %v705
  %771 = vmatprep.subr.mxu0 0.0
  %772 = vmatpush1.xpose.msra.mxu0 %v707
  %773 = vmatprep.subr.mxu0 0.0
  %774 = vmatpush1.xpose.msra.mxu0 %v709
  %775 = vmatprep.subr.mxu0 0.0
  %776 = vmatpush1.xpose.msra.mxu0 %v711
  %777 = vmatprep.subr.mxu0 0.0
  %778 = vmatpush1.xpose.msra.mxu0 %v713
  %779 = vmatprep.subr.mxu0 0.0
  %780 = vmatpush1.xpose.msra.mxu0 %v715
  %781 = vmatprep.subr.mxu0 0.0
  %782 = vmatpush1.xpose.msra.mxu0 %v717
  %783 = vmatprep.subr.mxu0 0.0
  %784 = vmatpush1.xpose.msra.mxu0 %v719
  %785 = vmatprep.subr.mxu0 0.0
  %786 = vmatpush1.xpose.msra.mxu0 %v721
  %787 = vmatprep.subr.mxu0 0.0
  %788 = vmatpush1.xpose.msra.mxu0 %v723
  %789 = vmatprep.subr.mxu0 0.0
  %790 = vmatpush1.xpose.msra.mxu0 %v725
  %791 = vmatprep.subr.mxu0 0.0
  %792 = vmatpush1.xpose.msra.mxu0 %v727
  %793 = vmatprep.subr.mxu0 0.0
  %794 = vmatpush1.xpose.msra.mxu0 %v729
  %795 = vmatprep.subr.mxu0 0.0
  %796 = vmatpush1.xpose.msra.mxu0 %v731
  %797 = vmatprep.subr.mxu0 0.0
  %798 = vmatpush1.xpose.msra.mxu0 %v733
  %799 = vmatprep.subr.mxu0 0.0
  %800 = vmatpush1.xpose.msra.mxu0 %v735
  %801 = vmatprep.subr.mxu0 0.0
  %802 = vmatpush1.xpose.msra.mxu0 %v737
  %803 = vmatprep.subr.mxu0 0.0
  %804 = vmatpush1.xpose.msra.mxu0 %v739
  %805 = vmatprep.subr.mxu0 0.0
  %806 = vmatpush1.xpose.msra.mxu0 %v741
  %807 = vmatprep.subr.mxu0 0.0
  %808 = vmatpush1.xpose.msra.mxu0 %v743
  %809 = vmatprep.subr.mxu0 0.0
  %810 = vmatpush1.xpose.msra.mxu0 %v745
  %811 = vmatprep.subr.mxu0 0.0
  %812 = vmatpush1.xpose.msra.mxu0 %v747
  %813 = vmatprep.subr.mxu0 0.0
  %814 = vmatpush1.xpose.msra.mxu0 %v749
  %815 = vmatprep.subr.mxu0 0.0
  %816 = vmatpush1.xpose.msra.mxu0 %v751
  %817 = vmatprep.subr.mxu0 0.0
  %818 = vmatpush1.xpose.msra.mxu0 %v753
  %819 = vmatprep.subr.mxu0 0.0
  %820 = vmatpush1.xpose.msra.mxu0 %v755
  %821 = vmatprep.subr.mxu0 0.0
  %822 = vmatpush1.xpose.msra.mxu0 %v757
  %823 = vmatprep.subr.mxu0 0.0
  %824 = vmatpush1.xpose.msra.mxu0 %v759
  %825 = vmatprep.subr.mxu0 0.0
  %826 = vmatpush1.xpose.msra.mxu0 %v761
  %827 = vmatprep.subr.mxu0 0.0
  %828 = vmatpush1.xpose.msra.mxu0 %v763
  %829 = vmatprep.subr.mxu0 0.0
  %830 = vmatpush1.xpose.msra.mxu0 %v765
  %831 = vmatprep.subr.mxu0 0.0
  %832 = vmatpush1.xpose.msra.mxu0 %v767
  %833 = vmatprep.mubr.f32.mxu0 0.0
  %834 = vmatmul.mubr.f32.gmra.mrb[0].mxu0 %v682
  %v835 = vpop.f32.mrb[0].mxu0
  %v836 = vadd.f32 0.0, %v835
  %v837 = vpop.f32.mrb[0].mxu0
  %v838 = vadd.f32 0.0, %v837
  %839 = vmatprep.mubr.f32.mxu0 0.0
  %840 = vmatmul.mubr.f32.gmra.mrb[0].mxu0 %v685
  %v841 = vpop.f32.mrb[0].mxu0
  %v842 = vadd.f32 0.0, %v841
  %v843 = vpop.f32.mrb[0].mxu0
  %v844 = vadd.f32 0.0, %v843
  %845 = vmatprep.mubr.f32.mxu0 0.0
  %846 = vmatmul.mubr.f32.gmra.mrb[0].mxu0 %v688
  %v847 = vpop.f32.mrb[0].mxu0
  %v848 = vadd.f32 0.0, %v847
  %v849 = vpop.f32.mrb[0].mxu0
  %v850 = vadd.f32 0.0, %v849
  %851 = vmatprep.mubr.f32.mxu0 0.0
  %852 = vmatmul.mubr.f32.gmra.mrb[0].mxu0 %v691
  %v853 = vpop.f32.mrb[0].mxu0
  %v854 = vadd.f32 0.0, %v853
  %v855 = vpop.f32.mrb[0].mxu0
  %v856 = vadd.f32 0.0, %v855
  %857 = vmatprep.mubr.f32.mxu0 0.0
  %858 = vmatmul.mubr.f32.gmra.mrb[0].mxu0 %v694
  %v859 = vpop.f32.mrb[0].mxu0
  %v860 = vadd.f32 0.0, %v859
  %v861 = vpop.f32.mrb[0].mxu0
  %v862 = vadd.f32 0.0, %v861
  %863 = vmatprep.mubr.f32.mxu0 0.0
  %864 = vmatmul.mubr.f32.gmra.mrb[0].mxu0 %v697
  %v865 = vpop.f32.mrb[0].mxu0
  %v866 = vadd.f32 0.0, %v865
  %v867 = vpop.f32.mrb[0].mxu0
  %v868 = vadd.f32 0.0, %v867
  %869 = vmatprep.mubr.f32.mxu0 0.0
  %870 = vmatmul.mubr.f32.gmra.mrb[0].mxu0 %v700
  %v871 = vpop.f32.mrb[0].mxu0
  %v872 = vadd.f32 0.0, %v871
  %v873 = vpop.f32.mrb[0].mxu0
  %v874 = vadd.f32 0.0, %v873
  %875 = vmatprep.mubr.f32.mxu0 0.0
  %876 = vmatmul.mubr.f32.gmra.mrb[0].mxu0 %v703
  %v877 = vpop.f32.mrb[0].mxu0
  %v878 = vadd.f32 0.0, %v877
  %v879 = vpop.f32.mrb[0].mxu0
  %v880 = vadd.f32 0.0, %v879
  %881 = vdwg.mxu0
  %vm882 = vcmask 523264
  %v883 = vsel %vm882, %v836, -inf
  %884 = vmax.xlane.f32.xlu0 %v883
  %v885 = vpop.xlane.xlu0 %884
  %v886 = vsel %vm882, %v842, -inf
  %887 = vmax.xlane.f32.xlu0 %v886
  %v888 = vpop.xlane.xlu0 %887
  %v889 = vsel %vm882, %v848, -inf
  %890 = vmax.xlane.f32.xlu0 %v889
  %v891 = vpop.xlane.xlu0 %890
  %v892 = vsel %vm882, %v854, -inf
  %893 = vmax.xlane.f32.xlu0 %v892
  %v894 = vpop.xlane.xlu0 %893
  %v895 = vsel %vm882, %v860, -inf
  %896 = vmax.xlane.f32.xlu0 %v895
  %v897 = vpop.xlane.xlu0 %896
  %v898 = vsel %vm882, %v866, -inf
  %899 = vmax.xlane.f32.xlu0 %v898
  %v900 = vpop.xlane.xlu0 %899
  %v901 = vsel %vm882, %v872, -inf
  %902 = vmax.xlane.f32.xlu0 %v901
  %v903 = vpop.xlane.xlu0 %902
  %v904 = vsel %vm882, %v878, -inf
  %905 = vmax.xlane.f32.xlu0 %v904
  %v906 = vpop.xlane.xlu0 %905
  %v907 = vsub.f32 %v836, %v885
  %v908 = vsub.f32 %v842, %v888
  %v909 = vsub.f32 %v848, %v891
  %v910 = vsub.f32 %v854, %v894
  %v911 = vsub.f32 %v860, %v897
  %v912 = vsub.f32 %v866, %v900
  %v913 = vsub.f32 %v872, %v903
  %v914 = vsub.f32 %v878, %v906
  %v915 = vmul.f32 %v907, 1.442695
  %v916 = vpow.pop %v915
  %v917 = vmul.f32 %v908, 1.442695
  %v918 = vpow.pop %v917
  %v919 = vmul.f32 %v909, 1.442695
  %v920 = vpow.pop %v919
  %v921 = vmul.f32 %v910, 1.442695
  %v922 = vpow.pop %v921
  %v923 = vmul.f32 %v911, 1.442695
  %v924 = vpow.pop %v923
  %v925 = vmul.f32 %v912, 1.442695
  %v926 = vpow.pop %v925
  %v927 = vmul.f32 %v913, 1.442695
  %v928 = vpow.pop %v927
  %v929 = vmul.f32 %v914, 1.442695
  %v930 = vpow.pop %v929
  %v931 = vsel %vm882, %v916, 0.0
  %932 = vadd.xlane.f32.xlu0 %v931
  %v933 = vpop.xlane.xlu0 %932
  %v934 = vsel %vm882, %v918, 0.0
  %935 = vadd.xlane.f32.xlu0 %v934
  %v936 = vpop.xlane.xlu0 %935
  %v937 = vsel %vm882, %v920, 0.0
  %938 = vadd.xlane.f32.xlu0 %v937
  %v939 = vpop.xlane.xlu0 %938
  %v940 = vsel %vm882, %v922, 0.0
  %941 = vadd.xlane.f32.xlu0 %v940
  %v942 = vpop.xlane.xlu0 %941
  %v943 = vsel %vm882, %v924, 0.0
  %944 = vadd.xlane.f32.xlu0 %v943
  %v945 = vpop.xlane.xlu0 %944
  %v946 = vsel %vm882, %v926, 0.0
  %947 = vadd.xlane.f32.xlu0 %v946
  %v948 = vpop.xlane.xlu0 %947
  %v949 = vsel %vm882, %v928, 0.0
  %950 = vadd.xlane.f32.xlu0 %v949
  %v951 = vpop.xlane.xlu0 %950
  %v952 = vsel %vm882, %v930, 0.0
  %953 = vadd.xlane.f32.xlu0 %v952
  %v954 = vpop.xlane.xlu0 %953
  %v955 = vrcp.pop %v933
  %v956 = vrcp.pop %v936
  %v957 = vrcp.pop %v939
  %v958 = vrcp.pop %v942
  %v959 = vrcp.pop %v945
  %v960 = vrcp.pop %v948
  %v961 = vrcp.pop %v951
  %v962 = vrcp.pop %v954
  %v963 = vmul.f32 %v916, %v955
  %v964 = vmul.f32 %v918, %v956
  %v965 = vmul.f32 %v920, %v957
  %v966 = vmul.f32 %v922, %v958
  %v967 = vmul.f32 %v924, %v959
  %v968 = vmul.f32 %v926, %v960
  %v969 = vmul.f32 %v928, %v961
  %v970 = vmul.f32 %v930, %v962
  %vm971 = vcmask 1048064
  %v972 = vsel %vm971, %v836, -inf
  %973 = vmax.xlane.f32.xlu0 %v972
  %v974 = vpop.xlane.xlu0 %973
  %v975 = vsel %vm971, %v842, -inf
  %976 = vmax.xlane.f32.xlu0 %v975
  %v977 = vpop.xlane.xlu0 %976
  %v978 = vsel %vm971, %v848, -inf
  %979 = vmax.xlane.f32.xlu0 %v978
  %v980 = vpop.xlane.xlu0 %979
  %v981 = vsel %vm971, %v854, -inf
  %982 = vmax.xlane.f32.xlu0 %v981
  %v983 = vpop.xlane.xlu0 %982
  %v984 = vsel %vm971, %v860, -inf
  %985 = vmax.xlane.f32.xlu0 %v984
  %v986 = vpop.xlane.xlu0 %985
  %v987 = vsel %vm971, %v866, -inf
  %988 = vmax.xlane.f32.xlu0 %v987
  %v989 = vpop.xlane.xlu0 %988
  %v990 = vsel %vm971, %v872, -inf
  %991 = vmax.xlane.f32.xlu0 %v990
  %v992 = vpop.xlane.xlu0 %991
  %v993 = vsel %vm971, %v878, -inf
  %994 = vmax.xlane.f32.xlu0 %v993
  %v995 = vpop.xlane.xlu0 %994
  %v996 = vsub.f32 %v836, %v974
  %v997 = vsub.f32 %v842, %v977
  %v998 = vsub.f32 %v848, %v980
  %v999 = vsub.f32 %v854, %v983
  %v1000 = vsub.f32 %v860, %v986
  %v1001 = vsub.f32 %v866, %v989
  %v1002 = vsub.f32 %v872, %v992
  %v1003 = vsub.f32 %v878, %v995
  %v1004 = vmul.f32 %v996, 1.442695
  %v1005 = vpow.pop %v1004
  %v1006 = vmul.f32 %v997, 1.442695
  %v1007 = vpow.pop %v1006
  %v1008 = vmul.f32 %v998, 1.442695
  %v1009 = vpow.pop %v1008
  %v1010 = vmul.f32 %v999, 1.442695
  %v1011 = vpow.pop %v1010
  %v1012 = vmul.f32 %v1000, 1.442695
  %v1013 = vpow.pop %v1012
  %v1014 = vmul.f32 %v1001, 1.442695
  %v1015 = vpow.pop %v1014
  %v1016 = vmul.f32 %v1002, 1.442695
  %v1017 = vpow.pop %v1016
  %v1018 = vmul.f32 %v1003, 1.442695
  %v1019 = vpow.pop %v1018
  %1028 = vrot.lane.b32.xlu0 %v1005, 64
  %v1029 = vpop.permute.xlu0 %1028
  %1030 = vrot.lane.b32.xlu0 %v1007, 64
  %v1031 = vpop.permute.xlu0 %1030
  %1032 = vrot.lane.b32.xlu0 %v1009, 64
  %v1033 = vpop.permute.xlu0 %1032
  %1034 = vrot.lane.b32.xlu0 %v1011, 64
  %v1035 = vpop.permute.xlu0 %1034
  %1036 = vrot.lane.b32.xlu0 %v1013, 64
  %v1037 = vpop.permute.xlu0 %1036
  %1038 = vrot.lane.b32.xlu0 %v1015, 64
  %v1039 = vpop.permute.xlu0 %1038
  %1040 = vrot.lane.b32.xlu0 %v1017, 64
  %v1041 = vpop.permute.xlu0 %1040
  %1042 = vrot.lane.b32.xlu0 %v1019, 64
  %v1043 = vpop.permute.xlu0 %1042
  %v1052 = vsel %vm882, %v1029, 0.0
  %1053 = vadd.xlane.f32.xlu0 %v1052
  %v1054 = vpop.xlane.xlu0 %1053
  %v1055 = vsel %vm882, %v1031, 0.0
  %1056 = vadd.xlane.f32.xlu0 %v1055
  %v1057 = vpop.xlane.xlu0 %1056
  %v1058 = vsel %vm882, %v1033, 0.0
  %1059 = vadd.xlane.f32.xlu0 %v1058
  %v1060 = vpop.xlane.xlu0 %1059
  %v1061 = vsel %vm882, %v1035, 0.0
  %1062 = vadd.xlane.f32.xlu0 %v1061
  %v1063 = vpop.xlane.xlu0 %1062
  %v1064 = vsel %vm882, %v1037, 0.0
  %1065 = vadd.xlane.f32.xlu0 %v1064
  %v1066 = vpop.xlane.xlu0 %1065
  %v1067 = vsel %vm882, %v1039, 0.0
  %1068 = vadd.xlane.f32.xlu0 %v1067
  %v1069 = vpop.xlane.xlu0 %1068
  %v1070 = vsel %vm882, %v1041, 0.0
  %1071 = vadd.xlane.f32.xlu0 %v1070
  %v1072 = vpop.xlane.xlu0 %1071
  %v1073 = vsel %vm882, %v1043, 0.0
  %1074 = vadd.xlane.f32.xlu0 %v1073
  %v1075 = vpop.xlane.xlu0 %1074
  %v1076 = vrcp.pop %v1054
  %v1077 = vrcp.pop %v1057
  %v1078 = vrcp.pop %v1060
  %v1079 = vrcp.pop %v1063
  %v1080 = vrcp.pop %v1066
  %v1081 = vrcp.pop %v1069
  %v1082 = vrcp.pop %v1072
  %v1083 = vrcp.pop %v1075
  %v1084 = vmul.f32 %v1005, %v1076
  %v1085 = vmul.f32 %v1007, %v1077
  %v1086 = vmul.f32 %v1009, %v1078
  %v1087 = vmul.f32 %v1011, %v1079
  %v1088 = vmul.f32 %v1013, %v1080
  %v1089 = vmul.f32 %v1015, %v1081
  %v1090 = vmul.f32 %v1017, %v1082
  %v1091 = vmul.f32 %v1019, %v1083
  %v1092 = vsel %vm882, %v838, -inf
  %1093 = vmax.xlane.f32.xlu0 %v1092
  %v1094 = vpop.xlane.xlu0 %1093
  %v1095 = vsel %vm882, %v844, -inf
  %1096 = vmax.xlane.f32.xlu0 %v1095
  %v1097 = vpop.xlane.xlu0 %1096
  %v1098 = vsel %vm882, %v850, -inf
  %1099 = vmax.xlane.f32.xlu0 %v1098
  %v1100 = vpop.xlane.xlu0 %1099
  %v1101 = vsel %vm882, %v856, -inf
  %1102 = vmax.xlane.f32.xlu0 %v1101
  %v1103 = vpop.xlane.xlu0 %1102
  %v1104 = vsel %vm882, %v862, -inf
  %1105 = vmax.xlane.f32.xlu0 %v1104
  %v1106 = vpop.xlane.xlu0 %1105
  %v1107 = vsel %vm882, %v868, -inf
  %1108 = vmax.xlane.f32.xlu0 %v1107
  %v1109 = vpop.xlane.xlu0 %1108
  %v1110 = vsel %vm882, %v874, -inf
  %1111 = vmax.xlane.f32.xlu0 %v1110
  %v1112 = vpop.xlane.xlu0 %1111
  %v1113 = vsel %vm882, %v880, -inf
  %1114 = vmax.xlane.f32.xlu0 %v1113
  %v1115 = vpop.xlane.xlu0 %1114
  %v1116 = vsub.f32 %v838, %v1094
  %v1117 = vsub.f32 %v844, %v1097
  %v1118 = vsub.f32 %v850, %v1100
  %v1119 = vsub.f32 %v856, %v1103
  %v1120 = vsub.f32 %v862, %v1106
  %v1121 = vsub.f32 %v868, %v1109
  %v1122 = vsub.f32 %v874, %v1112
  %v1123 = vsub.f32 %v880, %v1115
  %v1124 = vmul.f32 %v1116, 1.442695
  %v1125 = vpow.pop %v1124
  %v1126 = vmul.f32 %v1117, 1.442695
  %v1127 = vpow.pop %v1126
  %v1128 = vmul.f32 %v1118, 1.442695
  %v1129 = vpow.pop %v1128
  %v1130 = vmul.f32 %v1119, 1.442695
  %v1131 = vpow.pop %v1130
  %v1132 = vmul.f32 %v1120, 1.442695
  %v1133 = vpow.pop %v1132
  %v1134 = vmul.f32 %v1121, 1.442695
  %v1135 = vpow.pop %v1134
  %v1136 = vmul.f32 %v1122, 1.442695
  %v1137 = vpow.pop %v1136
  %v1138 = vmul.f32 %v1123, 1.442695
  %v1139 = vpow.pop %v1138
  %v1140 = vsel %vm882, %v1125, 0.0
  %1141 = vadd.xlane.f32.xlu0 %v1140
  %v1142 = vpop.xlane.xlu0 %1141
  %v1143 = vsel %vm882, %v1127, 0.0
  %1144 = vadd.xlane.f32.xlu0 %v1143
  %v1145 = vpop.xlane.xlu0 %1144
  %v1146 = vsel %vm882, %v1129, 0.0
  %1147 = vadd.xlane.f32.xlu0 %v1146
  %v1148 = vpop.xlane.xlu0 %1147
  %v1149 = vsel %vm882, %v1131, 0.0
  %1150 = vadd.xlane.f32.xlu0 %v1149
  %v1151 = vpop.xlane.xlu0 %1150
  %v1152 = vsel %vm882, %v1133, 0.0
  %1153 = vadd.xlane.f32.xlu0 %v1152
  %v1154 = vpop.xlane.xlu0 %1153
  %v1155 = vsel %vm882, %v1135, 0.0
  %1156 = vadd.xlane.f32.xlu0 %v1155
  %v1157 = vpop.xlane.xlu0 %1156
  %v1158 = vsel %vm882, %v1137, 0.0
  %1159 = vadd.xlane.f32.xlu0 %v1158
  %v1160 = vpop.xlane.xlu0 %1159
  %v1161 = vsel %vm882, %v1139, 0.0
  %1162 = vadd.xlane.f32.xlu0 %v1161
  %v1163 = vpop.xlane.xlu0 %1162
  %v1164 = vrcp.pop %v1142
  %v1165 = vrcp.pop %v1145
  %v1166 = vrcp.pop %v1148
  %v1167 = vrcp.pop %v1151
  %v1168 = vrcp.pop %v1154
  %v1169 = vrcp.pop %v1157
  %v1170 = vrcp.pop %v1160
  %v1171 = vrcp.pop %v1163
  %v1172 = vmul.f32 %v1125, %v1164
  %v1173 = vmul.f32 %v1127, %v1165
  %v1174 = vmul.f32 %v1129, %v1166
  %v1175 = vmul.f32 %v1131, %v1167
  %v1176 = vmul.f32 %v1133, %v1168
  %v1177 = vmul.f32 %v1135, %v1169
  %v1178 = vmul.f32 %v1137, %v1170
  %v1179 = vmul.f32 %v1139, %v1171
  %v1180 = vsel %vm971, %v838, -inf
  %1181 = vmax.xlane.f32.xlu0 %v1180
  %v1182 = vpop.xlane.xlu0 %1181
  %v1183 = vsel %vm971, %v844, -inf
  %1184 = vmax.xlane.f32.xlu0 %v1183
  %v1185 = vpop.xlane.xlu0 %1184
  %v1186 = vsel %vm971, %v850, -inf
  %1187 = vmax.xlane.f32.xlu0 %v1186
  %v1188 = vpop.xlane.xlu0 %1187
  %v1189 = vsel %vm971, %v856, -inf
  %1190 = vmax.xlane.f32.xlu0 %v1189
  %v1191 = vpop.xlane.xlu0 %1190
  %v1192 = vsel %vm971, %v862, -inf
  %1193 = vmax.xlane.f32.xlu0 %v1192
  %v1194 = vpop.xlane.xlu0 %1193
  %v1195 = vsel %vm971, %v868, -inf
  %1196 = vmax.xlane.f32.xlu0 %v1195
  %v1197 = vpop.xlane.xlu0 %1196
  %v1198 = vsel %vm971, %v874, -inf
  %1199 = vmax.xlane.f32.xlu0 %v1198
  %v1200 = vpop.xlane.xlu0 %1199
  %v1201 = vsel %vm971, %v880, -inf
  %1202 = vmax.xlane.f32.xlu0 %v1201
  %v1203 = vpop.xlane.xlu0 %1202
  %v1204 = vsub.f32 %v838, %v1182
  %v1205 = vsub.f32 %v844, %v1185
  %v1206 = vsub.f32 %v850, %v1188
  %v1207 = vsub.f32 %v856, %v1191
  %v1208 = vsub.f32 %v862, %v1194
  %v1209 = vsub.f32 %v868, %v1197
  %v1210 = vsub.f32 %v874, %v1200
  %v1211 = vsub.f32 %v880, %v1203
  %v1212 = vmul.f32 %v1204, 1.442695
  %v1213 = vpow.pop %v1212
  %v1214 = vmul.f32 %v1205, 1.442695
  %v1215 = vpow.pop %v1214
  %v1216 = vmul.f32 %v1206, 1.442695
  %v1217 = vpow.pop %v1216
  %v1218 = vmul.f32 %v1207, 1.442695
  %v1219 = vpow.pop %v1218
  %v1220 = vmul.f32 %v1208, 1.442695
  %v1221 = vpow.pop %v1220
  %v1222 = vmul.f32 %v1209, 1.442695
  %v1223 = vpow.pop %v1222
  %v1224 = vmul.f32 %v1210, 1.442695
  %v1225 = vpow.pop %v1224
  %v1226 = vmul.f32 %v1211, 1.442695
  %v1227 = vpow.pop %v1226
  %1236 = vrot.lane.b32.xlu0 %v1213, 64
  %v1237 = vpop.permute.xlu0 %1236
  %1238 = vrot.lane.b32.xlu0 %v1215, 64
  %v1239 = vpop.permute.xlu0 %1238
  %1240 = vrot.lane.b32.xlu0 %v1217, 64
  %v1241 = vpop.permute.xlu0 %1240
  %1242 = vrot.lane.b32.xlu0 %v1219, 64
  %v1243 = vpop.permute.xlu0 %1242
  %1244 = vrot.lane.b32.xlu0 %v1221, 64
  %v1245 = vpop.permute.xlu0 %1244
  %1246 = vrot.lane.b32.xlu0 %v1223, 64
  %v1247 = vpop.permute.xlu0 %1246
  %1248 = vrot.lane.b32.xlu0 %v1225, 64
  %v1249 = vpop.permute.xlu0 %1248
  %1250 = vrot.lane.b32.xlu0 %v1227, 64
  %v1251 = vpop.permute.xlu0 %1250
  %v1260 = vsel %vm882, %v1237, 0.0
  %1261 = vadd.xlane.f32.xlu0 %v1260
  %v1262 = vpop.xlane.xlu0 %1261
  %v1263 = vsel %vm882, %v1239, 0.0
  %1264 = vadd.xlane.f32.xlu0 %v1263
  %v1265 = vpop.xlane.xlu0 %1264
  %v1266 = vsel %vm882, %v1241, 0.0
  %1267 = vadd.xlane.f32.xlu0 %v1266
  %v1268 = vpop.xlane.xlu0 %1267
  %v1269 = vsel %vm882, %v1243, 0.0
  %1270 = vadd.xlane.f32.xlu0 %v1269
  %v1271 = vpop.xlane.xlu0 %1270
  %v1272 = vsel %vm882, %v1245, 0.0
  %1273 = vadd.xlane.f32.xlu0 %v1272
  %v1274 = vpop.xlane.xlu0 %1273
  %v1275 = vsel %vm882, %v1247, 0.0
  %1276 = vadd.xlane.f32.xlu0 %v1275
  %v1277 = vpop.xlane.xlu0 %1276
  %v1278 = vsel %vm882, %v1249, 0.0
  %1279 = vadd.xlane.f32.xlu0 %v1278
  %v1280 = vpop.xlane.xlu0 %1279
  %v1281 = vsel %vm882, %v1251, 0.0
  %1282 = vadd.xlane.f32.xlu0 %v1281
  %v1283 = vpop.xlane.xlu0 %1282
  %v1284 = vrcp.pop %v1262
  %v1285 = vrcp.pop %v1265
  %v1286 = vrcp.pop %v1268
  %v1287 = vrcp.pop %v1271
  %v1288 = vrcp.pop %v1274
  %v1289 = vrcp.pop %v1277
  %v1290 = vrcp.pop %v1280
  %v1291 = vrcp.pop %v1283
  %v1292 = vmul.f32 %v1213, %v1284
  %v1293 = vmul.f32 %v1215, %v1285
  %v1294 = vmul.f32 %v1217, %v1286
  %v1295 = vmul.f32 %v1219, %v1287
  %v1296 = vmul.f32 %v1221, %v1288
  %v1297 = vmul.f32 %v1223, %v1289
  %v1298 = vmul.f32 %v1225, %v1290
  %v1299 = vmul.f32 %v1227, %v1291
  %v1300 = vsel %vm882, %v963, %v1084
  %v1301 = vsel %vm882, %v964, %v1085
  %v1302 = vsel %vm882, %v965, %v1086
  %v1303 = vsel %vm882, %v966, %v1087
  %v1304 = vsel %vm882, %v967, %v1088
  %v1305 = vsel %vm882, %v968, %v1089
  %v1306 = vsel %vm882, %v969, %v1090
  %v1307 = vsel %vm882, %v970, %v1091
  %v1308 = vsel %vm882, %v1172, %v1292
  %v1309 = vsel %vm882, %v1173, %v1293
  %v1310 = vsel %vm882, %v1174, %v1294
  %v1311 = vsel %vm882, %v1175, %v1295
  %v1312 = vsel %vm882, %v1176, %v1296
  %v1313 = vsel %vm882, %v1177, %v1297
  %v1314 = vsel %vm882, %v1178, %v1298
  %v1315 = vsel %vm882, %v1179, %v1299
  %1348 = vrot.lane.b32.xlu0 %v553, 64
  %v1349 = vpop.permute.xlu0 %1348
  %1350 = vrot.lane.b32.xlu0 %v554, 64
  %v1351 = vpop.permute.xlu0 %1350
  %1352 = vrot.lane.b32.xlu0 %v555, 64
  %v1353 = vpop.permute.xlu0 %1352
  %1354 = vrot.lane.b32.xlu0 %v556, 64
  %v1355 = vpop.permute.xlu0 %1354
  %1356 = vrot.lane.b32.xlu0 %v557, 64
  %v1357 = vpop.permute.xlu0 %1356
  %1358 = vrot.lane.b32.xlu0 %v558, 64
  %v1359 = vpop.permute.xlu0 %1358
  %1360 = vrot.lane.b32.xlu0 %v559, 64
  %v1361 = vpop.permute.xlu0 %1360
  %1362 = vrot.lane.b32.xlu0 %v560, 64
  %v1363 = vpop.permute.xlu0 %1362
  %1364 = vrot.lane.b32.xlu0 %v561, 64
  %v1365 = vpop.permute.xlu0 %1364
  %1366 = vrot.lane.b32.xlu0 %v562, 64
  %v1367 = vpop.permute.xlu0 %1366
  %1368 = vrot.lane.b32.xlu0 %v563, 64
  %v1369 = vpop.permute.xlu0 %1368
  %1370 = vrot.lane.b32.xlu0 %v564, 64
  %v1371 = vpop.permute.xlu0 %1370
  %1372 = vrot.lane.b32.xlu0 %v565, 64
  %v1373 = vpop.permute.xlu0 %1372
  %1374 = vrot.lane.b32.xlu0 %v566, 64
  %v1375 = vpop.permute.xlu0 %1374
  %1376 = vrot.lane.b32.xlu0 %v567, 64
  %v1377 = vpop.permute.xlu0 %1376
  %1378 = vrot.lane.b32.xlu0 %v568, 64
  %v1379 = vpop.permute.xlu0 %1378
  %1380 = vrot.lane.b32.xlu0 %v569, 64
  %v1381 = vpop.permute.xlu0 %1380
  %1382 = vrot.lane.b32.xlu0 %v570, 64
  %v1383 = vpop.permute.xlu0 %1382
  %1384 = vrot.lane.b32.xlu0 %v571, 64
  %v1385 = vpop.permute.xlu0 %1384
  %1386 = vrot.lane.b32.xlu0 %v572, 64
  %v1387 = vpop.permute.xlu0 %1386
  %1388 = vrot.lane.b32.xlu0 %v573, 64
  %v1389 = vpop.permute.xlu0 %1388
  %1390 = vrot.lane.b32.xlu0 %v574, 64
  %v1391 = vpop.permute.xlu0 %1390
  %1392 = vrot.lane.b32.xlu0 %v575, 64
  %v1393 = vpop.permute.xlu0 %1392
  %1394 = vrot.lane.b32.xlu0 %v576, 64
  %v1395 = vpop.permute.xlu0 %1394
  %1396 = vrot.lane.b32.xlu0 %v577, 64
  %v1397 = vpop.permute.xlu0 %1396
  %1398 = vrot.lane.b32.xlu0 %v578, 64
  %v1399 = vpop.permute.xlu0 %1398
  %1400 = vrot.lane.b32.xlu0 %v579, 64
  %v1401 = vpop.permute.xlu0 %1400
  %1402 = vrot.lane.b32.xlu0 %v580, 64
  %v1403 = vpop.permute.xlu0 %1402
  %1404 = vrot.lane.b32.xlu0 %v581, 64
  %v1405 = vpop.permute.xlu0 %1404
  %1406 = vrot.lane.b32.xlu0 %v582, 64
  %v1407 = vpop.permute.xlu0 %1406
  %1408 = vrot.lane.b32.xlu0 %v583, 64
  %v1409 = vpop.permute.xlu0 %1408
  %1410 = vrot.lane.b32.xlu0 %v584, 64
  %v1411 = vpop.permute.xlu0 %1410
  %1444 = vmatprep.subr.mxu0 0.0
  %1445 = vmatpush1.msra.mxu0 %v1349
  %1446 = vmatprep.subr.mxu0 0.0
  %1447 = vmatpush1.msra.mxu0 %v1351
  %1448 = vmatprep.subr.mxu0 0.0
  %1449 = vmatpush1.msra.mxu0 %v1353
  %1450 = vmatprep.subr.mxu0 0.0
  %1451 = vmatpush1.msra.mxu0 %v1355
  %1452 = vmatprep.subr.mxu0 0.0
  %1453 = vmatpush1.msra.mxu0 %v1357
  %1454 = vmatprep.subr.mxu0 0.0
  %1455 = vmatpush1.msra.mxu0 %v1359
  %1456 = vmatprep.subr.mxu0 0.0
  %1457 = vmatpush1.msra.mxu0 %v1361
  %1458 = vmatprep.subr.mxu0 0.0
  %1459 = vmatpush1.msra.mxu0 %v1363
  %1460 = vmatprep.subr.mxu0 0.0
  %1461 = vmatpush1.msra.mxu0 %v1365
  %1462 = vmatprep.subr.mxu0 0.0
  %1463 = vmatpush1.msra.mxu0 %v1367
  %1464 = vmatprep.subr.mxu0 0.0
  %1465 = vmatpush1.msra.mxu0 %v1369
  %1466 = vmatprep.subr.mxu0 0.0
  %1467 = vmatpush1.msra.mxu0 %v1371
  %1468 = vmatprep.subr.mxu0 0.0
  %1469 = vmatpush1.msra.mxu0 %v1373
  %1470 = vmatprep.subr.mxu0 0.0
  %1471 = vmatpush1.msra.mxu0 %v1375
  %1472 = vmatprep.subr.mxu0 0.0
  %1473 = vmatpush1.msra.mxu0 %v1377
  %1474 = vmatprep.subr.mxu0 0.0
  %1475 = vmatpush1.msra.mxu0 %v1379
  %1476 = vmatprep.subr.mxu0 0.0
  %1477 = vmatpush1.msra.mxu0 %v1381
  %1478 = vmatprep.subr.mxu0 0.0
  %1479 = vmatpush1.msra.mxu0 %v1383
  %1480 = vmatprep.subr.mxu0 0.0
  %1481 = vmatpush1.msra.mxu0 %v1385
  %1482 = vmatprep.subr.mxu0 0.0
  %1483 = vmatpush1.msra.mxu0 %v1387
  %1484 = vmatprep.subr.mxu0 0.0
  %1485 = vmatpush1.msra.mxu0 %v1389
  %1486 = vmatprep.subr.mxu0 0.0
  %1487 = vmatpush1.msra.mxu0 %v1391
  %1488 = vmatprep.subr.mxu0 0.0
  %1489 = vmatpush1.msra.mxu0 %v1393
  %1490 = vmatprep.subr.mxu0 0.0
  %1491 = vmatpush1.msra.mxu0 %v1395
  %1492 = vmatprep.subr.mxu0 0.0
  %1493 = vmatpush1.msra.mxu0 %v1397
  %1494 = vmatprep.subr.mxu0 0.0
  %1495 = vmatpush1.msra.mxu0 %v1399
  %1496 = vmatprep.subr.mxu0 0.0
  %1497 = vmatpush1.msra.mxu0 %v1401
  %1498 = vmatprep.subr.mxu0 0.0
  %1499 = vmatpush1.msra.mxu0 %v1403
  %1500 = vmatprep.subr.mxu0 0.0
  %1501 = vmatpush1.msra.mxu0 %v1405
  %1502 = vmatprep.subr.mxu0 0.0
  %1503 = vmatpush1.msra.mxu0 %v1407
  %1504 = vmatprep.subr.mxu0 0.0
  %1505 = vmatpush1.msra.mxu0 %v1409
  %1506 = vmatprep.subr.mxu0 0.0
  %1507 = vmatpush1.msra.mxu0 %v1411
  %1508 = vmatprep.mubr.f32.mxu0 %v1308
  %1509 = vmatmul.mubr.f32.gmra.mrb[0].mxu0 %v1300
  %v1510 = vpop.f32.mrb[0].mxu0
  %v1511 = vadd.f32 0.0, %v1510
  %v1512 = vpop.f32.mrb[0].mxu0
  %1513 = vmatprep.mubr.f32.mxu0 %v1309
  %1514 = vmatmul.mubr.f32.gmra.mrb[0].mxu0 %v1301
  %v1515 = vpop.f32.mrb[0].mxu0
  %v1516 = vadd.f32 0.0, %v1515
  %v1517 = vpop.f32.mrb[0].mxu0
  %1518 = vmatprep.mubr.f32.mxu0 %v1310
  %1519 = vmatmul.mubr.f32.gmra.mrb[0].mxu0 %v1302
  %v1520 = vpop.f32.mrb[0].mxu0
  %v1521 = vadd.f32 0.0, %v1520
  %v1522 = vpop.f32.mrb[0].mxu0
  %1523 = vmatprep.mubr.f32.mxu0 %v1311
  %1524 = vmatmul.mubr.f32.gmra.mrb[0].mxu0 %v1303
  %v1525 = vpop.f32.mrb[0].mxu0
  %v1526 = vadd.f32 0.0, %v1525
  %v1527 = vpop.f32.mrb[0].mxu0
  %1528 = vmatprep.mubr.f32.mxu0 %v1312
  %1529 = vmatmul.mubr.f32.gmra.mrb[0].mxu0 %v1304
  %v1530 = vpop.f32.mrb[0].mxu0
  %v1531 = vadd.f32 0.0, %v1530
  %v1532 = vpop.f32.mrb[0].mxu0
  %1533 = vmatprep.mubr.f32.mxu0 %v1313
  %1534 = vmatmul.mubr.f32.gmra.mrb[0].mxu0 %v1305
  %v1535 = vpop.f32.mrb[0].mxu0
  %v1536 = vadd.f32 0.0, %v1535
  %v1537 = vpop.f32.mrb[0].mxu0
  %1538 = vmatprep.mubr.f32.mxu0 %v1314
  %1539 = vmatmul.mubr.f32.gmra.mrb[0].mxu0 %v1306
  %v1540 = vpop.f32.mrb[0].mxu0
  %v1541 = vadd.f32 0.0, %v1540
  %v1542 = vpop.f32.mrb[0].mxu0
  %1543 = vmatprep.mubr.f32.mxu0 %v1315
  %1544 = vmatmul.mubr.f32.gmra.mrb[0].mxu0 %v1307
  %v1545 = vpop.f32.mrb[0].mxu0
  %v1546 = vadd.f32 0.0, %v1545
  %v1547 = vpop.f32.mrb[0].mxu0
  %1548 = vdwg.mxu0
  %v1549 = vmul.f32 %v227, %v330
  %v1550 = vmul.f32 %v232, %v332
  %v1551 = vmul.f32 %v237, %v334
  %v1552 = vmul.f32 %v242, %v336
  %v1553 = vmul.f32 %v247, %v338
  %v1554 = vmul.f32 %v252, %v340
  %v1555 = vmul.f32 %v257, %v342
  %v1556 = vmul.f32 %v262, %v344
  %v1557 = vmul.f32 %v227, %v346
  %v1558 = vmul.f32 %v232, %v348
  %v1559 = vmul.f32 %v237, %v350
  %v1560 = vmul.f32 %v242, %v352
  %v1561 = vmul.f32 %v247, %v354
  %v1562 = vmul.f32 %v252, %v356
  %v1563 = vmul.f32 %v257, %v358
  %v1564 = vmul.f32 %v262, %v360
  %v1565 = vmul.f32 %v227, %v362
  %v1566 = vmul.f32 %v232, %v364
  %v1567 = vmul.f32 %v237, %v366
  %v1568 = vmul.f32 %v242, %v368
  %v1569 = vmul.f32 %v247, %v370
  %v1570 = vmul.f32 %v252, %v372
  %v1571 = vmul.f32 %v257, %v374
  %v1572 = vmul.f32 %v262, %v376
  %v1573 = vmul.f32 %v227, %v378
  %v1574 = vmul.f32 %v232, %v380
  %v1575 = vmul.f32 %v237, %v382
  %v1576 = vmul.f32 %v242, %v384
  %v1577 = vmul.f32 %v247, %v386
  %v1578 = vmul.f32 %v252, %v388
  %v1579 = vmul.f32 %v257, %v390
  %v1580 = vmul.f32 %v262, %v392
  %v1581 = vmul.f32 %v227, %v458
  %v1582 = vmul.f32 %v232, %v460
  %v1583 = vmul.f32 %v237, %v462
  %v1584 = vmul.f32 %v242, %v464
  %v1585 = vmul.f32 %v247, %v466
  %v1586 = vmul.f32 %v252, %v468
  %v1587 = vmul.f32 %v257, %v470
  %v1588 = vmul.f32 %v262, %v472
  %v1589 = vmul.f32 %v227, %v474
  %v1590 = vmul.f32 %v232, %v476
  %v1591 = vmul.f32 %v237, %v478
  %v1592 = vmul.f32 %v242, %v480
  %v1593 = vmul.f32 %v247, %v482
  %v1594 = vmul.f32 %v252, %v484
  %v1595 = vmul.f32 %v257, %v486
  %v1596 = vmul.f32 %v262, %v488
  %v1597 = vmul.f32 %v227, %v490
  %v1598 = vmul.f32 %v232, %v492
  %v1599 = vmul.f32 %v237, %v494
  %v1600 = vmul.f32 %v242, %v496
  %v1601 = vmul.f32 %v247, %v498
  %v1602 = vmul.f32 %v252, %v500
  %v1603 = vmul.f32 %v257, %v502
  %v1604 = vmul.f32 %v262, %v504
  %v1605 = vmul.f32 %v227, %v506
  %v1606 = vmul.f32 %v232, %v508
  %v1607 = vmul.f32 %v237, %v510
  %v1608 = vmul.f32 %v242, %v512
  %v1609 = vmul.f32 %v247, %v514
  %v1610 = vmul.f32 %v252, %v516
  %v1611 = vmul.f32 %v257, %v518
  %v1612 = vmul.f32 %v262, %v520
  %1645 = vrot.lane.b32.xlu0 %v1549, 96
  %v1646 = vpop.permute.xlu0 %1645
  %1647 = vrot.lane.b32.xlu0 %v1550, 96
  %v1648 = vpop.permute.xlu0 %1647
  %1649 = vrot.lane.b32.xlu0 %v1551, 96
  %v1650 = vpop.permute.xlu0 %1649
  %1651 = vrot.lane.b32.xlu0 %v1552, 96
  %v1652 = vpop.permute.xlu0 %1651
  %1653 = vrot.lane.b32.xlu0 %v1553, 96
  %v1654 = vpop.permute.xlu0 %1653
  %1655 = vrot.lane.b32.xlu0 %v1554, 96
  %v1656 = vpop.permute.xlu0 %1655
  %1657 = vrot.lane.b32.xlu0 %v1555, 96
  %v1658 = vpop.permute.xlu0 %1657
  %1659 = vrot.lane.b32.xlu0 %v1556, 96
  %v1660 = vpop.permute.xlu0 %1659
  %1661 = vrot.lane.b32.xlu0 %v1557, 96
  %v1662 = vpop.permute.xlu0 %1661
  %1663 = vrot.lane.b32.xlu0 %v1558, 96
  %v1664 = vpop.permute.xlu0 %1663
  %1665 = vrot.lane.b32.xlu0 %v1559, 96
  %v1666 = vpop.permute.xlu0 %1665
  %1667 = vrot.lane.b32.xlu0 %v1560, 96
  %v1668 = vpop.permute.xlu0 %1667
  %1669 = vrot.lane.b32.xlu0 %v1561, 96
  %v1670 = vpop.permute.xlu0 %1669
  %1671 = vrot.lane.b32.xlu0 %v1562, 96
  %v1672 = vpop.permute.xlu0 %1671
  %1673 = vrot.lane.b32.xlu0 %v1563, 96
  %v1674 = vpop.permute.xlu0 %1673
  %1675 = vrot.lane.b32.xlu0 %v1564, 96
  %v1676 = vpop.permute.xlu0 %1675
  %1677 = vrot.lane.b32.xlu0 %v1565, 96
  %v1678 = vpop.permute.xlu0 %1677
  %1679 = vrot.lane.b32.xlu0 %v1566, 96
  %v1680 = vpop.permute.xlu0 %1679
  %1681 = vrot.lane.b32.xlu0 %v1567, 96
  %v1682 = vpop.permute.xlu0 %1681
  %1683 = vrot.lane.b32.xlu0 %v1568, 96
  %v1684 = vpop.permute.xlu0 %1683
  %1685 = vrot.lane.b32.xlu0 %v1569, 96
  %v1686 = vpop.permute.xlu0 %1685
  %1687 = vrot.lane.b32.xlu0 %v1570, 96
  %v1688 = vpop.permute.xlu0 %1687
  %1689 = vrot.lane.b32.xlu0 %v1571, 96
  %v1690 = vpop.permute.xlu0 %1689
  %1691 = vrot.lane.b32.xlu0 %v1572, 96
  %v1692 = vpop.permute.xlu0 %1691
  %1693 = vrot.lane.b32.xlu0 %v1573, 96
  %v1694 = vpop.permute.xlu0 %1693
  %1695 = vrot.lane.b32.xlu0 %v1574, 96
  %v1696 = vpop.permute.xlu0 %1695
  %1697 = vrot.lane.b32.xlu0 %v1575, 96
  %v1698 = vpop.permute.xlu0 %1697
  %1699 = vrot.lane.b32.xlu0 %v1576, 96
  %v1700 = vpop.permute.xlu0 %1699
  %1701 = vrot.lane.b32.xlu0 %v1577, 96
  %v1702 = vpop.permute.xlu0 %1701
  %1703 = vrot.lane.b32.xlu0 %v1578, 96
  %v1704 = vpop.permute.xlu0 %1703
  %1705 = vrot.lane.b32.xlu0 %v1579, 96
  %v1706 = vpop.permute.xlu0 %1705
  %1707 = vrot.lane.b32.xlu0 %v1580, 96
  %v1708 = vpop.permute.xlu0 %1707
  %v1710 = vsel %vm71, %v227, 0
  %v1713 = vsel %vm71, %v232, 0
  %v1716 = vsel %vm71, %v237, 0
  %v1719 = vsel %vm71, %v242, 0
  %v1722 = vsel %vm71, %v247, 0
  %v1725 = vsel %vm71, %v252, 0
  %v1728 = vsel %vm71, %v257, 0
  %v1731 = vsel %vm71, %v262, 0
  %v1733 = vsel %vm71, %v1646, 0
  %v1735 = vsel %vm71, %v1648, 0
  %v1737 = vsel %vm71, %v1650, 0
  %v1739 = vsel %vm71, %v1652, 0
  %v1741 = vsel %vm71, %v1654, 0
  %v1743 = vsel %vm71, %v1656, 0
  %v1745 = vsel %vm71, %v1658, 0
  %v1747 = vsel %vm71, %v1660, 0
  %v1749 = vsel %vm71, %v1662, 0
  %v1751 = vsel %vm71, %v1664, 0
  %v1753 = vsel %vm71, %v1666, 0
  %v1755 = vsel %vm71, %v1668, 0
  %v1757 = vsel %vm71, %v1670, 0
  %v1759 = vsel %vm71, %v1672, 0
  %v1761 = vsel %vm71, %v1674, 0
  %v1763 = vsel %vm71, %v1676, 0
  %v1765 = vsel %vm71, %v1678, 0
  %v1767 = vsel %vm71, %v1680, 0
  %v1769 = vsel %vm71, %v1682, 0
  %v1771 = vsel %vm71, %v1684, 0
  %v1773 = vsel %vm71, %v1686, 0
  %v1775 = vsel %vm71, %v1688, 0
  %v1777 = vsel %vm71, %v1690, 0
  %v1779 = vsel %vm71, %v1692, 0
  %v1781 = vsel %vm71, %v1694, 0
  %v1783 = vsel %vm71, %v1696, 0
  %v1785 = vsel %vm71, %v1698, 0
  %v1787 = vsel %vm71, %v1700, 0
  %v1789 = vsel %vm71, %v1702, 0
  %v1791 = vsel %vm71, %v1704, 0
  %v1793 = vsel %vm71, %v1706, 0
  %v1795 = vsel %vm71, %v1708, 0
  %1797 = vmatprep.subr.mxu0 0.0
  %1798 = vmatpush1.xpose.msra.mxu0 %v1733
  %1799 = vmatprep.subr.mxu0 0.0
  %1800 = vmatpush1.xpose.msra.mxu0 %v1735
  %1801 = vmatprep.subr.mxu0 0.0
  %1802 = vmatpush1.xpose.msra.mxu0 %v1737
  %1803 = vmatprep.subr.mxu0 0.0
  %1804 = vmatpush1.xpose.msra.mxu0 %v1739
  %1805 = vmatprep.subr.mxu0 0.0
  %1806 = vmatpush1.xpose.msra.mxu0 %v1741
  %1807 = vmatprep.subr.mxu0 0.0
  %1808 = vmatpush1.xpose.msra.mxu0 %v1743
  %1809 = vmatprep.subr.mxu0 0.0
  %1810 = vmatpush1.xpose.msra.mxu0 %v1745
  %1811 = vmatprep.subr.mxu0 0.0
  %1812 = vmatpush1.xpose.msra.mxu0 %v1747
  %1813 = vmatprep.subr.mxu0 0.0
  %1814 = vmatpush1.xpose.msra.mxu0 %v1749
  %1815 = vmatprep.subr.mxu0 0.0
  %1816 = vmatpush1.xpose.msra.mxu0 %v1751
  %1817 = vmatprep.subr.mxu0 0.0
  %1818 = vmatpush1.xpose.msra.mxu0 %v1753
  %1819 = vmatprep.subr.mxu0 0.0
  %1820 = vmatpush1.xpose.msra.mxu0 %v1755
  %1821 = vmatprep.subr.mxu0 0.0
  %1822 = vmatpush1.xpose.msra.mxu0 %v1757
  %1823 = vmatprep.subr.mxu0 0.0
  %1824 = vmatpush1.xpose.msra.mxu0 %v1759
  %1825 = vmatprep.subr.mxu0 0.0
  %1826 = vmatpush1.xpose.msra.mxu0 %v1761
  %1827 = vmatprep.subr.mxu0 0.0
  %1828 = vmatpush1.xpose.msra.mxu0 %v1763
  %1829 = vmatprep.subr.mxu0 0.0
  %1830 = vmatpush1.xpose.msra.mxu0 %v1765
  %1831 = vmatprep.subr.mxu0 0.0
  %1832 = vmatpush1.xpose.msra.mxu0 %v1767
  %1833 = vmatprep.subr.mxu0 0.0
  %1834 = vmatpush1.xpose.msra.mxu0 %v1769
  %1835 = vmatprep.subr.mxu0 0.0
  %1836 = vmatpush1.xpose.msra.mxu0 %v1771
  %1837 = vmatprep.subr.mxu0 0.0
  %1838 = vmatpush1.xpose.msra.mxu0 %v1773
  %1839 = vmatprep.subr.mxu0 0.0
  %1840 = vmatpush1.xpose.msra.mxu0 %v1775
  %1841 = vmatprep.subr.mxu0 0.0
  %1842 = vmatpush1.xpose.msra.mxu0 %v1777
  %1843 = vmatprep.subr.mxu0 0.0
  %1844 = vmatpush1.xpose.msra.mxu0 %v1779
  %1845 = vmatprep.subr.mxu0 0.0
  %1846 = vmatpush1.xpose.msra.mxu0 %v1781
  %1847 = vmatprep.subr.mxu0 0.0
  %1848 = vmatpush1.xpose.msra.mxu0 %v1783
  %1849 = vmatprep.subr.mxu0 0.0
  %1850 = vmatpush1.xpose.msra.mxu0 %v1785
  %1851 = vmatprep.subr.mxu0 0.0
  %1852 = vmatpush1.xpose.msra.mxu0 %v1787
  %1853 = vmatprep.subr.mxu0 0.0
  %1854 = vmatpush1.xpose.msra.mxu0 %v1789
  %1855 = vmatprep.subr.mxu0 0.0
  %1856 = vmatpush1.xpose.msra.mxu0 %v1791
  %1857 = vmatprep.subr.mxu0 0.0
  %1858 = vmatpush1.xpose.msra.mxu0 %v1793
  %1859 = vmatprep.subr.mxu0 0.0
  %1860 = vmatpush1.xpose.msra.mxu0 %v1795
  %1861 = vmatprep.mubr.f32.mxu0 0.0
  %1862 = vmatmul.mubr.f32.gmra.mrb[0].mxu0 %v1710
  %v1863 = vpop.f32.mrb[0].mxu0
  %v1864 = vadd.f32 0.0, %v1863
  %v1865 = vpop.f32.mrb[0].mxu0
  %v1866 = vadd.f32 0.0, %v1865
  %1867 = vmatprep.mubr.f32.mxu0 0.0
  %1868 = vmatmul.mubr.f32.gmra.mrb[0].mxu0 %v1713
  %v1869 = vpop.f32.mrb[0].mxu0
  %v1870 = vadd.f32 0.0, %v1869
  %v1871 = vpop.f32.mrb[0].mxu0
  %v1872 = vadd.f32 0.0, %v1871
  %1873 = vmatprep.mubr.f32.mxu0 0.0
  %1874 = vmatmul.mubr.f32.gmra.mrb[0].mxu0 %v1716
  %v1875 = vpop.f32.mrb[0].mxu0
  %v1876 = vadd.f32 0.0, %v1875
  %v1877 = vpop.f32.mrb[0].mxu0
  %v1878 = vadd.f32 0.0, %v1877
  %1879 = vmatprep.mubr.f32.mxu0 0.0
  %1880 = vmatmul.mubr.f32.gmra.mrb[0].mxu0 %v1719
  %v1881 = vpop.f32.mrb[0].mxu0
  %v1882 = vadd.f32 0.0, %v1881
  %v1883 = vpop.f32.mrb[0].mxu0
  %v1884 = vadd.f32 0.0, %v1883
  %1885 = vmatprep.mubr.f32.mxu0 0.0
  %1886 = vmatmul.mubr.f32.gmra.mrb[0].mxu0 %v1722
  %v1887 = vpop.f32.mrb[0].mxu0
  %v1888 = vadd.f32 0.0, %v1887
  %v1889 = vpop.f32.mrb[0].mxu0
  %v1890 = vadd.f32 0.0, %v1889
  %1891 = vmatprep.mubr.f32.mxu0 0.0
  %1892 = vmatmul.mubr.f32.gmra.mrb[0].mxu0 %v1725
  %v1893 = vpop.f32.mrb[0].mxu0
  %v1894 = vadd.f32 0.0, %v1893
  %v1895 = vpop.f32.mrb[0].mxu0
  %v1896 = vadd.f32 0.0, %v1895
  %1897 = vmatprep.mubr.f32.mxu0 0.0
  %1898 = vmatmul.mubr.f32.gmra.mrb[0].mxu0 %v1728
  %v1899 = vpop.f32.mrb[0].mxu0
  %v1900 = vadd.f32 0.0, %v1899
  %v1901 = vpop.f32.mrb[0].mxu0
  %v1902 = vadd.f32 0.0, %v1901
  %1903 = vmatprep.mubr.f32.mxu0 0.0
  %1904 = vmatmul.mubr.f32.gmra.mrb[0].mxu0 %v1731
  %v1905 = vpop.f32.mrb[0].mxu0
  %v1906 = vadd.f32 0.0, %v1905
  %v1907 = vpop.f32.mrb[0].mxu0
  %v1908 = vadd.f32 0.0, %v1907
  %1909 = vdwg.mxu0
  %v1910 = vsel %vm882, %v1864, -inf
  %1911 = vmax.xlane.f32.xlu0 %v1910
  %v1912 = vpop.xlane.xlu0 %1911
  %v1913 = vsel %vm882, %v1870, -inf
  %1914 = vmax.xlane.f32.xlu0 %v1913
  %v1915 = vpop.xlane.xlu0 %1914
  %v1916 = vsel %vm882, %v1876, -inf
  %1917 = vmax.xlane.f32.xlu0 %v1916
  %v1918 = vpop.xlane.xlu0 %1917
  %v1919 = vsel %vm882, %v1882, -inf
  %1920 = vmax.xlane.f32.xlu0 %v1919
  %v1921 = vpop.xlane.xlu0 %1920
  %v1922 = vsel %vm882, %v1888, -inf
  %1923 = vmax.xlane.f32.xlu0 %v1922
  %v1924 = vpop.xlane.xlu0 %1923
  %v1925 = vsel %vm882, %v1894, -inf
  %1926 = vmax.xlane.f32.xlu0 %v1925
  %v1927 = vpop.xlane.xlu0 %1926
  %v1928 = vsel %vm882, %v1900, -inf
  %1929 = vmax.xlane.f32.xlu0 %v1928
  %v1930 = vpop.xlane.xlu0 %1929
  %v1931 = vsel %vm882, %v1906, -inf
  %1932 = vmax.xlane.f32.xlu0 %v1931
  %v1933 = vpop.xlane.xlu0 %1932
  %v1934 = vsub.f32 %v1864, %v1912
  %v1935 = vsub.f32 %v1870, %v1915
  %v1936 = vsub.f32 %v1876, %v1918
  %v1937 = vsub.f32 %v1882, %v1921
  %v1938 = vsub.f32 %v1888, %v1924
  %v1939 = vsub.f32 %v1894, %v1927
  %v1940 = vsub.f32 %v1900, %v1930
  %v1941 = vsub.f32 %v1906, %v1933
  %v1942 = vmul.f32 %v1934, 1.442695
  %v1943 = vpow.pop %v1942
  %v1944 = vmul.f32 %v1935, 1.442695
  %v1945 = vpow.pop %v1944
  %v1946 = vmul.f32 %v1936, 1.442695
  %v1947 = vpow.pop %v1946
  %v1948 = vmul.f32 %v1937, 1.442695
  %v1949 = vpow.pop %v1948
  %v1950 = vmul.f32 %v1938, 1.442695
  %v1951 = vpow.pop %v1950
  %v1952 = vmul.f32 %v1939, 1.442695
  %v1953 = vpow.pop %v1952
  %v1954 = vmul.f32 %v1940, 1.442695
  %v1955 = vpow.pop %v1954
  %v1956 = vmul.f32 %v1941, 1.442695
  %v1957 = vpow.pop %v1956
  %v1958 = vsel %vm882, %v1943, 0.0
  %1959 = vadd.xlane.f32.xlu0 %v1958
  %v1960 = vpop.xlane.xlu0 %1959
  %v1961 = vsel %vm882, %v1945, 0.0
  %1962 = vadd.xlane.f32.xlu0 %v1961
  %v1963 = vpop.xlane.xlu0 %1962
  %v1964 = vsel %vm882, %v1947, 0.0
  %1965 = vadd.xlane.f32.xlu0 %v1964
  %v1966 = vpop.xlane.xlu0 %1965
  %v1967 = vsel %vm882, %v1949, 0.0
  %1968 = vadd.xlane.f32.xlu0 %v1967
  %v1969 = vpop.xlane.xlu0 %1968
  %v1970 = vsel %vm882, %v1951, 0.0
  %1971 = vadd.xlane.f32.xlu0 %v1970
  %v1972 = vpop.xlane.xlu0 %1971
  %v1973 = vsel %vm882, %v1953, 0.0
  %1974 = vadd.xlane.f32.xlu0 %v1973
  %v1975 = vpop.xlane.xlu0 %1974
  %v1976 = vsel %vm882, %v1955, 0.0
  %1977 = vadd.xlane.f32.xlu0 %v1976
  %v1978 = vpop.xlane.xlu0 %1977
  %v1979 = vsel %vm882, %v1957, 0.0
  %1980 = vadd.xlane.f32.xlu0 %v1979
  %v1981 = vpop.xlane.xlu0 %1980
  %v1982 = vrcp.pop %v1960
  %v1983 = vrcp.pop %v1963
  %v1984 = vrcp.pop %v1966
  %v1985 = vrcp.pop %v1969
  %v1986 = vrcp.pop %v1972
  %v1987 = vrcp.pop %v1975
  %v1988 = vrcp.pop %v1978
  %v1989 = vrcp.pop %v1981
  %v1990 = vmul.f32 %v1943, %v1982
  %v1991 = vmul.f32 %v1945, %v1983
  %v1992 = vmul.f32 %v1947, %v1984
  %v1993 = vmul.f32 %v1949, %v1985
  %v1994 = vmul.f32 %v1951, %v1986
  %v1995 = vmul.f32 %v1953, %v1987
  %v1996 = vmul.f32 %v1955, %v1988
  %v1997 = vmul.f32 %v1957, %v1989
  %v1998 = vsel %vm971, %v1864, -inf
  %1999 = vmax.xlane.f32.xlu0 %v1998
  %v2000 = vpop.xlane.xlu0 %1999
  %v2001 = vsel %vm971, %v1870, -inf
  %2002 = vmax.xlane.f32.xlu0 %v2001
  %v2003 = vpop.xlane.xlu0 %2002
  %v2004 = vsel %vm971, %v1876, -inf
  %2005 = vmax.xlane.f32.xlu0 %v2004
  %v2006 = vpop.xlane.xlu0 %2005
  %v2007 = vsel %vm971, %v1882, -inf
  %2008 = vmax.xlane.f32.xlu0 %v2007
  %v2009 = vpop.xlane.xlu0 %2008
  %v2010 = vsel %vm971, %v1888, -inf
  %2011 = vmax.xlane.f32.xlu0 %v2010
  %v2012 = vpop.xlane.xlu0 %2011
  %v2013 = vsel %vm971, %v1894, -inf
  %2014 = vmax.xlane.f32.xlu0 %v2013
  %v2015 = vpop.xlane.xlu0 %2014
  %v2016 = vsel %vm971, %v1900, -inf
  %2017 = vmax.xlane.f32.xlu0 %v2016
  %v2018 = vpop.xlane.xlu0 %2017
  %v2019 = vsel %vm971, %v1906, -inf
  %2020 = vmax.xlane.f32.xlu0 %v2019
  %v2021 = vpop.xlane.xlu0 %2020
  %v2022 = vsub.f32 %v1864, %v2000
  %v2023 = vsub.f32 %v1870, %v2003
  %v2024 = vsub.f32 %v1876, %v2006
  %v2025 = vsub.f32 %v1882, %v2009
  %v2026 = vsub.f32 %v1888, %v2012
  %v2027 = vsub.f32 %v1894, %v2015
  %v2028 = vsub.f32 %v1900, %v2018
  %v2029 = vsub.f32 %v1906, %v2021
  %v2030 = vmul.f32 %v2022, 1.442695
  %v2031 = vpow.pop %v2030
  %v2032 = vmul.f32 %v2023, 1.442695
  %v2033 = vpow.pop %v2032
  %v2034 = vmul.f32 %v2024, 1.442695
  %v2035 = vpow.pop %v2034
  %v2036 = vmul.f32 %v2025, 1.442695
  %v2037 = vpow.pop %v2036
  %v2038 = vmul.f32 %v2026, 1.442695
  %v2039 = vpow.pop %v2038
  %v2040 = vmul.f32 %v2027, 1.442695
  %v2041 = vpow.pop %v2040
  %v2042 = vmul.f32 %v2028, 1.442695
  %v2043 = vpow.pop %v2042
  %v2044 = vmul.f32 %v2029, 1.442695
  %v2045 = vpow.pop %v2044
  %2054 = vrot.lane.b32.xlu0 %v2031, 64
  %v2055 = vpop.permute.xlu0 %2054
  %2056 = vrot.lane.b32.xlu0 %v2033, 64
  %v2057 = vpop.permute.xlu0 %2056
  %2058 = vrot.lane.b32.xlu0 %v2035, 64
  %v2059 = vpop.permute.xlu0 %2058
  %2060 = vrot.lane.b32.xlu0 %v2037, 64
  %v2061 = vpop.permute.xlu0 %2060
  %2062 = vrot.lane.b32.xlu0 %v2039, 64
  %v2063 = vpop.permute.xlu0 %2062
  %2064 = vrot.lane.b32.xlu0 %v2041, 64
  %v2065 = vpop.permute.xlu0 %2064
  %2066 = vrot.lane.b32.xlu0 %v2043, 64
  %v2067 = vpop.permute.xlu0 %2066
  %2068 = vrot.lane.b32.xlu0 %v2045, 64
  %v2069 = vpop.permute.xlu0 %2068
  %v2078 = vsel %vm882, %v2055, 0.0
  %2079 = vadd.xlane.f32.xlu0 %v2078
  %v2080 = vpop.xlane.xlu0 %2079
  %v2081 = vsel %vm882, %v2057, 0.0
  %2082 = vadd.xlane.f32.xlu0 %v2081
  %v2083 = vpop.xlane.xlu0 %2082
  %v2084 = vsel %vm882, %v2059, 0.0
  %2085 = vadd.xlane.f32.xlu0 %v2084
  %v2086 = vpop.xlane.xlu0 %2085
  %v2087 = vsel %vm882, %v2061, 0.0
  %2088 = vadd.xlane.f32.xlu0 %v2087
  %v2089 = vpop.xlane.xlu0 %2088
  %v2090 = vsel %vm882, %v2063, 0.0
  %2091 = vadd.xlane.f32.xlu0 %v2090
  %v2092 = vpop.xlane.xlu0 %2091
  %v2093 = vsel %vm882, %v2065, 0.0
  %2094 = vadd.xlane.f32.xlu0 %v2093
  %v2095 = vpop.xlane.xlu0 %2094
  %v2096 = vsel %vm882, %v2067, 0.0
  %2097 = vadd.xlane.f32.xlu0 %v2096
  %v2098 = vpop.xlane.xlu0 %2097
  %v2099 = vsel %vm882, %v2069, 0.0
  %2100 = vadd.xlane.f32.xlu0 %v2099
  %v2101 = vpop.xlane.xlu0 %2100
  %v2102 = vrcp.pop %v2080
  %v2103 = vrcp.pop %v2083
  %v2104 = vrcp.pop %v2086
  %v2105 = vrcp.pop %v2089
  %v2106 = vrcp.pop %v2092
  %v2107 = vrcp.pop %v2095
  %v2108 = vrcp.pop %v2098
  %v2109 = vrcp.pop %v2101
  %v2110 = vmul.f32 %v2031, %v2102
  %v2111 = vmul.f32 %v2033, %v2103
  %v2112 = vmul.f32 %v2035, %v2104
  %v2113 = vmul.f32 %v2037, %v2105
  %v2114 = vmul.f32 %v2039, %v2106
  %v2115 = vmul.f32 %v2041, %v2107
  %v2116 = vmul.f32 %v2043, %v2108
  %v2117 = vmul.f32 %v2045, %v2109
  %v2118 = vsel %vm882, %v1866, -inf
  %2119 = vmax.xlane.f32.xlu0 %v2118
  %v2120 = vpop.xlane.xlu0 %2119
  %v2121 = vsel %vm882, %v1872, -inf
  %2122 = vmax.xlane.f32.xlu0 %v2121
  %v2123 = vpop.xlane.xlu0 %2122
  %v2124 = vsel %vm882, %v1878, -inf
  %2125 = vmax.xlane.f32.xlu0 %v2124
  %v2126 = vpop.xlane.xlu0 %2125
  %v2127 = vsel %vm882, %v1884, -inf
  %2128 = vmax.xlane.f32.xlu0 %v2127
  %v2129 = vpop.xlane.xlu0 %2128
  %v2130 = vsel %vm882, %v1890, -inf
  %2131 = vmax.xlane.f32.xlu0 %v2130
  %v2132 = vpop.xlane.xlu0 %2131
  %v2133 = vsel %vm882, %v1896, -inf
  %2134 = vmax.xlane.f32.xlu0 %v2133
  %v2135 = vpop.xlane.xlu0 %2134
  %v2136 = vsel %vm882, %v1902, -inf
  %2137 = vmax.xlane.f32.xlu0 %v2136
  %v2138 = vpop.xlane.xlu0 %2137
  %v2139 = vsel %vm882, %v1908, -inf
  %2140 = vmax.xlane.f32.xlu0 %v2139
  %v2141 = vpop.xlane.xlu0 %2140
  %v2142 = vsub.f32 %v1866, %v2120
  %v2143 = vsub.f32 %v1872, %v2123
  %v2144 = vsub.f32 %v1878, %v2126
  %v2145 = vsub.f32 %v1884, %v2129
  %v2146 = vsub.f32 %v1890, %v2132
  %v2147 = vsub.f32 %v1896, %v2135
  %v2148 = vsub.f32 %v1902, %v2138
  %v2149 = vsub.f32 %v1908, %v2141
  %v2150 = vmul.f32 %v2142, 1.442695
  %v2151 = vpow.pop %v2150
  %v2152 = vmul.f32 %v2143, 1.442695
  %v2153 = vpow.pop %v2152
  %v2154 = vmul.f32 %v2144, 1.442695
  %v2155 = vpow.pop %v2154
  %v2156 = vmul.f32 %v2145, 1.442695
  %v2157 = vpow.pop %v2156
  %v2158 = vmul.f32 %v2146, 1.442695
  %v2159 = vpow.pop %v2158
  %v2160 = vmul.f32 %v2147, 1.442695
  %v2161 = vpow.pop %v2160
  %v2162 = vmul.f32 %v2148, 1.442695
  %v2163 = vpow.pop %v2162
  %v2164 = vmul.f32 %v2149, 1.442695
  %v2165 = vpow.pop %v2164
  %v2166 = vsel %vm882, %v2151, 0.0
  %2167 = vadd.xlane.f32.xlu0 %v2166
  %v2168 = vpop.xlane.xlu0 %2167
  %v2169 = vsel %vm882, %v2153, 0.0
  %2170 = vadd.xlane.f32.xlu0 %v2169
  %v2171 = vpop.xlane.xlu0 %2170
  %v2172 = vsel %vm882, %v2155, 0.0
  %2173 = vadd.xlane.f32.xlu0 %v2172
  %v2174 = vpop.xlane.xlu0 %2173
  %v2175 = vsel %vm882, %v2157, 0.0
  %2176 = vadd.xlane.f32.xlu0 %v2175
  %v2177 = vpop.xlane.xlu0 %2176
  %v2178 = vsel %vm882, %v2159, 0.0
  %2179 = vadd.xlane.f32.xlu0 %v2178
  %v2180 = vpop.xlane.xlu0 %2179
  %v2181 = vsel %vm882, %v2161, 0.0
  %2182 = vadd.xlane.f32.xlu0 %v2181
  %v2183 = vpop.xlane.xlu0 %2182
  %v2184 = vsel %vm882, %v2163, 0.0
  %2185 = vadd.xlane.f32.xlu0 %v2184
  %v2186 = vpop.xlane.xlu0 %2185
  %v2187 = vsel %vm882, %v2165, 0.0
  %2188 = vadd.xlane.f32.xlu0 %v2187
  %v2189 = vpop.xlane.xlu0 %2188
  %v2190 = vrcp.pop %v2168
  %v2191 = vrcp.pop %v2171
  %v2192 = vrcp.pop %v2174
  %v2193 = vrcp.pop %v2177
  %v2194 = vrcp.pop %v2180
  %v2195 = vrcp.pop %v2183
  %v2196 = vrcp.pop %v2186
  %v2197 = vrcp.pop %v2189
  %v2198 = vmul.f32 %v2151, %v2190
  %v2199 = vmul.f32 %v2153, %v2191
  %v2200 = vmul.f32 %v2155, %v2192
  %v2201 = vmul.f32 %v2157, %v2193
  %v2202 = vmul.f32 %v2159, %v2194
  %v2203 = vmul.f32 %v2161, %v2195
  %v2204 = vmul.f32 %v2163, %v2196
  %v2205 = vmul.f32 %v2165, %v2197
  %v2206 = vsel %vm971, %v1866, -inf
  %2207 = vmax.xlane.f32.xlu0 %v2206
  %v2208 = vpop.xlane.xlu0 %2207
  %v2209 = vsel %vm971, %v1872, -inf
  %2210 = vmax.xlane.f32.xlu0 %v2209
  %v2211 = vpop.xlane.xlu0 %2210
  %v2212 = vsel %vm971, %v1878, -inf
  %2213 = vmax.xlane.f32.xlu0 %v2212
  %v2214 = vpop.xlane.xlu0 %2213
  %v2215 = vsel %vm971, %v1884, -inf
  %2216 = vmax.xlane.f32.xlu0 %v2215
  %v2217 = vpop.xlane.xlu0 %2216
  %v2218 = vsel %vm971, %v1890, -inf
  %2219 = vmax.xlane.f32.xlu0 %v2218
  %v2220 = vpop.xlane.xlu0 %2219
  %v2221 = vsel %vm971, %v1896, -inf
  %2222 = vmax.xlane.f32.xlu0 %v2221
  %v2223 = vpop.xlane.xlu0 %2222
  %v2224 = vsel %vm971, %v1902, -inf
  %2225 = vmax.xlane.f32.xlu0 %v2224
  %v2226 = vpop.xlane.xlu0 %2225
  %v2227 = vsel %vm971, %v1908, -inf
  %2228 = vmax.xlane.f32.xlu0 %v2227
  %v2229 = vpop.xlane.xlu0 %2228
  %v2230 = vsub.f32 %v1866, %v2208
  %v2231 = vsub.f32 %v1872, %v2211
  %v2232 = vsub.f32 %v1878, %v2214
  %v2233 = vsub.f32 %v1884, %v2217
  %v2234 = vsub.f32 %v1890, %v2220
  %v2235 = vsub.f32 %v1896, %v2223
  %v2236 = vsub.f32 %v1902, %v2226
  %v2237 = vsub.f32 %v1908, %v2229
  %v2238 = vmul.f32 %v2230, 1.442695
  %v2239 = vpow.pop %v2238
  %v2240 = vmul.f32 %v2231, 1.442695
  %v2241 = vpow.pop %v2240
  %v2242 = vmul.f32 %v2232, 1.442695
  %v2243 = vpow.pop %v2242
  %v2244 = vmul.f32 %v2233, 1.442695
  %v2245 = vpow.pop %v2244
  %v2246 = vmul.f32 %v2234, 1.442695
  %v2247 = vpow.pop %v2246
  %v2248 = vmul.f32 %v2235, 1.442695
  %v2249 = vpow.pop %v2248
  %v2250 = vmul.f32 %v2236, 1.442695
  %v2251 = vpow.pop %v2250
  %v2252 = vmul.f32 %v2237, 1.442695
  %v2253 = vpow.pop %v2252
  %2262 = vrot.lane.b32.xlu0 %v2239, 64
  %v2263 = vpop.permute.xlu0 %2262
  %2264 = vrot.lane.b32.xlu0 %v2241, 64
  %v2265 = vpop.permute.xlu0 %2264
  %2266 = vrot.lane.b32.xlu0 %v2243, 64
  %v2267 = vpop.permute.xlu0 %2266
  %2268 = vrot.lane.b32.xlu0 %v2245, 64
  %v2269 = vpop.permute.xlu0 %2268
  %2270 = vrot.lane.b32.xlu0 %v2247, 64
  %v2271 = vpop.permute.xlu0 %2270
  %2272 = vrot.lane.b32.xlu0 %v2249, 64
  %v2273 = vpop.permute.xlu0 %2272
  %2274 = vrot.lane.b32.xlu0 %v2251, 64
  %v2275 = vpop.permute.xlu0 %2274
  %2276 = vrot.lane.b32.xlu0 %v2253, 64
  %v2277 = vpop.permute.xlu0 %2276
  %v2286 = vsel %vm882, %v2263, 0.0
  %2287 = vadd.xlane.f32.xlu0 %v2286
  %v2288 = vpop.xlane.xlu0 %2287
  %v2289 = vsel %vm882, %v2265, 0.0
  %2290 = vadd.xlane.f32.xlu0 %v2289
  %v2291 = vpop.xlane.xlu0 %2290
  %v2292 = vsel %vm882, %v2267, 0.0
  %2293 = vadd.xlane.f32.xlu0 %v2292
  %v2294 = vpop.xlane.xlu0 %2293
  %v2295 = vsel %vm882, %v2269, 0.0
  %2296 = vadd.xlane.f32.xlu0 %v2295
  %v2297 = vpop.xlane.xlu0 %2296
  %v2298 = vsel %vm882, %v2271, 0.0
  %2299 = vadd.xlane.f32.xlu0 %v2298
  %v2300 = vpop.xlane.xlu0 %2299
  %v2301 = vsel %vm882, %v2273, 0.0
  %2302 = vadd.xlane.f32.xlu0 %v2301
  %v2303 = vpop.xlane.xlu0 %2302
  %v2304 = vsel %vm882, %v2275, 0.0
  %2305 = vadd.xlane.f32.xlu0 %v2304
  %v2306 = vpop.xlane.xlu0 %2305
  %v2307 = vsel %vm882, %v2277, 0.0
  %2308 = vadd.xlane.f32.xlu0 %v2307
  %v2309 = vpop.xlane.xlu0 %2308
  %v2310 = vrcp.pop %v2288
  %v2311 = vrcp.pop %v2291
  %v2312 = vrcp.pop %v2294
  %v2313 = vrcp.pop %v2297
  %v2314 = vrcp.pop %v2300
  %v2315 = vrcp.pop %v2303
  %v2316 = vrcp.pop %v2306
  %v2317 = vrcp.pop %v2309
  %v2318 = vmul.f32 %v2239, %v2310
  %v2319 = vmul.f32 %v2241, %v2311
  %v2320 = vmul.f32 %v2243, %v2312
  %v2321 = vmul.f32 %v2245, %v2313
  %v2322 = vmul.f32 %v2247, %v2314
  %v2323 = vmul.f32 %v2249, %v2315
  %v2324 = vmul.f32 %v2251, %v2316
  %v2325 = vmul.f32 %v2253, %v2317
  %v2326 = vsel %vm882, %v1990, %v2110
  %v2327 = vsel %vm882, %v1991, %v2111
  %v2328 = vsel %vm882, %v1992, %v2112
  %v2329 = vsel %vm882, %v1993, %v2113
  %v2330 = vsel %vm882, %v1994, %v2114
  %v2331 = vsel %vm882, %v1995, %v2115
  %v2332 = vsel %vm882, %v1996, %v2116
  %v2333 = vsel %vm882, %v1997, %v2117
  %v2334 = vsel %vm882, %v2198, %v2318
  %v2335 = vsel %vm882, %v2199, %v2319
  %v2336 = vsel %vm882, %v2200, %v2320
  %v2337 = vsel %vm882, %v2201, %v2321
  %v2338 = vsel %vm882, %v2202, %v2322
  %v2339 = vsel %vm882, %v2203, %v2323
  %v2340 = vsel %vm882, %v2204, %v2324
  %v2341 = vsel %vm882, %v2205, %v2325
  %2374 = vrot.lane.b32.xlu0 %v1581, 64
  %v2375 = vpop.permute.xlu0 %2374
  %2376 = vrot.lane.b32.xlu0 %v1582, 64
  %v2377 = vpop.permute.xlu0 %2376
  %2378 = vrot.lane.b32.xlu0 %v1583, 64
  %v2379 = vpop.permute.xlu0 %2378
  %2380 = vrot.lane.b32.xlu0 %v1584, 64
  %v2381 = vpop.permute.xlu0 %2380
  %2382 = vrot.lane.b32.xlu0 %v1585, 64
  %v2383 = vpop.permute.xlu0 %2382
  %2384 = vrot.lane.b32.xlu0 %v1586, 64
  %v2385 = vpop.permute.xlu0 %2384
  %2386 = vrot.lane.b32.xlu0 %v1587, 64
  %v2387 = vpop.permute.xlu0 %2386
  %2388 = vrot.lane.b32.xlu0 %v1588, 64
  %v2389 = vpop.permute.xlu0 %2388
  %2390 = vrot.lane.b32.xlu0 %v1589, 64
  %v2391 = vpop.permute.xlu0 %2390
  %2392 = vrot.lane.b32.xlu0 %v1590, 64
  %v2393 = vpop.permute.xlu0 %2392
  %2394 = vrot.lane.b32.xlu0 %v1591, 64
  %v2395 = vpop.permute.xlu0 %2394
  %2396 = vrot.lane.b32.xlu0 %v1592, 64
  %v2397 = vpop.permute.xlu0 %2396
  %2398 = vrot.lane.b32.xlu0 %v1593, 64
  %v2399 = vpop.permute.xlu0 %2398
  %2400 = vrot.lane.b32.xlu0 %v1594, 64
  %v2401 = vpop.permute.xlu0 %2400
  %2402 = vrot.lane.b32.xlu0 %v1595, 64
  %v2403 = vpop.permute.xlu0 %2402
  %2404 = vrot.lane.b32.xlu0 %v1596, 64
  %v2405 = vpop.permute.xlu0 %2404
  %2406 = vrot.lane.b32.xlu0 %v1597, 64
  %v2407 = vpop.permute.xlu0 %2406
  %2408 = vrot.lane.b32.xlu0 %v1598, 64
  %v2409 = vpop.permute.xlu0 %2408
  %2410 = vrot.lane.b32.xlu0 %v1599, 64
  %v2411 = vpop.permute.xlu0 %2410
  %2412 = vrot.lane.b32.xlu0 %v1600, 64
  %v2413 = vpop.permute.xlu0 %2412
  %2414 = vrot.lane.b32.xlu0 %v1601, 64
  %v2415 = vpop.permute.xlu0 %2414
  %2416 = vrot.lane.b32.xlu0 %v1602, 64
  %v2417 = vpop.permute.xlu0 %2416
  %2418 = vrot.lane.b32.xlu0 %v1603, 64
  %v2419 = vpop.permute.xlu0 %2418
  %2420 = vrot.lane.b32.xlu0 %v1604, 64
  %v2421 = vpop.permute.xlu0 %2420
  %2422 = vrot.lane.b32.xlu0 %v1605, 64
  %v2423 = vpop.permute.xlu0 %2422
  %2424 = vrot.lane.b32.xlu0 %v1606, 64
  %v2425 = vpop.permute.xlu0 %2424
  %2426 = vrot.lane.b32.xlu0 %v1607, 64
  %v2427 = vpop.permute.xlu0 %2426
  %2428 = vrot.lane.b32.xlu0 %v1608, 64
  %v2429 = vpop.permute.xlu0 %2428
  %2430 = vrot.lane.b32.xlu0 %v1609, 64
  %v2431 = vpop.permute.xlu0 %2430
  %2432 = vrot.lane.b32.xlu0 %v1610, 64
  %v2433 = vpop.permute.xlu0 %2432
  %2434 = vrot.lane.b32.xlu0 %v1611, 64
  %v2435 = vpop.permute.xlu0 %2434
  %2436 = vrot.lane.b32.xlu0 %v1612, 64
  %v2437 = vpop.permute.xlu0 %2436
  %2470 = vmatprep.subr.mxu0 0.0
  %2471 = vmatpush1.msra.mxu0 %v2375
  %2472 = vmatprep.subr.mxu0 0.0
  %2473 = vmatpush1.msra.mxu0 %v2377
  %2474 = vmatprep.subr.mxu0 0.0
  %2475 = vmatpush1.msra.mxu0 %v2379
  %2476 = vmatprep.subr.mxu0 0.0
  %2477 = vmatpush1.msra.mxu0 %v2381
  %2478 = vmatprep.subr.mxu0 0.0
  %2479 = vmatpush1.msra.mxu0 %v2383
  %2480 = vmatprep.subr.mxu0 0.0
  %2481 = vmatpush1.msra.mxu0 %v2385
  %2482 = vmatprep.subr.mxu0 0.0
  %2483 = vmatpush1.msra.mxu0 %v2387
  %2484 = vmatprep.subr.mxu0 0.0
  %2485 = vmatpush1.msra.mxu0 %v2389
  %2486 = vmatprep.subr.mxu0 0.0
  %2487 = vmatpush1.msra.mxu0 %v2391
  %2488 = vmatprep.subr.mxu0 0.0
  %2489 = vmatpush1.msra.mxu0 %v2393
  %2490 = vmatprep.subr.mxu0 0.0
  %2491 = vmatpush1.msra.mxu0 %v2395
  %2492 = vmatprep.subr.mxu0 0.0
  %2493 = vmatpush1.msra.mxu0 %v2397
  %2494 = vmatprep.subr.mxu0 0.0
  %2495 = vmatpush1.msra.mxu0 %v2399
  %2496 = vmatprep.subr.mxu0 0.0
  %2497 = vmatpush1.msra.mxu0 %v2401
  %2498 = vmatprep.subr.mxu0 0.0
  %2499 = vmatpush1.msra.mxu0 %v2403
  %2500 = vmatprep.subr.mxu0 0.0
  %2501 = vmatpush1.msra.mxu0 %v2405
  %2502 = vmatprep.subr.mxu0 0.0
  %2503 = vmatpush1.msra.mxu0 %v2407
  %2504 = vmatprep.subr.mxu0 0.0
  %2505 = vmatpush1.msra.mxu0 %v2409
  %2506 = vmatprep.subr.mxu0 0.0
  %2507 = vmatpush1.msra.mxu0 %v2411
  %2508 = vmatprep.subr.mxu0 0.0
  %2509 = vmatpush1.msra.mxu0 %v2413
  %2510 = vmatprep.subr.mxu0 0.0
  %2511 = vmatpush1.msra.mxu0 %v2415
  %2512 = vmatprep.subr.mxu0 0.0
  %2513 = vmatpush1.msra.mxu0 %v2417
  %2514 = vmatprep.subr.mxu0 0.0
  %2515 = vmatpush1.msra.mxu0 %v2419
  %2516 = vmatprep.subr.mxu0 0.0
  %2517 = vmatpush1.msra.mxu0 %v2421
  %2518 = vmatprep.subr.mxu0 0.0
  %2519 = vmatpush1.msra.mxu0 %v2423
  %2520 = vmatprep.subr.mxu0 0.0
  %2521 = vmatpush1.msra.mxu0 %v2425
  %2522 = vmatprep.subr.mxu0 0.0
  %2523 = vmatpush1.msra.mxu0 %v2427
  %2524 = vmatprep.subr.mxu0 0.0
  %2525 = vmatpush1.msra.mxu0 %v2429
  %2526 = vmatprep.subr.mxu0 0.0
  %2527 = vmatpush1.msra.mxu0 %v2431
  %2528 = vmatprep.subr.mxu0 0.0
  %2529 = vmatpush1.msra.mxu0 %v2433
  %2530 = vmatprep.subr.mxu0 0.0
  %2531 = vmatpush1.msra.mxu0 %v2435
  %2532 = vmatprep.subr.mxu0 0.0
  %2533 = vmatpush1.msra.mxu0 %v2437
  %2534 = vmatprep.mubr.f32.mxu0 %v2334
  %2535 = vmatmul.mubr.f32.gmra.mrb[0].mxu0 %v2326
  %v2536 = vpop.f32.mrb[0].mxu0
  %v2537 = vadd.f32 0.0, %v2536
  %v2538 = vpop.f32.mrb[0].mxu0
  %2539 = vmatprep.mubr.f32.mxu0 %v2335
  %2540 = vmatmul.mubr.f32.gmra.mrb[0].mxu0 %v2327
  %v2541 = vpop.f32.mrb[0].mxu0
  %v2542 = vadd.f32 0.0, %v2541
  %v2543 = vpop.f32.mrb[0].mxu0
  %2544 = vmatprep.mubr.f32.mxu0 %v2336
  %2545 = vmatmul.mubr.f32.gmra.mrb[0].mxu0 %v2328
  %v2546 = vpop.f32.mrb[0].mxu0
  %v2547 = vadd.f32 0.0, %v2546
  %v2548 = vpop.f32.mrb[0].mxu0
  %2549 = vmatprep.mubr.f32.mxu0 %v2337
  %2550 = vmatmul.mubr.f32.gmra.mrb[0].mxu0 %v2329
  %v2551 = vpop.f32.mrb[0].mxu0
  %v2552 = vadd.f32 0.0, %v2551
  %v2553 = vpop.f32.mrb[0].mxu0
  %2554 = vmatprep.mubr.f32.mxu0 %v2338
  %2555 = vmatmul.mubr.f32.gmra.mrb[0].mxu0 %v2330
  %v2556 = vpop.f32.mrb[0].mxu0
  %v2557 = vadd.f32 0.0, %v2556
  %v2558 = vpop.f32.mrb[0].mxu0
  %2559 = vmatprep.mubr.f32.mxu0 %v2339
  %2560 = vmatmul.mubr.f32.gmra.mrb[0].mxu0 %v2331
  %v2561 = vpop.f32.mrb[0].mxu0
  %v2562 = vadd.f32 0.0, %v2561
  %v2563 = vpop.f32.mrb[0].mxu0
  %2564 = vmatprep.mubr.f32.mxu0 %v2340
  %2565 = vmatmul.mubr.f32.gmra.mrb[0].mxu0 %v2332
  %v2566 = vpop.f32.mrb[0].mxu0
  %v2567 = vadd.f32 0.0, %v2566
  %v2568 = vpop.f32.mrb[0].mxu0
  %2569 = vmatprep.mubr.f32.mxu0 %v2341
  %2570 = vmatmul.mubr.f32.gmra.mrb[0].mxu0 %v2333
  %v2571 = vpop.f32.mrb[0].mxu0
  %v2572 = vadd.f32 0.0, %v2571
  %v2573 = vpop.f32.mrb[0].mxu0
  %2574 = vdwg.mxu0
  %v2575 = vld [vmem:[%s4] sm:$0xff]
  %v2576 = vld [vmem:[%s4 + $0x8] sm:$0xff]
  %v2577 = vld [vmem:[%s4 + $0x10] sm:$0xff]
  %v2578 = vld [vmem:[%s4 + $0x18] sm:$0xff]
  %v2579 = vld [vmem:[%s5] sm:$0x1]
  %v2581 = vlaneseq
  %v2582 = vshrl.u32 %v2581, 7
  %v2583 = vsub.s32 0, %v2582
  %v2584 = vrot.slane %v2579, %v2583
  %v2587 = vsel %vm71, %v1511, 0
  %v2590 = vsel %vm71, %v1516, 0
  %v2593 = vsel %vm71, %v1521, 0
  %v2596 = vsel %vm71, %v1526, 0
  %v2599 = vsel %vm71, %v1531, 0
  %v2602 = vsel %vm71, %v1536, 0
  %v2605 = vsel %vm71, %v1541, 0
  %v2608 = vsel %vm71, %v1546, 0
  %v2611 = vsel %vm71, %v2537, 0
  %v2614 = vsel %vm71, %v2542, 0
  %v2617 = vsel %vm71, %v2547, 0
  %v2620 = vsel %vm71, %v2552, 0
  %v2623 = vsel %vm71, %v2557, 0
  %v2626 = vsel %vm71, %v2562, 0
  %v2629 = vsel %vm71, %v2567, 0
  %v2632 = vsel %vm71, %v2572, 0
  %2634 = vmatprep.subr.mxu0 0.0
  %2635 = vmatpush1.msra.mxu0 %v2575
  %2636 = vmatprep.subr.mxu0 0.0
  %2637 = vmatpush1.msra.mxu0 %v2576
  %2638 = vmatprep.subr.mxu0 0.0
  %2639 = vmatpush1.msra.mxu0 %v2577
  %2640 = vmatprep.subr.mxu0 0.0
  %2641 = vmatpush1.msra.mxu0 %v2578
  %2642 = vmatprep.subr.mxu0 0.0
  %2643 = vmatpush1.msra.mxu0 0.0
  %2644 = vmatprep.subr.mxu0 0.0
  %2645 = vmatpush1.msra.mxu0 0.0
  %2646 = vmatprep.subr.mxu0 0.0
  %2647 = vmatpush1.msra.mxu0 0.0
  %2648 = vmatprep.subr.mxu0 0.0
  %2649 = vmatpush1.msra.mxu0 0.0
  %2650 = vmatprep.subr.mxu0 0.0
  %2651 = vmatpush1.msra.mxu0 0.0
  %2652 = vmatprep.subr.mxu0 0.0
  %2653 = vmatpush1.msra.mxu0 0.0
  %2654 = vmatprep.subr.mxu0 0.0
  %2655 = vmatpush1.msra.mxu0 0.0
  %2656 = vmatprep.subr.mxu0 0.0
  %2657 = vmatpush1.msra.mxu0 0.0
  %2658 = vmatprep.subr.mxu0 0.0
  %2659 = vmatpush1.msra.mxu0 0.0
  %2660 = vmatprep.subr.mxu0 0.0
  %2661 = vmatpush1.msra.mxu0 0.0
  %2662 = vmatprep.subr.mxu0 0.0
  %2663 = vmatpush1.msra.mxu0 0.0
  %2664 = vmatprep.subr.mxu0 0.0
  %2665 = vmatpush1.msra.mxu0 0.0
  %2666 = vmatprep.subr.mxu0 0.0
  %2667 = vmatpush1.msra.mxu0 0.0
  %2668 = vmatprep.subr.mxu0 0.0
  %2669 = vmatpush1.msra.mxu0 0.0
  %2670 = vmatprep.subr.mxu0 0.0
  %2671 = vmatpush1.msra.mxu0 0.0
  %2672 = vmatprep.subr.mxu0 0.0
  %2673 = vmatpush1.msra.mxu0 0.0
  %2674 = vmatprep.subr.mxu0 0.0
  %2675 = vmatpush1.msra.mxu0 0.0
  %2676 = vmatprep.subr.mxu0 0.0
  %2677 = vmatpush1.msra.mxu0 0.0
  %2678 = vmatprep.subr.mxu0 0.0
  %2679 = vmatpush1.msra.mxu0 0.0
  %2680 = vmatprep.subr.mxu0 0.0
  %2681 = vmatpush1.msra.mxu0 0.0
  %2682 = vmatprep.subr.mxu0 0.0
  %2683 = vmatpush1.msra.mxu0 0.0
  %2684 = vmatprep.subr.mxu0 0.0
  %2685 = vmatpush1.msra.mxu0 0.0
  %2686 = vmatprep.subr.mxu0 0.0
  %2687 = vmatpush1.msra.mxu0 0.0
  %2688 = vmatprep.subr.mxu0 0.0
  %2689 = vmatpush1.msra.mxu0 0.0
  %2690 = vmatprep.subr.mxu0 0.0
  %2691 = vmatpush1.msra.mxu0 0.0
  %2692 = vmatprep.subr.mxu0 0.0
  %2693 = vmatpush1.msra.mxu0 0.0
  %2694 = vmatprep.subr.mxu0 0.0
  %2695 = vmatpush1.msra.mxu0 0.0
  %2696 = vmatprep.subr.mxu0 0.0
  %2697 = vmatpush1.msra.mxu0 0.0
  %2698 = vmatprep.mubr.f32.mxu0 0.0
  %2699 = vmatmul.mubr.f32.gmra.mrb[0].mxu0 %v2587
  %v2700 = vpop.f32.mrb[0].mxu0
  %v2701 = vadd.f32 %v2584, %v2700
  %v2702 = vpop.f32.mrb[0].mxu0
  %2703 = vmatprep.mubr.f32.mxu0 0.0
  %2704 = vmatmul.mubr.f32.gmra.mrb[0].mxu0 %v2590
  %v2705 = vpop.f32.mrb[0].mxu0
  %v2706 = vadd.f32 %v2584, %v2705
  %v2707 = vpop.f32.mrb[0].mxu0
  %2708 = vmatprep.mubr.f32.mxu0 0.0
  %2709 = vmatmul.mubr.f32.gmra.mrb[0].mxu0 %v2593
  %v2710 = vpop.f32.mrb[0].mxu0
  %v2711 = vadd.f32 %v2584, %v2710
  %v2712 = vpop.f32.mrb[0].mxu0
  %2713 = vmatprep.mubr.f32.mxu0 0.0
  %2714 = vmatmul.mubr.f32.gmra.mrb[0].mxu0 %v2596
  %v2715 = vpop.f32.mrb[0].mxu0
  %v2716 = vadd.f32 %v2584, %v2715
  %v2717 = vpop.f32.mrb[0].mxu0
  %2718 = vmatprep.mubr.f32.mxu0 0.0
  %2719 = vmatmul.mubr.f32.gmra.mrb[0].mxu0 %v2599
  %v2720 = vpop.f32.mrb[0].mxu0
  %v2721 = vadd.f32 %v2584, %v2720
  %v2722 = vpop.f32.mrb[0].mxu0
  %2723 = vmatprep.mubr.f32.mxu0 0.0
  %2724 = vmatmul.mubr.f32.gmra.mrb[0].mxu0 %v2602
  %v2725 = vpop.f32.mrb[0].mxu0
  %v2726 = vadd.f32 %v2584, %v2725
  %v2727 = vpop.f32.mrb[0].mxu0
  %2728 = vmatprep.mubr.f32.mxu0 0.0
  %2729 = vmatmul.mubr.f32.gmra.mrb[0].mxu0 %v2605
  %v2730 = vpop.f32.mrb[0].mxu0
  %v2731 = vadd.f32 %v2584, %v2730
  %v2732 = vpop.f32.mrb[0].mxu0
  %2733 = vmatprep.mubr.f32.mxu0 0.0
  %2734 = vmatmul.mubr.f32.gmra.mrb[0].mxu0 %v2608
  %v2735 = vpop.f32.mrb[0].mxu0
  %v2736 = vadd.f32 %v2584, %v2735
  %v2737 = vpop.f32.mrb[0].mxu0
  %2738 = vmatprep.mubr.f32.mxu0 0.0
  %2739 = vmatmul.mubr.f32.gmra.mrb[0].mxu0 %v2611
  %v2740 = vpop.f32.mrb[0].mxu0
  %v2741 = vadd.f32 %v2584, %v2740
  %v2742 = vpop.f32.mrb[0].mxu0
  %2743 = vmatprep.mubr.f32.mxu0 0.0
  %2744 = vmatmul.mubr.f32.gmra.mrb[0].mxu0 %v2614
  %v2745 = vpop.f32.mrb[0].mxu0
  %v2746 = vadd.f32 %v2584, %v2745
  %v2747 = vpop.f32.mrb[0].mxu0
  %2748 = vmatprep.mubr.f32.mxu0 0.0
  %2749 = vmatmul.mubr.f32.gmra.mrb[0].mxu0 %v2617
  %v2750 = vpop.f32.mrb[0].mxu0
  %v2751 = vadd.f32 %v2584, %v2750
  %v2752 = vpop.f32.mrb[0].mxu0
  %2753 = vmatprep.mubr.f32.mxu0 0.0
  %2754 = vmatmul.mubr.f32.gmra.mrb[0].mxu0 %v2620
  %v2755 = vpop.f32.mrb[0].mxu0
  %v2756 = vadd.f32 %v2584, %v2755
  %v2757 = vpop.f32.mrb[0].mxu0
  %2758 = vmatprep.mubr.f32.mxu0 0.0
  %2759 = vmatmul.mubr.f32.gmra.mrb[0].mxu0 %v2623
  %v2760 = vpop.f32.mrb[0].mxu0
  %v2761 = vadd.f32 %v2584, %v2760
  %v2762 = vpop.f32.mrb[0].mxu0
  %2763 = vmatprep.mubr.f32.mxu0 0.0
  %2764 = vmatmul.mubr.f32.gmra.mrb[0].mxu0 %v2626
  %v2765 = vpop.f32.mrb[0].mxu0
  %v2766 = vadd.f32 %v2584, %v2765
  %v2767 = vpop.f32.mrb[0].mxu0
  %2768 = vmatprep.mubr.f32.mxu0 0.0
  %2769 = vmatmul.mubr.f32.gmra.mrb[0].mxu0 %v2629
  %v2770 = vpop.f32.mrb[0].mxu0
  %v2771 = vadd.f32 %v2584, %v2770
  %v2772 = vpop.f32.mrb[0].mxu0
  %2773 = vmatprep.mubr.f32.mxu0 0.0
  %2774 = vmatmul.mubr.f32.gmra.mrb[0].mxu0 %v2632
  %v2775 = vpop.f32.mrb[0].mxu0
  %v2776 = vadd.f32 %v2584, %v2775
  %v2777 = vpop.f32.mrb[0].mxu0
  %2778 = vdwg.mxu0
  %v2779 = vld [vmem:[%s6] sm:$0xff]
  %v2780 = vld [vmem:[%s6 + $0x8] sm:$0xff]
  %v2781 = vld [vmem:[%s6 + $0x10] sm:$0xff]
  %v2782 = vld [vmem:[%s6 + $0x18] sm:$0xff]
  %v2783 = vld [vmem:[%s7] sm:$0xff]
  %v2784 = vld [vmem:[%s7 + $0x8] sm:$0xff]
  %v2785 = vld [vmem:[%s7 + $0x10] sm:$0xff]
  %v2786 = vld [vmem:[%s7 + $0x18] sm:$0xff]
  %v2788 = vsel %vm71, %v2701, 0
  %v2791 = vsel %vm71, %v2706, 0
  %v2794 = vsel %vm71, %v2711, 0
  %v2797 = vsel %vm71, %v2716, 0
  %v2800 = vsel %vm71, %v2721, 0
  %v2803 = vsel %vm71, %v2726, 0
  %v2806 = vsel %vm71, %v2731, 0
  %v2809 = vsel %vm71, %v2736, 0
  %v2812 = vsel %vm71, %v2741, 0
  %v2815 = vsel %vm71, %v2746, 0
  %v2818 = vsel %vm71, %v2751, 0
  %v2821 = vsel %vm71, %v2756, 0
  %v2824 = vsel %vm71, %v2761, 0
  %v2827 = vsel %vm71, %v2766, 0
  %v2830 = vsel %vm71, %v2771, 0
  %v2833 = vsel %vm71, %v2776, 0
  %2835 = vmatprep.subr.mxu0 0.0
  %2836 = vmatpush1.msra.mxu0 %v2783
  %2837 = vmatprep.subr.mxu0 0.0
  %2838 = vmatpush1.msra.mxu0 %v2784
  %2839 = vmatprep.subr.mxu0 0.0
  %2840 = vmatpush1.msra.mxu0 %v2785
  %2841 = vmatprep.subr.mxu0 0.0
  %2842 = vmatpush1.msra.mxu0 %v2786
  %2843 = vmatprep.subr.mxu0 0.0
  %2844 = vmatpush1.msra.mxu0 0.0
  %2845 = vmatprep.subr.mxu0 0.0
  %2846 = vmatpush1.msra.mxu0 0.0
  %2847 = vmatprep.subr.mxu0 0.0
  %2848 = vmatpush1.msra.mxu0 0.0
  %2849 = vmatprep.subr.mxu0 0.0
  %2850 = vmatpush1.msra.mxu0 0.0
  %2851 = vmatprep.subr.mxu0 0.0
  %2852 = vmatpush1.msra.mxu0 0.0
  %2853 = vmatprep.subr.mxu0 0.0
  %2854 = vmatpush1.msra.mxu0 0.0
  %2855 = vmatprep.subr.mxu0 0.0
  %2856 = vmatpush1.msra.mxu0 0.0
  %2857 = vmatprep.subr.mxu0 0.0
  %2858 = vmatpush1.msra.mxu0 0.0
  %2859 = vmatprep.subr.mxu0 0.0
  %2860 = vmatpush1.msra.mxu0 0.0
  %2861 = vmatprep.subr.mxu0 0.0
  %2862 = vmatpush1.msra.mxu0 0.0
  %2863 = vmatprep.subr.mxu0 0.0
  %2864 = vmatpush1.msra.mxu0 0.0
  %2865 = vmatprep.subr.mxu0 0.0
  %2866 = vmatpush1.msra.mxu0 0.0
  %2867 = vmatprep.subr.mxu0 0.0
  %2868 = vmatpush1.msra.mxu0 0.0
  %2869 = vmatprep.subr.mxu0 0.0
  %2870 = vmatpush1.msra.mxu0 0.0
  %2871 = vmatprep.subr.mxu0 0.0
  %2872 = vmatpush1.msra.mxu0 0.0
  %2873 = vmatprep.subr.mxu0 0.0
  %2874 = vmatpush1.msra.mxu0 0.0
  %2875 = vmatprep.subr.mxu0 0.0
  %2876 = vmatpush1.msra.mxu0 0.0
  %2877 = vmatprep.subr.mxu0 0.0
  %2878 = vmatpush1.msra.mxu0 0.0
  %2879 = vmatprep.subr.mxu0 0.0
  %2880 = vmatpush1.msra.mxu0 0.0
  %2881 = vmatprep.subr.mxu0 0.0
  %2882 = vmatpush1.msra.mxu0 0.0
  %2883 = vmatprep.subr.mxu0 0.0
  %2884 = vmatpush1.msra.mxu0 0.0
  %2885 = vmatprep.subr.mxu0 0.0
  %2886 = vmatpush1.msra.mxu0 0.0
  %2887 = vmatprep.subr.mxu0 0.0
  %2888 = vmatpush1.msra.mxu0 0.0
  %2889 = vmatprep.subr.mxu0 0.0
  %2890 = vmatpush1.msra.mxu0 0.0
  %2891 = vmatprep.subr.mxu0 0.0
  %2892 = vmatpush1.msra.mxu0 0.0
  %2893 = vmatprep.subr.mxu0 0.0
  %2894 = vmatpush1.msra.mxu0 0.0
  %2895 = vmatprep.subr.mxu0 0.0
  %2896 = vmatpush1.msra.mxu0 0.0
  %2897 = vmatprep.subr.mxu0 0.0
  %2898 = vmatpush1.msra.mxu0 0.0
  %2899 = vmatprep.mubr.f32.mxu0 0.0
  %2900 = vmatmul.mubr.f32.gmra.mrb[0].mxu0 %v2788
  %v2901 = vpop.f32.mrb[0].mxu0
  %v2902 = vadd.f32 0.0, %v2901
  %v2903 = vpop.f32.mrb[0].mxu0
  %2904 = vmatprep.mubr.f32.mxu0 0.0
  %2905 = vmatmul.mubr.f32.gmra.mrb[0].mxu0 %v2791
  %v2906 = vpop.f32.mrb[0].mxu0
  %v2907 = vadd.f32 0.0, %v2906
  %v2908 = vpop.f32.mrb[0].mxu0
  %2909 = vmatprep.mubr.f32.mxu0 0.0
  %2910 = vmatmul.mubr.f32.gmra.mrb[0].mxu0 %v2794
  %v2911 = vpop.f32.mrb[0].mxu0
  %v2912 = vadd.f32 0.0, %v2911
  %v2913 = vpop.f32.mrb[0].mxu0
  %2914 = vmatprep.mubr.f32.mxu0 0.0
  %2915 = vmatmul.mubr.f32.gmra.mrb[0].mxu0 %v2797
  %v2916 = vpop.f32.mrb[0].mxu0
  %v2917 = vadd.f32 0.0, %v2916
  %v2918 = vpop.f32.mrb[0].mxu0
  %2919 = vmatprep.mubr.f32.mxu0 0.0
  %2920 = vmatmul.mubr.f32.gmra.mrb[0].mxu0 %v2800
  %v2921 = vpop.f32.mrb[0].mxu0
  %v2922 = vadd.f32 0.0, %v2921
  %v2923 = vpop.f32.mrb[0].mxu0
  %2924 = vmatprep.mubr.f32.mxu0 0.0
  %2925 = vmatmul.mubr.f32.gmra.mrb[0].mxu0 %v2803
  %v2926 = vpop.f32.mrb[0].mxu0
  %v2927 = vadd.f32 0.0, %v2926
  %v2928 = vpop.f32.mrb[0].mxu0
  %2929 = vmatprep.mubr.f32.mxu0 0.0
  %2930 = vmatmul.mubr.f32.gmra.mrb[0].mxu0 %v2806
  %v2931 = vpop.f32.mrb[0].mxu0
  %v2932 = vadd.f32 0.0, %v2931
  %v2933 = vpop.f32.mrb[0].mxu0
  %2934 = vmatprep.mubr.f32.mxu0 0.0
  %2935 = vmatmul.mubr.f32.gmra.mrb[0].mxu0 %v2809
  %v2936 = vpop.f32.mrb[0].mxu0
  %v2937 = vadd.f32 0.0, %v2936
  %v2938 = vpop.f32.mrb[0].mxu0
  %2939 = vmatprep.mubr.f32.mxu0 0.0
  %2940 = vmatmul.mubr.f32.gmra.mrb[0].mxu0 %v2812
  %v2941 = vpop.f32.mrb[0].mxu0
  %v2942 = vadd.f32 0.0, %v2941
  %v2943 = vpop.f32.mrb[0].mxu0
  %2944 = vmatprep.mubr.f32.mxu0 0.0
  %2945 = vmatmul.mubr.f32.gmra.mrb[0].mxu0 %v2815
  %v2946 = vpop.f32.mrb[0].mxu0
  %v2947 = vadd.f32 0.0, %v2946
  %v2948 = vpop.f32.mrb[0].mxu0
  %2949 = vmatprep.mubr.f32.mxu0 0.0
  %2950 = vmatmul.mubr.f32.gmra.mrb[0].mxu0 %v2818
  %v2951 = vpop.f32.mrb[0].mxu0
  %v2952 = vadd.f32 0.0, %v2951
  %v2953 = vpop.f32.mrb[0].mxu0
  %2954 = vmatprep.mubr.f32.mxu0 0.0
  %2955 = vmatmul.mubr.f32.gmra.mrb[0].mxu0 %v2821
  %v2956 = vpop.f32.mrb[0].mxu0
  %v2957 = vadd.f32 0.0, %v2956
  %v2958 = vpop.f32.mrb[0].mxu0
  %2959 = vmatprep.mubr.f32.mxu0 0.0
  %2960 = vmatmul.mubr.f32.gmra.mrb[0].mxu0 %v2824
  %v2961 = vpop.f32.mrb[0].mxu0
  %v2962 = vadd.f32 0.0, %v2961
  %v2963 = vpop.f32.mrb[0].mxu0
  %2964 = vmatprep.mubr.f32.mxu0 0.0
  %2965 = vmatmul.mubr.f32.gmra.mrb[0].mxu0 %v2827
  %v2966 = vpop.f32.mrb[0].mxu0
  %v2967 = vadd.f32 0.0, %v2966
  %v2968 = vpop.f32.mrb[0].mxu0
  %2969 = vmatprep.mubr.f32.mxu0 0.0
  %2970 = vmatmul.mubr.f32.gmra.mrb[0].mxu0 %v2830
  %v2971 = vpop.f32.mrb[0].mxu0
  %v2972 = vadd.f32 0.0, %v2971
  %v2973 = vpop.f32.mrb[0].mxu0
  %2974 = vmatprep.mubr.f32.mxu0 0.0
  %2975 = vmatmul.mubr.f32.gmra.mrb[0].mxu0 %v2833
  %v2976 = vpop.f32.mrb[0].mxu0
  %v2977 = vadd.f32 0.0, %v2976
  %v2978 = vpop.f32.mrb[0].mxu0
  %2979 = vdwg.mxu0
  %2980 = vmatprep.subr.mxu0 0.0
  %2981 = vmatpush1.msra.mxu0 %v2779
  %2982 = vmatprep.subr.mxu0 0.0
  %2983 = vmatpush1.msra.mxu0 %v2780
  %2984 = vmatprep.subr.mxu0 0.0
  %2985 = vmatpush1.msra.mxu0 %v2781
  %2986 = vmatprep.subr.mxu0 0.0
  %2987 = vmatpush1.msra.mxu0 %v2782
  %2988 = vmatprep.subr.mxu0 0.0
  %2989 = vmatpush1.msra.mxu0 0.0
  %2990 = vmatprep.subr.mxu0 0.0
  %2991 = vmatpush1.msra.mxu0 0.0
  %2992 = vmatprep.subr.mxu0 0.0
  %2993 = vmatpush1.msra.mxu0 0.0
  %2994 = vmatprep.subr.mxu0 0.0
  %2995 = vmatpush1.msra.mxu0 0.0
  %2996 = vmatprep.subr.mxu0 0.0
  %2997 = vmatpush1.msra.mxu0 0.0
  %2998 = vmatprep.subr.mxu0 0.0
  %2999 = vmatpush1.msra.mxu0 0.0
  %3000 = vmatprep.subr.mxu0 0.0
  %3001 = vmatpush1.msra.mxu0 0.0
  %3002 = vmatprep.subr.mxu0 0.0
  %3003 = vmatpush1.msra.mxu0 0.0
  %3004 = vmatprep.subr.mxu0 0.0
  %3005 = vmatpush1.msra.mxu0 0.0
  %3006 = vmatprep.subr.mxu0 0.0
  %3007 = vmatpush1.msra.mxu0 0.0
  %3008 = vmatprep.subr.mxu0 0.0
  %3009 = vmatpush1.msra.mxu0 0.0
  %3010 = vmatprep.subr.mxu0 0.0
  %3011 = vmatpush1.msra.mxu0 0.0
  %3012 = vmatprep.subr.mxu0 0.0
  %3013 = vmatpush1.msra.mxu0 0.0
  %3014 = vmatprep.subr.mxu0 0.0
  %3015 = vmatpush1.msra.mxu0 0.0
  %3016 = vmatprep.subr.mxu0 0.0
  %3017 = vmatpush1.msra.mxu0 0.0
  %3018 = vmatprep.subr.mxu0 0.0
  %3019 = vmatpush1.msra.mxu0 0.0
  %3020 = vmatprep.subr.mxu0 0.0
  %3021 = vmatpush1.msra.mxu0 0.0
  %3022 = vmatprep.subr.mxu0 0.0
  %3023 = vmatpush1.msra.mxu0 0.0
  %3024 = vmatprep.subr.mxu0 0.0
  %3025 = vmatpush1.msra.mxu0 0.0
  %3026 = vmatprep.subr.mxu0 0.0
  %3027 = vmatpush1.msra.mxu0 0.0
  %3028 = vmatprep.subr.mxu0 0.0
  %3029 = vmatpush1.msra.mxu0 0.0
  %3030 = vmatprep.subr.mxu0 0.0
  %3031 = vmatpush1.msra.mxu0 0.0
  %3032 = vmatprep.subr.mxu0 0.0
  %3033 = vmatpush1.msra.mxu0 0.0
  %3034 = vmatprep.subr.mxu0 0.0
  %3035 = vmatpush1.msra.mxu0 0.0
  %3036 = vmatprep.subr.mxu0 0.0
  %3037 = vmatpush1.msra.mxu0 0.0
  %3038 = vmatprep.subr.mxu0 0.0
  %3039 = vmatpush1.msra.mxu0 0.0
  %3040 = vmatprep.subr.mxu0 0.0
  %3041 = vmatpush1.msra.mxu0 0.0
  %3042 = vmatprep.subr.mxu0 0.0
  %3043 = vmatpush1.msra.mxu0 0.0
  %3044 = vmatprep.mubr.f32.mxu0 0.0
  %3045 = vmatmul.mubr.f32.gmra.mrb[0].mxu0 %v73
  %v3046 = vpop.f32.mrb[0].mxu0
  %v3047 = vadd.f32 %v2902, %v3046
  %v3048 = vpop.f32.mrb[0].mxu0
  %3049 = vmatprep.mubr.f32.mxu0 0.0
  %3050 = vmatmul.mubr.f32.gmra.mrb[0].mxu0 %v76
  %v3051 = vpop.f32.mrb[0].mxu0
  %v3052 = vadd.f32 %v2907, %v3051
  %v3053 = vpop.f32.mrb[0].mxu0
  %3054 = vmatprep.mubr.f32.mxu0 0.0
  %3055 = vmatmul.mubr.f32.gmra.mrb[0].mxu0 %v79
  %v3056 = vpop.f32.mrb[0].mxu0
  %v3057 = vadd.f32 %v2912, %v3056
  %v3058 = vpop.f32.mrb[0].mxu0
  %3059 = vmatprep.mubr.f32.mxu0 0.0
  %3060 = vmatmul.mubr.f32.gmra.mrb[0].mxu0 %v82
  %v3061 = vpop.f32.mrb[0].mxu0
  %v3062 = vadd.f32 %v2917, %v3061
  %v3063 = vpop.f32.mrb[0].mxu0
  %3064 = vmatprep.mubr.f32.mxu0 0.0
  %3065 = vmatmul.mubr.f32.gmra.mrb[0].mxu0 %v85
  %v3066 = vpop.f32.mrb[0].mxu0
  %v3067 = vadd.f32 %v2922, %v3066
  %v3068 = vpop.f32.mrb[0].mxu0
  %3069 = vmatprep.mubr.f32.mxu0 0.0
  %3070 = vmatmul.mubr.f32.gmra.mrb[0].mxu0 %v88
  %v3071 = vpop.f32.mrb[0].mxu0
  %v3072 = vadd.f32 %v2927, %v3071
  %v3073 = vpop.f32.mrb[0].mxu0
  %3074 = vmatprep.mubr.f32.mxu0 0.0
  %3075 = vmatmul.mubr.f32.gmra.mrb[0].mxu0 %v91
  %v3076 = vpop.f32.mrb[0].mxu0
  %v3077 = vadd.f32 %v2932, %v3076
  %v3078 = vpop.f32.mrb[0].mxu0
  %3079 = vmatprep.mubr.f32.mxu0 0.0
  %3080 = vmatmul.mubr.f32.gmra.mrb[0].mxu0 %v94
  %v3081 = vpop.f32.mrb[0].mxu0
  %v3082 = vadd.f32 %v2937, %v3081
  %v3083 = vpop.f32.mrb[0].mxu0
  %3084 = vmatprep.mubr.f32.mxu0 0.0
  %3085 = vmatmul.mubr.f32.gmra.mrb[0].mxu0 %v97
  %v3086 = vpop.f32.mrb[0].mxu0
  %v3087 = vadd.f32 %v2942, %v3086
  %v3088 = vpop.f32.mrb[0].mxu0
  %3089 = vmatprep.mubr.f32.mxu0 0.0
  %3090 = vmatmul.mubr.f32.gmra.mrb[0].mxu0 %v100
  %v3091 = vpop.f32.mrb[0].mxu0
  %v3092 = vadd.f32 %v2947, %v3091
  %v3093 = vpop.f32.mrb[0].mxu0
  %3094 = vmatprep.mubr.f32.mxu0 0.0
  %3095 = vmatmul.mubr.f32.gmra.mrb[0].mxu0 %v103
  %v3096 = vpop.f32.mrb[0].mxu0
  %v3097 = vadd.f32 %v2952, %v3096
  %v3098 = vpop.f32.mrb[0].mxu0
  %3099 = vmatprep.mubr.f32.mxu0 0.0
  %3100 = vmatmul.mubr.f32.gmra.mrb[0].mxu0 %v106
  %v3101 = vpop.f32.mrb[0].mxu0
  %v3102 = vadd.f32 %v2957, %v3101
  %v3103 = vpop.f32.mrb[0].mxu0
  %3104 = vmatprep.mubr.f32.mxu0 0.0
  %3105 = vmatmul.mubr.f32.gmra.mrb[0].mxu0 %v109
  %v3106 = vpop.f32.mrb[0].mxu0
  %v3107 = vadd.f32 %v2962, %v3106
  %v3108 = vpop.f32.mrb[0].mxu0
  %3109 = vmatprep.mubr.f32.mxu0 0.0
  %3110 = vmatmul.mubr.f32.gmra.mrb[0].mxu0 %v112
  %v3111 = vpop.f32.mrb[0].mxu0
  %v3112 = vadd.f32 %v2967, %v3111
  %v3113 = vpop.f32.mrb[0].mxu0
  %3114 = vmatprep.mubr.f32.mxu0 0.0
  %3115 = vmatmul.mubr.f32.gmra.mrb[0].mxu0 %v115
  %v3116 = vpop.f32.mrb[0].mxu0
  %v3117 = vadd.f32 %v2972, %v3116
  %v3118 = vpop.f32.mrb[0].mxu0
  %3119 = vmatprep.mubr.f32.mxu0 0.0
  %3120 = vmatmul.mubr.f32.gmra.mrb[0].mxu0 %v118
  %v3121 = vpop.f32.mrb[0].mxu0
  %v3122 = vadd.f32 %v2977, %v3121
  %v3123 = vpop.f32.mrb[0].mxu0
  %3124 = vdwg.mxu0
  %v3125 = vld [vmem:[%s8] sm:$0x1]
  %v3127 = vlaneseq
  %v3128 = vshrl.u32 %v3127, 7
  %v3129 = vsub.s32 0, %v3128
  %v3130 = vrot.slane %v3125, %v3129
  %v3132 = vadd.f32 %v3047, %v3130
  %v3133 = vadd.f32 %v3052, %v3130
  %v3134 = vadd.f32 %v3057, %v3130
  %v3135 = vadd.f32 %v3062, %v3130
  %v3136 = vadd.f32 %v3067, %v3130
  %v3137 = vadd.f32 %v3072, %v3130
  %v3138 = vadd.f32 %v3077, %v3130
  %v3139 = vadd.f32 %v3082, %v3130
  %v3140 = vadd.f32 %v3087, %v3130
  %v3141 = vadd.f32 %v3092, %v3130
  %v3142 = vadd.f32 %v3097, %v3130
  %v3143 = vadd.f32 %v3102, %v3130
  %v3144 = vadd.f32 %v3107, %v3130
  %v3145 = vadd.f32 %v3112, %v3130
  %v3146 = vadd.f32 %v3117, %v3130
  %v3147 = vadd.f32 %v3122, %v3130
  %v3148 = vsel %vm882, %v3132, 0.0
  %v3149 = vsel %vm882, %v3133, 0.0
  %v3150 = vadd.f32 %v3148, %v3149
  %v3151 = vsel %vm882, %v3134, 0.0
  %v3152 = vadd.f32 %v3150, %v3151
  %v3153 = vsel %vm882, %v3135, 0.0
  %v3154 = vadd.f32 %v3152, %v3153
  %v3155 = vsel %vm882, %v3136, 0.0
  %v3156 = vadd.f32 %v3154, %v3155
  %v3157 = vsel %vm882, %v3137, 0.0
  %v3158 = vadd.f32 %v3156, %v3157
  %v3159 = vsel %vm882, %v3138, 0.0
  %v3160 = vadd.f32 %v3158, %v3159
  %v3161 = vsel %vm882, %v3139, 0.0
  %v3162 = vadd.f32 %v3160, %v3161
  %v3163 = vsel %vm882, %v3140, 0.0
  %v3164 = vadd.f32 %v3162, %v3163
  %v3165 = vsel %vm882, %v3141, 0.0
  %v3166 = vadd.f32 %v3164, %v3165
  %v3167 = vsel %vm882, %v3142, 0.0
  %v3168 = vadd.f32 %v3166, %v3167
  %v3169 = vsel %vm882, %v3143, 0.0
  %v3170 = vadd.f32 %v3168, %v3169
  %v3171 = vsel %vm882, %v3144, 0.0
  %v3172 = vadd.f32 %v3170, %v3171
  %v3173 = vsel %vm882, %v3145, 0.0
  %v3174 = vadd.f32 %v3172, %v3173
  %v3175 = vsel %vm882, %v3146, 0.0
  %v3176 = vadd.f32 %v3174, %v3175
  %v3177 = vsel %vm882, %v3147, 0.0
  %v3178 = vadd.f32 %v3176, %v3177
  %v3179 = vrot.slane %v3178, 4
  %v3180 = vadd.f32 %v3178, %v3179
  %v3181 = vrot.slane %v3180, 2
  %v3182 = vadd.f32 %v3180, %v3181
  %v3183 = vrot.slane %v3182, 1
  %v3184 = vadd.f32 %v3182, %v3183
  %v3185 = vrcp.pop 128.0
  %v3186 = vmul.f32 %v3184, %v3185
  %v3187 = vsub.f32 %v3132, %v3186
  %v3188 = vsub.f32 %v3133, %v3186
  %v3189 = vsub.f32 %v3134, %v3186
  %v3190 = vsub.f32 %v3135, %v3186
  %v3191 = vsub.f32 %v3136, %v3186
  %v3192 = vsub.f32 %v3137, %v3186
  %v3193 = vsub.f32 %v3138, %v3186
  %v3194 = vsub.f32 %v3139, %v3186
  %v3195 = vsub.f32 %v3140, %v3186
  %v3196 = vsub.f32 %v3141, %v3186
  %v3197 = vsub.f32 %v3142, %v3186
  %v3198 = vsub.f32 %v3143, %v3186
  %v3199 = vsub.f32 %v3144, %v3186
  %v3200 = vsub.f32 %v3145, %v3186
  %v3201 = vsub.f32 %v3146, %v3186
  %v3202 = vsub.f32 %v3147, %v3186
  %v3203 = vmul.f32 %v3187, %v3187
  %v3204 = vmul.f32 %v3188, %v3188
  %v3205 = vmul.f32 %v3189, %v3189
  %v3206 = vmul.f32 %v3190, %v3190
  %v3207 = vmul.f32 %v3191, %v3191
  %v3208 = vmul.f32 %v3192, %v3192
  %v3209 = vmul.f32 %v3193, %v3193
  %v3210 = vmul.f32 %v3194, %v3194
  %v3211 = vmul.f32 %v3195, %v3195
  %v3212 = vmul.f32 %v3196, %v3196
  %v3213 = vmul.f32 %v3197, %v3197
  %v3214 = vmul.f32 %v3198, %v3198
  %v3215 = vmul.f32 %v3199, %v3199
  %v3216 = vmul.f32 %v3200, %v3200
  %v3217 = vmul.f32 %v3201, %v3201
  %v3218 = vmul.f32 %v3202, %v3202
  %v3219 = vsel %vm882, %v3203, 0.0
  %v3220 = vsel %vm882, %v3204, 0.0
  %v3221 = vadd.f32 %v3219, %v3220
  %v3222 = vsel %vm882, %v3205, 0.0
  %v3223 = vadd.f32 %v3221, %v3222
  %v3224 = vsel %vm882, %v3206, 0.0
  %v3225 = vadd.f32 %v3223, %v3224
  %v3226 = vsel %vm882, %v3207, 0.0
  %v3227 = vadd.f32 %v3225, %v3226
  %v3228 = vsel %vm882, %v3208, 0.0
  %v3229 = vadd.f32 %v3227, %v3228
  %v3230 = vsel %vm882, %v3209, 0.0
  %v3231 = vadd.f32 %v3229, %v3230
  %v3232 = vsel %vm882, %v3210, 0.0
  %v3233 = vadd.f32 %v3231, %v3232
  %v3234 = vsel %vm882, %v3211, 0.0
  %v3235 = vadd.f32 %v3233, %v3234
  %v3236 = vsel %vm882, %v3212, 0.0
  %v3237 = vadd.f32 %v3235, %v3236
  %v3238 = vsel %vm882, %v3213, 0.0
  %v3239 = vadd.f32 %v3237, %v3238
  %v3240 = vsel %vm882, %v3214, 0.0
  %v3241 = vadd.f32 %v3239, %v3240
  %v3242 = vsel %vm882, %v3215, 0.0
  %v3243 = vadd.f32 %v3241, %v3242
  %v3244 = vsel %vm882, %v3216, 0.0
  %v3245 = vadd.f32 %v3243, %v3244
  %v3246 = vsel %vm882, %v3217, 0.0
  %v3247 = vadd.f32 %v3245, %v3246
  %v3248 = vsel %vm882, %v3218, 0.0
  %v3249 = vadd.f32 %v3247, %v3248
  %v3250 = vrot.slane %v3249, 4
  %v3251 = vadd.f32 %v3249, %v3250
  %v3252 = vrot.slane %v3251, 2
  %v3253 = vadd.f32 %v3251, %v3252
  %v3254 = vrot.slane %v3253, 1
  %v3255 = vadd.f32 %v3253, %v3254
  %v3256 = vmul.f32 %v3255, %v3185
  %v3257 = vld [vmem:[%s9] sm:$0x1]
  %v3258 = vadd.f32 %v3256, 1e-05
  %v3259 = vrsqrt.pop %v3258
  %v3260 = vmul.f32 %v3257, %v3259
  %v3261 = vld [vmem:[%s10] sm:$0x1]
  %v3262 = vmul.f32 %v3186, %v3260
  %v3263 = vsub.f32 %v3261, %v3262
  %v3265 = vlaneseq
  %v3266 = vshrl.u32 %v3265, 7
  %v3267 = vsub.s32 0, %v3266
  %v3268 = vrot.slane %v3260, %v3267
  %v3270 = vmul.f32 %v3132, %v3268
  %v3271 = vmul.f32 %v3133, %v3268
  %v3272 = vmul.f32 %v3134, %v3268
  %v3273 = vmul.f32 %v3135, %v3268
  %v3274 = vmul.f32 %v3136, %v3268
  %v3275 = vmul.f32 %v3137, %v3268
  %v3276 = vmul.f32 %v3138, %v3268
  %v3277 = vmul.f32 %v3139, %v3268
  %v3278 = vmul.f32 %v3140, %v3268
  %v3279 = vmul.f32 %v3141, %v3268
  %v3280 = vmul.f32 %v3142, %v3268
  %v3281 = vmul.f32 %v3143, %v3268
  %v3282 = vmul.f32 %v3144, %v3268
  %v3283 = vmul.f32 %v3145, %v3268
  %v3284 = vmul.f32 %v3146, %v3268
  %v3285 = vmul.f32 %v3147, %v3268
  %v3287 = vlaneseq
  %v3288 = vshrl.u32 %v3287, 7
  %v3289 = vsub.s32 0, %v3288
  %v3290 = vrot.slane %v3263, %v3289
  %v3292 = vadd.f32 %v3270, %v3290
  %v3293 = vadd.f32 %v3271, %v3290
  %v3294 = vadd.f32 %v3272, %v3290
  %v3295 = vadd.f32 %v3273, %v3290
  %v3296 = vadd.f32 %v3274, %v3290
  %v3297 = vadd.f32 %v3275, %v3290
  %v3298 = vadd.f32 %v3276, %v3290
  %v3299 = vadd.f32 %v3277, %v3290
  %v3300 = vadd.f32 %v3278, %v3290
  %v3301 = vadd.f32 %v3279, %v3290
  %v3302 = vadd.f32 %v3280, %v3290
  %v3303 = vadd.f32 %v3281, %v3290
  %v3304 = vadd.f32 %v3282, %v3290
  %v3305 = vadd.f32 %v3283, %v3290
  %v3306 = vadd.f32 %v3284, %v3290
  %v3307 = vadd.f32 %v3285, %v3290
  %v3308 = vmax.f32 %v3292, 0.0
  %v3309 = vmax.f32 %v3293, 0.0
  %v3310 = vmax.f32 %v3294, 0.0
  %v3311 = vmax.f32 %v3295, 0.0
  %v3312 = vmax.f32 %v3296, 0.0
  %v3313 = vmax.f32 %v3297, 0.0
  %v3314 = vmax.f32 %v3298, 0.0
  %v3315 = vmax.f32 %v3299, 0.0
  %v3316 = vmax.f32 %v3300, 0.0
  %v3317 = vmax.f32 %v3301, 0.0
  %v3318 = vmax.f32 %v3302, 0.0
  %v3319 = vmax.f32 %v3303, 0.0
  %v3320 = vmax.f32 %v3304, 0.0
  %v3321 = vmax.f32 %v3305, 0.0
  %v3322 = vmax.f32 %v3306, 0.0
  %v3323 = vmax.f32 %v3307, 0.0
  %v3324 = vld [vmem:[%s11] sm:$0xff]
  %v3325 = vld [vmem:[%s11 + $0x8] sm:$0xff]
  %v3326 = vld [vmem:[%s11 + $0x10] sm:$0xff]
  %v3327 = vld [vmem:[%s11 + $0x18] sm:$0xff]
  %v3328 = vld [vmem:[%s11 + $0x20] sm:$0xff]
  %v3329 = vld [vmem:[%s11 + $0x28] sm:$0xff]
  %v3330 = vld [vmem:[%s11 + $0x30] sm:$0xff]
  %v3331 = vld [vmem:[%s11 + $0x38] sm:$0xff]
  %v3333 = vsel %vm882, %v3308, 0
  %v3336 = vsel %vm882, %v3309, 0
  %v3339 = vsel %vm882, %v3310, 0
  %v3342 = vsel %vm882, %v3311, 0
  %v3345 = vsel %vm882, %v3312, 0
  %v3348 = vsel %vm882, %v3313, 0
  %v3351 = vsel %vm882, %v3314, 0
  %v3354 = vsel %vm882, %v3315, 0
  %v3357 = vsel %vm882, %v3316, 0
  %v3360 = vsel %vm882, %v3317, 0
  %v3363 = vsel %vm882, %v3318, 0
  %v3366 = vsel %vm882, %v3319, 0
  %v3369 = vsel %vm882, %v3320, 0
  %v3372 = vsel %vm882, %v3321, 0
  %v3375 = vsel %vm882, %v3322, 0
  %v3378 = vsel %vm882, %v3323, 0
  %3380 = vmatprep.subr.mxu0 0.0
  %3381 = vmatpush1.msra.mxu0 %v3324
  %3382 = vmatprep.subr.mxu0 0.0
  %3383 = vmatpush1.msra.mxu0 %v3325
  %3384 = vmatprep.subr.mxu0 0.0
  %3385 = vmatpush1.msra.mxu0 %v3326
  %3386 = vmatprep.subr.mxu0 0.0
  %3387 = vmatpush1.msra.mxu0 %v3327
  %3388 = vmatprep.subr.mxu0 0.0
  %3389 = vmatpush1.msra.mxu0 %v3328
  %3390 = vmatprep.subr.mxu0 0.0
  %3391 = vmatpush1.msra.mxu0 %v3329
  %3392 = vmatprep.subr.mxu0 0.0
  %3393 = vmatpush1.msra.mxu0 %v3330
  %3394 = vmatprep.subr.mxu0 0.0
  %3395 = vmatpush1.msra.mxu0 %v3331
  %3396 = vmatprep.subr.mxu0 0.0
  %3397 = vmatpush1.msra.mxu0 0.0
  %3398 = vmatprep.subr.mxu0 0.0
  %3399 = vmatpush1.msra.mxu0 0.0
  %3400 = vmatprep.subr.mxu0 0.0
  %3401 = vmatpush1.msra.mxu0 0.0
  %3402 = vmatprep.subr.mxu0 0.0
  %3403 = vmatpush1.msra.mxu0 0.0
  %3404 = vmatprep.subr.mxu0 0.0
  %3405 = vmatpush1.msra.mxu0 0.0
  %3406 = vmatprep.subr.mxu0 0.0
  %3407 = vmatpush1.msra.mxu0 0.0
  %3408 = vmatprep.subr.mxu0 0.0
  %3409 = vmatpush1.msra.mxu0 0.0
  %3410 = vmatprep.subr.mxu0 0.0
  %3411 = vmatpush1.msra.mxu0 0.0
  %3412 = vmatprep.subr.mxu0 0.0
  %3413 = vmatpush1.msra.mxu0 0.0
  %3414 = vmatprep.subr.mxu0 0.0
  %3415 = vmatpush1.msra.mxu0 0.0
  %3416 = vmatprep.subr.mxu0 0.0
  %3417 = vmatpush1.msra.mxu0 0.0
  %3418 = vmatprep.subr.mxu0 0.0
  %3419 = vmatpush1.msra.mxu0 0.0
  %3420 = vmatprep.subr.mxu0 0.0
  %3421 = vmatpush1.msra.mxu0 0.0
  %3422 = vmatprep.subr.mxu0 0.0
  %3423 = vmatpush1.msra.mxu0 0.0
  %3424 = vmatprep.subr.mxu0 0.0
  %3425 = vmatpush1.msra.mxu0 0.0
  %3426 = vmatprep.subr.mxu0 0.0
  %3427 = vmatpush1.msra.mxu0 0.0
  %3428 = vmatprep.subr.mxu0 0.0
  %3429 = vmatpush1.msra.mxu0 0.0
  %3430 = vmatprep.subr.mxu0 0.0
  %3431 = vmatpush1.msra.mxu0 0.0
  %3432 = vmatprep.subr.mxu0 0.0
  %3433 = vmatpush1.msra.mxu0 0.0
  %3434 = vmatprep.subr.mxu0 0.0
  %3435 = vmatpush1.msra.mxu0 0.0
  %3436 = vmatprep.subr.mxu0 0.0
  %3437 = vmatpush1.msra.mxu0 0.0
  %3438 = vmatprep.subr.mxu0 0.0
  %3439 = vmatpush1.msra.mxu0 0.0
  %3440 = vmatprep.subr.mxu0 0.0
  %3441 = vmatpush1.msra.mxu0 0.0
  %3442 = vmatprep.subr.mxu0 0.0
  %3443 = vmatpush1.msra.mxu0 0.0
  %3444 = vmatprep.mubr.f32.mxu0 0.0
  %3445 = vmatmul.mubr.f32.gmra.mrb[0].mxu0 %v3333
  %v3446 = vpop.f32.mrb[0].mxu0
  %v3447 = vadd.f32 0.0, %v3446
  %v3448 = vpop.f32.mrb[0].mxu0
  %3449 = vmatprep.mubr.f32.mxu0 0.0
  %3450 = vmatmul.mubr.f32.gmra.mrb[0].mxu0 %v3336
  %v3451 = vpop.f32.mrb[0].mxu0
  %v3452 = vadd.f32 0.0, %v3451
  %v3453 = vpop.f32.mrb[0].mxu0
  %3454 = vmatprep.mubr.f32.mxu0 0.0
  %3455 = vmatmul.mubr.f32.gmra.mrb[0].mxu0 %v3339
  %v3456 = vpop.f32.mrb[0].mxu0
  %v3457 = vadd.f32 0.0, %v3456
  %v3458 = vpop.f32.mrb[0].mxu0
  %3459 = vmatprep.mubr.f32.mxu0 0.0
  %3460 = vmatmul.mubr.f32.gmra.mrb[0].mxu0 %v3342
  %v3461 = vpop.f32.mrb[0].mxu0
  %v3462 = vadd.f32 0.0, %v3461
  %v3463 = vpop.f32.mrb[0].mxu0
  %3464 = vmatprep.mubr.f32.mxu0 0.0
  %3465 = vmatmul.mubr.f32.gmra.mrb[0].mxu0 %v3345
  %v3466 = vpop.f32.mrb[0].mxu0
  %v3467 = vadd.f32 0.0, %v3466
  %v3468 = vpop.f32.mrb[0].mxu0
  %3469 = vmatprep.mubr.f32.mxu0 0.0
  %3470 = vmatmul.mubr.f32.gmra.mrb[0].mxu0 %v3348
  %v3471 = vpop.f32.mrb[0].mxu0
  %v3472 = vadd.f32 0.0, %v3471
  %v3473 = vpop.f32.mrb[0].mxu0
  %3474 = vmatprep.mubr.f32.mxu0 0.0
  %3475 = vmatmul.mubr.f32.gmra.mrb[0].mxu0 %v3351
  %v3476 = vpop.f32.mrb[0].mxu0
  %v3477 = vadd.f32 0.0, %v3476
  %v3478 = vpop.f32.mrb[0].mxu0
  %3479 = vmatprep.mubr.f32.mxu0 0.0
  %3480 = vmatmul.mubr.f32.gmra.mrb[0].mxu0 %v3354
  %v3481 = vpop.f32.mrb[0].mxu0
  %v3482 = vadd.f32 0.0, %v3481
  %v3483 = vpop.f32.mrb[0].mxu0
  %3484 = vmatprep.mubr.f32.mxu0 0.0
  %3485 = vmatmul.mubr.f32.gmra.mrb[0].mxu0 %v3357
  %v3486 = vpop.f32.mrb[0].mxu0
  %v3487 = vadd.f32 0.0, %v3486
  %v3488 = vpop.f32.mrb[0].mxu0
  %3489 = vmatprep.mubr.f32.mxu0 0.0
  %3490 = vmatmul.mubr.f32.gmra.mrb[0].mxu0 %v3360
  %v3491 = vpop.f32.mrb[0].mxu0
  %v3492 = vadd.f32 0.0, %v3491
  %v3493 = vpop.f32.mrb[0].mxu0
  %3494 = vmatprep.mubr.f32.mxu0 0.0
  %3495 = vmatmul.mubr.f32.gmra.mrb[0].mxu0 %v3363
  %v3496 = vpop.f32.mrb[0].mxu0
  %v3497 = vadd.f32 0.0, %v3496
  %v3498 = vpop.f32.mrb[0].mxu0
  %3499 = vmatprep.mubr.f32.mxu0 0.0
  %3500 = vmatmul.mubr.f32.gmra.mrb[0].mxu0 %v3366
  %v3501 = vpop.f32.mrb[0].mxu0
  %v3502 = vadd.f32 0.0, %v3501
  %v3503 = vpop.f32.mrb[0].mxu0
  %3504 = vmatprep.mubr.f32.mxu0 0.0
  %3505 = vmatmul.mubr.f32.gmra.mrb[0].mxu0 %v3369
  %v3506 = vpop.f32.mrb[0].mxu0
  %v3507 = vadd.f32 0.0, %v3506
  %v3508 = vpop.f32.mrb[0].mxu0
  %3509 = vmatprep.mubr.f32.mxu0 0.0
  %3510 = vmatmul.mubr.f32.gmra.mrb[0].mxu0 %v3372
  %v3511 = vpop.f32.mrb[0].mxu0
  %v3512 = vadd.f32 0.0, %v3511
  %v3513 = vpop.f32.mrb[0].mxu0
  %3514 = vmatprep.mubr.f32.mxu0 0.0
  %3515 = vmatmul.mubr.f32.gmra.mrb[0].mxu0 %v3375
  %v3516 = vpop.f32.mrb[0].mxu0
  %v3517 = vadd.f32 0.0, %v3516
  %v3518 = vpop.f32.mrb[0].mxu0
  %3519 = vmatprep.mubr.f32.mxu0 0.0
  %3520 = vmatmul.mubr.f32.gmra.mrb[0].mxu0 %v3378
  %v3521 = vpop.f32.mrb[0].mxu0
  %v3522 = vadd.f32 0.0, %v3521
  %v3523 = vpop.f32.mrb[0].mxu0
  %3524 = vdwg.mxu0
  %v3525 = vadd.f32 %v44, %v3447
  %v3526 = vadd.f32 %v45, %v3452
  %v3527 = vadd.f32 %v46, %v3457
  %v3528 = vadd.f32 %v47, %v3462
  %v3529 = vadd.f32 %v48, %v3467
  %v3530 = vadd.f32 %v49, %v3472
  %v3531 = vadd.f32 %v50, %v3477
  %v3532 = vadd.f32 %v51, %v3482
  %v3533 = vadd.f32 %v52, %v3487
  %v3534 = vadd.f32 %v53, %v3492
  %v3535 = vadd.f32 %v54, %v3497
  %v3536 = vadd.f32 %v55, %v3502
  %v3537 = vadd.f32 %v56, %v3507
  %v3538 = vadd.f32 %v57, %v3512
  %v3539 = vadd.f32 %v58, %v3517
  %v3540 = vadd.f32 %v59, %v3522
  %v3541 = vld [vmem:[%s12] sm:$0x1]
  %v3543 = vlaneseq
  %v3544 = vshrl.u32 %v3543, 7
  %v3545 = vsub.s32 0, %v3544
  %v3546 = vrot.slane %v3541, %v3545
  %v3548 = vadd.f32 %v3525, %v3546
  %v3549 = vadd.f32 %v3526, %v3546
  %v3550 = vadd.f32 %v3527, %v3546
  %v3551 = vadd.f32 %v3528, %v3546
  %v3552 = vadd.f32 %v3529, %v3546
  %v3553 = vadd.f32 %v3530, %v3546
  %v3554 = vadd.f32 %v3531, %v3546
  %v3555 = vadd.f32 %v3532, %v3546
  %v3556 = vadd.f32 %v3533, %v3546
  %v3557 = vadd.f32 %v3534, %v3546
  %v3558 = vadd.f32 %v3535, %v3546
  %v3559 = vadd.f32 %v3536, %v3546
  %v3560 = vadd.f32 %v3537, %v3546
  %v3561 = vadd.f32 %v3538, %v3546
  %v3562 = vadd.f32 %v3539, %v3546
  %v3563 = vadd.f32 %v3540, %v3546
  %3564 = vst.msk [vmem:[%s13] sm:$0xff] %vm71, %v3548
  %3565 = vst.msk [vmem:[%s13 + $0x8] sm:$0xff] %vm71, %v3549
  %3566 = vst.msk [vmem:[%s13 + $0x10] sm:$0xff] %vm71, %v3550
  %3567 = vst.msk [vmem:[%s13 + $0x18] sm:$0xff] %vm71, %v3551
  %3568 = vst.msk [vmem:[%s13 + $0x20] sm:$0xff] %vm71, %v3552
  %3569 = vst.msk [vmem:[%s13 + $0x28] sm:$0xff] %vm71, %v3553
  %3570 = vst.msk [vmem:[%s13 + $0x30] sm:$0xff] %vm71, %v3554
  %3571 = vst.msk [vmem:[%s13 + $0x38] sm:$0xff] %vm71, %v3555
  %3572 = vst.msk [vmem:[%s13 + $0x40] sm:$0xff] %vm71, %v3556
  %3573 = vst.msk [vmem:[%s13 + $0x48] sm:$0xff] %vm71, %v3557
  %3574 = vst.msk [vmem:[%s13 + $0x50] sm:$0xff] %vm71, %v3558
  %3575 = vst.msk [vmem:[%s13 + $0x58] sm:$0xff] %vm71, %v3559
  %3576 = vst.msk [vmem:[%s13 + $0x60] sm:$0xff] %vm71, %v3560
  %3577 = vst.msk [vmem:[%s13 + $0x68] sm:$0xff] %vm71, %v3561
  %3578 = vst.msk [vmem:[%s13 + $0x70] sm:$0xff] %vm71, %v3562
  %3579 = vst.msk [vmem:[%s13 + $0x78] sm:$0xff] %vm71, %v3563
  // Predicated region
  $region54: #{tpu_custom_call.1} parent=0 // pred_check
    _
  $region55: #{tpu_custom_call.1} parent=0 // pred_check_branch
    %3581 = sbr.rel (0) target = $region57
  $region56: #{tpu_custom_call.1} parent=0 // pred_region
    _
  $region57: #{tpu_custom_call.1} parent=0 // pred_fallthru
    _
  // Predicated region
  $region58: #{tpu_custom_call.1} parent=0 // pred_check
    _
  $region59: #{tpu_custom_call.1} parent=0 // pred_check_branch
    %3583 = sbr.rel (0) target = $region61
  $region60: #{tpu_custom_call.1} parent=0 // pred_region
    _
  $region61: #{tpu_custom_call.1} parent=0 // pred_fallthru
    _

</llo_original>
